<compile_context>
chip_gen: v7x
topology: tpu7x:2x2x1
jax: 0.10.0
libtpu: 0.0.40
codegen_flags: <defaults>
</compile_context>

<pallas_src>
import functools

import jax
import jax.numpy as jnp
from jax.experimental import pallas as pl
from jax.experimental.pallas import tpu as pltpu

# ---- module constants (from the PyTorch source) -----------------------------
FEATURE_DIM = 29
LSTM_H_DIM = 128
HOLDING_PERIOD = 12      # == T, forced by nn.Linear(HOLDING_PERIOD, 1)
STOCK_POOL = 7


def _tpu_defaults():
    """Tile size / activation dtype picked from the local TPU generation."""
    try:
        kind = jax.devices()[0].device_kind.lower()
    except Exception:
        return 256, True
    old_gen = any(v in kind for v in ("v2", "v3", "v4", "v5"))
    # v5e and older: 128-wide MXU, no bf16 VPU/EUP -> MT=128, f32 activations.
    # v6e / v7x   : 256-wide MXU, bf16 EUP         -> MT=256, bf16 activations.
    return (128, False) if old_gen else (256, True)


_TILE_M, _BF16_ACT = _tpu_defaults()


def _round_up(x, m):
    return (x + m - 1) // m * m


# ---------------------------------------------------------------------------
# Pallas kernel: LSTM over T steps + Linear(T,1) time head + Linear(H,1) score
# ---------------------------------------------------------------------------
def _lstm_score_kernel(x_ref,      # (T, MT, F+1) VMEM bf16  time-major x tile (+ones col)
                       wih_ref,    # (F+1, 4H)    VMEM bf16  W_ih.T with bias row appended
                       whh_ref,    # (H, 4H)      VMEM bf16  W_hh.T
                       w2_ref,     # (1, H)       VMEM bf16  ll2 weight row
                       w1_ref,     # (T,)         SMEM f32   ll1 weight
                       sb_ref,     # (1,)         SMEM f32   b1*sum(w2) + b2
                       out_ref,    # (1, MT)      VMEM f32   lane-dense scores
                       xg_ref,     # (T*MT, 4H)   VMEM bf16  hoisted projection scratch
                       *, use_bf16_act):
    T, MT, F1 = x_ref.shape
    H = whh_ref.shape[0]
    act_dtype = jnp.bfloat16 if use_bf16_act else jnp.float32

    # ---- hoisted input projection (bias folded in via the ones column) -----
    # (T, MT, F1) -> (T*MT, F1): merges leading dims only (MT multiple of 16),
    # so this lowers without a relayout copy; if pl.lower_as_mlir ever shows
    # one, switch to T chained (MT,F1)@(F1,4H) dots writing into xg_ref slabs.
    x_all = x_ref[...].reshape(T * MT, F1)
    xg_ref[...] = jnp.dot(x_all, wih_ref[...],
                          preferred_element_type=jnp.float32
                          ).astype(jnp.bfloat16)

    # ---- LSTM recurrence: only h @ W_hh + gate math on the serial chain ----
    h_b = jnp.zeros((MT, H), jnp.bfloat16)
    c = jnp.zeros((MT, H), jnp.float32)
    score = jnp.zeros((1, MT), jnp.float32)

    for t in range(T):                       # static full unroll, T == 12
        r0, r1 = t * MT, (t + 1) * MT

        # chunk 0 -> i / f gates (activations applied before next chunk's matmul)
        pre0 = xg_ref[r0:r1, 0:2 * H] + jnp.dot(
            h_b, whh_ref[:, 0:2 * H], preferred_element_type=jnp.float32)
        a0 = pre0.astype(act_dtype)
        i_g = jax.nn.sigmoid(a0[:, :H])
        f_g = jax.nn.sigmoid(a0[:, H:])

        # chunk 1 -> g / o gates
        pre1 = xg_ref[r0:r1, 2 * H:4 * H] + jnp.dot(
            h_b, whh_ref[:, 2 * H:4 * H], preferred_element_type=jnp.float32)
        a1 = pre1.astype(act_dtype)
        g_g = jnp.tanh(a1[:, :H])
        o_g = jax.nn.sigmoid(a1[:, H:])

        c = f_g.astype(jnp.float32) * c + (i_g * g_g).astype(jnp.float32)
        h_b = (o_g * jnp.tanh(c.astype(act_dtype))).astype(jnp.bfloat16)

        # score head contribution: w1[t] * (h_t · w2) as a lane-dense (1, MT)
        # row (tiny MXU dot, contract H of both operands — flash-attn pattern).
        r = jax.lax.dot_general(w2_ref[...], h_b,
                                (((1,), (1,)), ((), ())),
                                preferred_element_type=jnp.float32)
        score = score + w1_ref[t] * r

    out_ref[...] = score + sb_ref[0]         # (1, MT), lane-dense


def _stock_scores(x_tmf, params, mt):
    """Run the Pallas kernel: (T, M_pad, F+1) bf16 -> (1, M_pad) f32 scores."""
    T, M_pad, F1 = x_tmf.shape
    H = LSTM_H_DIM
    smem = pl.BlockSpec(memory_space=pltpu.MemorySpace.SMEM)
    kernel = functools.partial(_lstm_score_kernel, use_bf16_act=_BF16_ACT)
    return pl.pallas_call(
        kernel,
        out_shape=jax.ShapeDtypeStruct((1, M_pad), jnp.float32),
        grid_spec=pltpu.PrefetchScalarGridSpec(
            num_scalar_prefetch=0,
            grid=(M_pad // mt,),
            in_specs=[
                pl.BlockSpec((T, mt, F1), lambda i: (0, i, 0)),   # x tile (pipelined DMA)
                pl.BlockSpec((F1, 4 * H), lambda i: (0, 0)),      # W_ih.T + bias row (resident)
                pl.BlockSpec((H, 4 * H), lambda i: (0, 0)),       # W_hh.T (resident)
                pl.BlockSpec((1, H), lambda i: (0, 0)),           # ll2 weight row
                smem, smem,                                       # w1, score_bias scalars
            ],
            out_specs=pl.BlockSpec((1, mt), lambda i: (0, i)),    # lane-dense scores
            scratch_shapes=[pltpu.VMEM((T * mt, 4 * H), jnp.bfloat16)],
        ),
        compiler_params=pltpu.CompilerParams(
            dimension_semantics=("parallel",)),   # shard M tiles across TCs
    )(x_tmf, params["w_ih_aug"], params["w_hh_t"], params["w2_row"],
      params["w1"], params["score_bias"])


# ---------------------------------------------------------------------------
# Full PGNetwork forward
# ---------------------------------------------------------------------------
@jax.jit
def pgnetwork_forward(x, params):
    # x: (B, N, T, F) or (N, T, F)
    x_b = x[None] if x.ndim == 3 else x
    B, N, T, F = x_b.shape
    M = B * N
    mt = _TILE_M
    if M < mt:
        # single exact tile; multiple of 16 keeps bf16 sublane tiling clean.
        mt = _round_up(max(M, 16), 16)
    # TODO(synk): on v7x (2 TensorCores) production M should satisfy
    # M_pad // mt >= 2 so the "parallel" grid axis shards across both cores.
    M_pad = _round_up(M, mt)

    # time-major (T, M, F+1) bf16 with a constant-1 feature column: the LSTM
    # bias is folded into the hoisted x @ W_ih matmul inside the kernel.
    x_k = jnp.transpose(x_b.reshape(M, T, F), (1, 0, 2))
    x_k = jnp.concatenate([x_k, jnp.ones((T, M, 1), x_k.dtype)], axis=-1)
    x_k = x_k.astype(jnp.bfloat16)
    if M_pad != M:
        x_k = jnp.pad(x_k, ((0, 0), (0, M_pad - M), (0, 0)))

    stock_score = _stock_scores(x_k, params, mt)[0, :M].reshape(B, N)

    # sort + pool softmax (tiny, data-dependent permutation) stay in plain JAX.
    # Note: argsort ties may order differently than torch.sort(descending=True).
    sorted_indices = jnp.argsort(-stock_score, axis=-1)
    sorted_x = jnp.take_along_axis(stock_score, sorted_indices, axis=-1)

    winner_assets_x = sorted_x[:, :STOCK_POOL]
    loser_assets_x = sorted_x[:, -STOCK_POOL:]
    winner_proportion = jax.nn.softmax(winner_assets_x, axis=-1)
    loser_proportion = -jax.nn.softmax(1.0 - loser_assets_x, axis=-1)
    zeros_assets = jnp.zeros_like(sorted_x[:, STOCK_POOL:-STOCK_POOL])
    b_c = jnp.concatenate([winner_proportion, zeros_assets, loser_proportion], axis=1)
    return b_c, sorted_indices, stock_score


# ---------------------------------------------------------------------------
# Deterministic parameter init (matches PyTorch shapes; uniform(-1/sqrt(fan),+))
# ---------------------------------------------------------------------------
def init_params(key, feat=FEATURE_DIM, hidden=LSTM_H_DIM, t=HOLDING_PERIOD):
    ks = jax.random.split(key, 8)
    s_lstm = 1.0 / jnp.sqrt(hidden)
    s_ll1 = 1.0 / jnp.sqrt(t)
    s_ll2 = 1.0 / jnp.sqrt(hidden)

    w_ih = jax.random.uniform(ks[0], (4 * hidden, feat), jnp.float32, -s_lstm, s_lstm)
    w_hh = jax.random.uniform(ks[1], (4 * hidden, hidden), jnp.float32, -s_lstm, s_lstm)
    b_ih = jax.random.uniform(ks[2], (4 * hidden,), jnp.float32, -s_lstm, s_lstm)
    b_hh = jax.random.uniform(ks[3], (4 * hidden,), jnp.float32, -s_lstm, s_lstm)
    w1 = jax.random.uniform(ks[4], (t,), jnp.float32, -s_ll1, s_ll1)          # ll1.weight[0]
    b1 = jax.random.uniform(ks[5], (1,), jnp.float32, -s_ll1, s_ll1)          # ll1.bias
    w2 = jax.random.uniform(ks[6], (1, hidden), jnp.float32, -s_ll2, s_ll2)   # ll2.weight
    b2 = jax.random.uniform(ks[7], (1,), jnp.float32, -s_ll2, s_ll2)          # ll2.bias

    # fold the (bias_ih + bias_hh) into W_ih.T as an extra row matching the
    # constant-1 input column; precompute the scalar score bias b1*sum(w2)+b2.
    w_ih_aug = jnp.concatenate([w_ih.T, (b_ih + b_hh)[None, :]], axis=0)      # (F+1, 4H)
    score_bias = (b1[0] * jnp.sum(w2) + b2[0]).reshape(1)

    # NOTE: bf16 MXU operands / bf16 activations on v6e+ mean results match the
    # fp32 PyTorch LSTM only to ~1e-2 relative tolerance (inference-grade).
    return {
        "w_ih_aug": w_ih_aug.astype(jnp.bfloat16),    # (F+1, 4H)
        "w_hh_t": w_hh.T.astype(jnp.bfloat16),        # (H, 4H)
        "w2_row": w2.astype(jnp.bfloat16),            # (1, H)
        "w1": w1,                                     # (T,)  f32 (SMEM)
        "score_bias": score_bias,                     # (1,)  f32 (SMEM)
    }


if __name__ == "__main__":
    key = jax.random.PRNGKey(0)
    k_param, k_x = jax.random.split(key)

    # small shapes: batch=2, num_stock=16 (>= 2*STOCK_POOL), seq=HOLDING_PERIOD=12,
    # feature=FEATURE_DIM=29 (both fixed by the module definition).
    B, N, T, F = 2, 16, HOLDING_PERIOD, FEATURE_DIM
    x = jax.random.normal(k_x, (B, N, T, F), dtype=jnp.float32)

    params = init_params(k_param)

    b_c, sorted_indices, stock_score = pgnetwork_forward(x, params)
    jax.block_until_ready((b_c, sorted_indices, stock_score))

    assert b_c.shape == (B, N)
    assert sorted_indices.shape == (B, N)
    assert stock_score.shape == (B, N)
    print("KERNEL_OK")
</pallas_src>

<mosaic_0001>
module attributes {stable_mosaic.version = 11 : i64} {
  func.func @_lstm_score_kernel(%arg0: i32, %arg1: memref<12x32x30xbf16, #tpu.memory_space<vmem>>, %arg2: memref<30x512xbf16, #tpu.memory_space<vmem>>, %arg3: memref<128x512xbf16, #tpu.memory_space<vmem>>, %arg4: memref<1x128xbf16, #tpu.memory_space<vmem>>, %arg5: memref<12xf32, #tpu.memory_space<smem>>, %arg6: memref<1xf32, #tpu.memory_space<smem>>, %arg7: memref<1x32xf32, #tpu.memory_space<vmem>>, %arg8: memref<384x512xbf16, #tpu.memory_space<vmem>>) attributes {dimension_semantics = [#tpu.dimension_semantics<parallel>], iteration_bounds = array<i64: 1>, scalar_prefetch = 0 : i64, scratch_operands = 1 : i64, tpu.core_type = #tpu.core_type<tc>, window_params = [{transform_indices = @transform_0, window_bounds = array<i64: 12, 32, 30>}, {pipeline_mode = #tpu.pipeline_mode<synchronous>, transform_indices = @transform_1, window_bounds = array<i64: 30, 512>}, {pipeline_mode = #tpu.pipeline_mode<synchronous>, transform_indices = @transform_2, window_bounds = array<i64: 128, 512>}, {pipeline_mode = #tpu.pipeline_mode<synchronous>, transform_indices = @transform_3, window_bounds = array<i64: 1, 128>}, {transform_indices = @transform_4, window_bounds = array<i64: 12>}, {transform_indices = @transform_5, window_bounds = array<i64: 1>}, {transform_indices = @transform_6, window_bounds = array<i64: 1, 32>}]} {
    %c0 = arith.constant 0 : index
    %c0_0 = arith.constant 0 : index
    %c0_1 = arith.constant 0 : index
    %0 = vector.load %arg1[%c0, %c0_0, %c0_1] : memref<12x32x30xbf16, #tpu.memory_space<vmem>>, vector<12x32x30xbf16>
    %1 = vector.shape_cast %0 : vector<12x32x30xbf16> to vector<384x30xbf16>
    %c0_2 = arith.constant 0 : index
    %c0_3 = arith.constant 0 : index
    %2 = vector.load %arg2[%c0_2, %c0_3] : memref<30x512xbf16, #tpu.memory_space<vmem>>, vector<30x512xbf16>
    %cst = arith.constant dense<0.000000e+00> : vector<384x512xf32>
    %3 = tpu.matmul %1, %2, %cst {dimension_numbers = #tpu.dot_dimension_numbers<[1], [0], [0], [1], [0, 0, 1, 1], [], []>} : vector<384x30xbf16>, vector<30x512xbf16>, vector<384x512xf32> -> vector<384x512xf32>
    %4 = arith.truncf %3 : vector<384x512xf32> to vector<384x512xbf16>
    %c0_4 = arith.constant 0 : index
    %c0_5 = arith.constant 0 : index
    %5 = vector.load %arg8[%c0_4, %c0_5] : memref<384x512xbf16, #tpu.memory_space<vmem>>, vector<384x512xbf16>
    tpu.vector_store %arg8[%c0_4, %c0_5], %4 {strides = array<i32>} : memref<384x512xbf16, #tpu.memory_space<vmem>>, vector<384x512xbf16>,
    %cst_6 = arith.constant 0.000000e+00 : bf16
    %6 = vector.broadcast %cst_6 : bf16 to vector<32x128xbf16>
    %cst_7 = arith.constant 0.000000e+00 : f32
    %7 = vector.broadcast %cst_7 : f32 to vector<32x128xf32>
    %cst_8 = arith.constant 0.000000e+00 : f32
    %8 = vector.broadcast %cst_8 : f32 to vector<1x32xf32>
    %c0_9 = arith.constant 0 : index
    %c0_10 = arith.constant 0 : index
    %9 = vector.load %arg8[%c0_9, %c0_10] : memref<384x512xbf16, #tpu.memory_space<vmem>>, vector<32x256xbf16>
    %c0_11 = arith.constant 0 : index
    %c0_12 = arith.constant 0 : index
    %10 = vector.load %arg3[%c0_11, %c0_12] : memref<128x512xbf16, #tpu.memory_space<vmem>>, vector<128x256xbf16>
    %cst_13 = arith.constant dense<0.000000e+00> : vector<32x256xf32>
    %11 = tpu.matmul %6, %10, %cst_13 {dimension_numbers = #tpu.dot_dimension_numbers<[1], [0], [0], [1], [0, 0, 1, 1], [], []>} : vector<32x128xbf16>, vector<128x256xbf16>, vector<32x256xf32> -> vector<32x256xf32>
    %12 = arith.extf %9 : vector<32x256xbf16> to vector<32x256xf32>
    %13 = arith.addf %12, %11 : vector<32x256xf32>
    %14 = arith.truncf %13 : vector<32x256xf32> to vector<32x256xbf16>
    %15 = vector.extract_strided_slice %14 {offsets = [0, 0], sizes = [32, 128], strides = [1, 1]} : vector<32x256xbf16> to vector<32x128xbf16>
    %16 = arith.negf %15 : vector<32x128xbf16>
    %17 = math.exp %16 : vector<32x128xbf16>
    %cst_14 = arith.constant 1.000000e+00 : bf16
    %18 = vector.broadcast %cst_14 : bf16 to vector<32x128xbf16>
    %19 = arith.addf %18, %17 : vector<32x128xbf16>
    %20 = arith.divf %18, %19 : vector<32x128xbf16>
    %21 = vector.extract_strided_slice %14 {offsets = [0, 128], sizes = [32, 128], strides = [1, 1]} : vector<32x256xbf16> to vector<32x128xbf16>
    %22 = arith.negf %21 : vector<32x128xbf16>
    %23 = math.exp %22 : vector<32x128xbf16>
    %cst_15 = arith.constant 1.000000e+00 : bf16
    %24 = vector.broadcast %cst_15 : bf16 to vector<32x128xbf16>
    %25 = arith.addf %24, %23 : vector<32x128xbf16>
    %26 = arith.divf %24, %25 : vector<32x128xbf16>
    %c0_16 = arith.constant 0 : index
    %c256 = arith.constant 256 : index
    %27 = vector.load %arg8[%c0_16, %c256] : memref<384x512xbf16, #tpu.memory_space<vmem>>, vector<32x256xbf16>
    %c0_17 = arith.constant 0 : index
    %c256_18 = arith.constant 256 : index
    %28 = vector.load %arg3[%c0_17, %c256_18] : memref<128x512xbf16, #tpu.memory_space<vmem>>, vector<128x256xbf16>
    %cst_19 = arith.constant dense<0.000000e+00> : vector<32x256xf32>
    %29 = tpu.matmul %6, %28, %cst_19 {dimension_numbers = #tpu.dot_dimension_numbers<[1], [0], [0], [1], [0, 0, 1, 1], [], []>} : vector<32x128xbf16>, vector<128x256xbf16>, vector<32x256xf32> -> vector<32x256xf32>
    %30 = arith.extf %27 : vector<32x256xbf16> to vector<32x256xf32>
    %31 = arith.addf %30, %29 : vector<32x256xf32>
    %32 = arith.truncf %31 : vector<32x256xf32> to vector<32x256xbf16>
    %33 = vector.extract_strided_slice %32 {offsets = [0, 0], sizes = [32, 128], strides = [1, 1]} : vector<32x256xbf16> to vector<32x128xbf16>
    %34 = math.tanh %33 : vector<32x128xbf16>
    %35 = vector.extract_strided_slice %32 {offsets = [0, 128], sizes = [32, 128], strides = [1, 1]} : vector<32x256xbf16> to vector<32x128xbf16>
    %36 = arith.negf %35 : vector<32x128xbf16>
    %37 = math.exp %36 : vector<32x128xbf16>
    %cst_20 = arith.constant 1.000000e+00 : bf16
    %38 = vector.broadcast %cst_20 : bf16 to vector<32x128xbf16>
    %39 = arith.addf %38, %37 : vector<32x128xbf16>
    %40 = arith.divf %38, %39 : vector<32x128xbf16>
    %41 = arith.extf %26 : vector<32x128xbf16> to vector<32x128xf32>
    %42 = arith.mulf %41, %7 : vector<32x128xf32>
    %43 = arith.mulf %20, %34 : vector<32x128xbf16>
    %44 = arith.extf %43 : vector<32x128xbf16> to vector<32x128xf32>
    %45 = arith.addf %42, %44 : vector<32x128xf32>
    %46 = arith.truncf %45 : vector<32x128xf32> to vector<32x128xbf16>
    %47 = math.tanh %46 : vector<32x128xbf16>
    %48 = arith.mulf %40, %47 : vector<32x128xbf16>
    %c0_21 = arith.constant 0 : index
    %c0_22 = arith.constant 0 : index
    %49 = vector.load %arg4[%c0_21, %c0_22] : memref<1x128xbf16, #tpu.memory_space<vmem>>, vector<1x128xbf16>
    %cst_23 = arith.constant dense<0.000000e+00> : vector<1x32xf32>
    %50 = tpu.matmul %49, %48, %cst_23 {dimension_numbers = #tpu.dot_dimension_numbers<[1], [1], [0], [0], [0, 0, 1, 0], [], []>} : vector<1x128xbf16>, vector<32x128xbf16>, vector<1x32xf32> -> vector<1x32xf32>
    %c0_24 = arith.constant 0 : index
    %51 = memref.load %arg5[%c0_24] : memref<12xf32, #tpu.memory_space<smem>>
    %52 = vector.broadcast %51 : f32 to vector<1x32xf32>
    %53 = arith.mulf %52, %50 : vector<1x32xf32>
    %54 = arith.addf %8, %53 : vector<1x32xf32>
    %c32 = arith.constant 32 : index
    %c0_25 = arith.constant 0 : index
    %55 = vector.load %arg8[%c32, %c0_25] : memref<384x512xbf16, #tpu.memory_space<vmem>>, vector<32x256xbf16>
    %c0_26 = arith.constant 0 : index
    %c0_27 = arith.constant 0 : index
    %56 = vector.load %arg3[%c0_26, %c0_27] : memref<128x512xbf16, #tpu.memory_space<vmem>>, vector<128x256xbf16>
    %cst_28 = arith.constant dense<0.000000e+00> : vector<32x256xf32>
    %57 = tpu.matmul %48, %56, %cst_28 {dimension_numbers = #tpu.dot_dimension_numbers<[1], [0], [0], [1], [0, 0, 1, 1], [], []>} : vector<32x128xbf16>, vector<128x256xbf16>, vector<32x256xf32> -> vector<32x256xf32>
    %58 = arith.extf %55 : vector<32x256xbf16> to vector<32x256xf32>
    %59 = arith.addf %58, %57 : vector<32x256xf32>
    %60 = arith.truncf %59 : vector<32x256xf32> to vector<32x256xbf16>
    %61 = vector.extract_strided_slice %60 {offsets = [0, 0], sizes = [32, 128], strides = [1, 1]} : vector<32x256xbf16> to vector<32x128xbf16>
    %62 = arith.negf %61 : vector<32x128xbf16>
    %63 = math.exp %62 : vector<32x128xbf16>
    %cst_29 = arith.constant 1.000000e+00 : bf16
    %64 = vector.broadcast %cst_29 : bf16 to vector<32x128xbf16>
    %65 = arith.addf %64, %63 : vector<32x128xbf16>
    %66 = arith.divf %64, %65 : vector<32x128xbf16>
    %67 = vector.extract_strided_slice %60 {offsets = [0, 128], sizes = [32, 128], strides = [1, 1]} : vector<32x256xbf16> to vector<32x128xbf16>
    %68 = arith.negf %67 : vector<32x128xbf16>
    %69 = math.exp %68 : vector<32x128xbf16>
    %cst_30 = arith.constant 1.000000e+00 : bf16
    %70 = vector.broadcast %cst_30 : bf16 to vector<32x128xbf16>
    %71 = arith.addf %70, %69 : vector<32x128xbf16>
    %72 = arith.divf %70, %71 : vector<32x128xbf16>
    %c32_31 = arith.constant 32 : index
    %c256_32 = arith.constant 256 : index
    %73 = vector.load %arg8[%c32_31, %c256_32] : memref<384x512xbf16, #tpu.memory_space<vmem>>, vector<32x256xbf16>
    %c0_33 = arith.constant 0 : index
    %c256_34 = arith.constant 256 : index
    %74 = vector.load %arg3[%c0_33, %c256_34] : memref<128x512xbf16, #tpu.memory_space<vmem>>, vector<128x256xbf16>
    %cst_35 = arith.constant dense<0.000000e+00> : vector<32x256xf32>
    %75 = tpu.matmul %48, %74, %cst_35 {dimension_numbers = #tpu.dot_dimension_numbers<[1], [0], [0], [1], [0, 0, 1, 1], [], []>} : vector<32x128xbf16>, vector<128x256xbf16>, vector<32x256xf32> -> vector<32x256xf32>
    %76 = arith.extf %73 : vector<32x256xbf16> to vector<32x256xf32>
    %77 = arith.addf %76, %75 : vector<32x256xf32>
    %78 = arith.truncf %77 : vector<32x256xf32> to vector<32x256xbf16>
    %79 = vector.extract_strided_slice %78 {offsets = [0, 0], sizes = [32, 128], strides = [1, 1]} : vector<32x256xbf16> to vector<32x128xbf16>
    %80 = math.tanh %79 : vector<32x128xbf16>
    %81 = vector.extract_strided_slice %78 {offsets = [0, 128], sizes = [32, 128], strides = [1, 1]} : vector<32x256xbf16> to vector<32x128xbf16>
    %82 = arith.negf %81 : vector<32x128xbf16>
    %83 = math.exp %82 : vector<32x128xbf16>
    %cst_36 = arith.constant 1.000000e+00 : bf16
    %84 = vector.broadcast %cst_36 : bf16 to vector<32x128xbf16>
    %85 = arith.addf %84, %83 : vector<32x128xbf16>
    %86 = arith.divf %84, %85 : vector<32x128xbf16>
    %87 = arith.extf %72 : vector<32x128xbf16> to vector<32x128xf32>
    %88 = arith.mulf %87, %45 : vector<32x128xf32>
    %89 = arith.mulf %66, %80 : vector<32x128xbf16>
    %90 = arith.extf %89 : vector<32x128xbf16> to vector<32x128xf32>
    %91 = arith.addf %88, %90 : vector<32x128xf32>
    %92 = arith.truncf %91 : vector<32x128xf32> to vector<32x128xbf16>
    %93 = math.tanh %92 : vector<32x128xbf16>
    %94 = arith.mulf %86, %93 : vector<32x128xbf16>
    %c0_37 = arith.constant 0 : index
    %c0_38 = arith.constant 0 : index
    %95 = vector.load %arg4[%c0_37, %c0_38] : memref<1x128xbf16, #tpu.memory_space<vmem>>, vector<1x128xbf16>
    %cst_39 = arith.constant dense<0.000000e+00> : vector<1x32xf32>
    %96 = tpu.matmul %95, %94, %cst_39 {dimension_numbers = #tpu.dot_dimension_numbers<[1], [1], [0], [0], [0, 0, 1, 0], [], []>} : vector<1x128xbf16>, vector<32x128xbf16>, vector<1x32xf32> -> vector<1x32xf32>
    %c1 = arith.constant 1 : index
    %97 = memref.load %arg5[%c1] : memref<12xf32, #tpu.memory_space<smem>>
    %98 = vector.broadcast %97 : f32 to vector<1x32xf32>
    %99 = arith.mulf %98, %96 : vector<1x32xf32>
    %100 = arith.addf %54, %99 : vector<1x32xf32>
    %c64 = arith.constant 64 : index
    %c0_40 = arith.constant 0 : index
    %101 = vector.load %arg8[%c64, %c0_40] : memref<384x512xbf16, #tpu.memory_space<vmem>>, vector<32x256xbf16>
    %c0_41 = arith.constant 0 : index
    %c0_42 = arith.constant 0 : index
    %102 = vector.load %arg3[%c0_41, %c0_42] : memref<128x512xbf16, #tpu.memory_space<vmem>>, vector<128x256xbf16>
    %cst_43 = arith.constant dense<0.000000e+00> : vector<32x256xf32>
    %103 = tpu.matmul %94, %102, %cst_43 {dimension_numbers = #tpu.dot_dimension_numbers<[1], [0], [0], [1], [0, 0, 1, 1], [], []>} : vector<32x128xbf16>, vector<128x256xbf16>, vector<32x256xf32> -> vector<32x256xf32>
    %104 = arith.extf %101 : vector<32x256xbf16> to vector<32x256xf32>
    %105 = arith.addf %104, %103 : vector<32x256xf32>
    %106 = arith.truncf %105 : vector<32x256xf32> to vector<32x256xbf16>
    %107 = vector.extract_strided_slice %106 {offsets = [0, 0], sizes = [32, 128], strides = [1, 1]} : vector<32x256xbf16> to vector<32x128xbf16>
    %108 = arith.negf %107 : vector<32x128xbf16>
    %109 = math.exp %108 : vector<32x128xbf16>
    %cst_44 = arith.constant 1.000000e+00 : bf16
    %110 = vector.broadcast %cst_44 : bf16 to vector<32x128xbf16>
    %111 = arith.addf %110, %109 : vector<32x128xbf16>
    %112 = arith.divf %110, %111 : vector<32x128xbf16>
    %113 = vector.extract_strided_slice %106 {offsets = [0, 128], sizes = [32, 128], strides = [1, 1]} : vector<32x256xbf16> to vector<32x128xbf16>
    %114 = arith.negf %113 : vector<32x128xbf16>
    %115 = math.exp %114 : vector<32x128xbf16>
    %cst_45 = arith.constant 1.000000e+00 : bf16
    %116 = vector.broadcast %cst_45 : bf16 to vector<32x128xbf16>
    %117 = arith.addf %116, %115 : vector<32x128xbf16>
    %118 = arith.divf %116, %117 : vector<32x128xbf16>
    %c64_46 = arith.constant 64 : index
    %c256_47 = arith.constant 256 : index
    %119 = vector.load %arg8[%c64_46, %c256_47] : memref<384x512xbf16, #tpu.memory_space<vmem>>, vector<32x256xbf16>
    %c0_48 = arith.constant 0 : index
    %c256_49 = arith.constant 256 : index
    %120 = vector.load %arg3[%c0_48, %c256_49] : memref<128x512xbf16, #tpu.memory_space<vmem>>, vector<128x256xbf16>
    %cst_50 = arith.constant dense<0.000000e+00> : vector<32x256xf32>
    %121 = tpu.matmul %94, %120, %cst_50 {dimension_numbers = #tpu.dot_dimension_numbers<[1], [0], [0], [1], [0, 0, 1, 1], [], []>} : vector<32x128xbf16>, vector<128x256xbf16>, vector<32x256xf32> -> vector<32x256xf32>
    %122 = arith.extf %119 : vector<32x256xbf16> to vector<32x256xf32>
    %123 = arith.addf %122, %121 : vector<32x256xf32>
    %124 = arith.truncf %123 : vector<32x256xf32> to vector<32x256xbf16>
    %125 = vector.extract_strided_slice %124 {offsets = [0, 0], sizes = [32, 128], strides = [1, 1]} : vector<32x256xbf16> to vector<32x128xbf16>
    %126 = math.tanh %125 : vector<32x128xbf16>
    %127 = vector.extract_strided_slice %124 {offsets = [0, 128], sizes = [32, 128], strides = [1, 1]} : vector<32x256xbf16> to vector<32x128xbf16>
    %128 = arith.negf %127 : vector<32x128xbf16>
    %129 = math.exp %128 : vector<32x128xbf16>
    %cst_51 = arith.constant 1.000000e+00 : bf16
    %130 = vector.broadcast %cst_51 : bf16 to vector<32x128xbf16>
    %131 = arith.addf %130, %129 : vector<32x128xbf16>
    %132 = arith.divf %130, %131 : vector<32x128xbf16>
    %133 = arith.extf %118 : vector<32x128xbf16> to vector<32x128xf32>
    %134 = arith.mulf %133, %91 : vector<32x128xf32>
    %135 = arith.mulf %112, %126 : vector<32x128xbf16>
    %136 = arith.extf %135 : vector<32x128xbf16> to vector<32x128xf32>
    %137 = arith.addf %134, %136 : vector<32x128xf32>
    %138 = arith.truncf %137 : vector<32x128xf32> to vector<32x128xbf16>
    %139 = math.tanh %138 : vector<32x128xbf16>
    %140 = arith.mulf %132, %139 : vector<32x128xbf16>
    %c0_52 = arith.constant 0 : index
    %c0_53 = arith.constant 0 : index
    %141 = vector.load %arg4[%c0_52, %c0_53] : memref<1x128xbf16, #tpu.memory_space<vmem>>, vector<1x128xbf16>
    %cst_54 = arith.constant dense<0.000000e+00> : vector<1x32xf32>
    %142 = tpu.matmul %141, %140, %cst_54 {dimension_numbers = #tpu.dot_dimension_numbers<[1], [1], [0], [0], [0, 0, 1, 0], [], []>} : vector<1x128xbf16>, vector<32x128xbf16>, vector<1x32xf32> -> vector<1x32xf32>
    %c2 = arith.constant 2 : index
    %143 = memref.load %arg5[%c2] : memref<12xf32, #tpu.memory_space<smem>>
    %144 = vector.broadcast %143 : f32 to vector<1x32xf32>
    %145 = arith.mulf %144, %142 : vector<1x32xf32>
    %146 = arith.addf %100, %145 : vector<1x32xf32>
    %c96 = arith.constant 96 : index
    %c0_55 = arith.constant 0 : index
    %147 = vector.load %arg8[%c96, %c0_55] : memref<384x512xbf16, #tpu.memory_space<vmem>>, vector<32x256xbf16>
    %c0_56 = arith.constant 0 : index
    %c0_57 = arith.constant 0 : index
    %148 = vector.load %arg3[%c0_56, %c0_57] : memref<128x512xbf16, #tpu.memory_space<vmem>>, vector<128x256xbf16>
    %cst_58 = arith.constant dense<0.000000e+00> : vector<32x256xf32>
    %149 = tpu.matmul %140, %148, %cst_58 {dimension_numbers = #tpu.dot_dimension_numbers<[1], [0], [0], [1], [0, 0, 1, 1], [], []>} : vector<32x128xbf16>, vector<128x256xbf16>, vector<32x256xf32> -> vector<32x256xf32>
    %150 = arith.extf %147 : vector<32x256xbf16> to vector<32x256xf32>
    %151 = arith.addf %150, %149 : vector<32x256xf32>
    %152 = arith.truncf %151 : vector<32x256xf32> to vector<32x256xbf16>
    %153 = vector.extract_strided_slice %152 {offsets = [0, 0], sizes = [32, 128], strides = [1, 1]} : vector<32x256xbf16> to vector<32x128xbf16>
    %154 = arith.negf %153 : vector<32x128xbf16>
    %155 = math.exp %154 : vector<32x128xbf16>
    %cst_59 = arith.constant 1.000000e+00 : bf16
    %156 = vector.broadcast %cst_59 : bf16 to vector<32x128xbf16>
    %157 = arith.addf %156, %155 : vector<32x128xbf16>
    %158 = arith.divf %156, %157 : vector<32x128xbf16>
    %159 = vector.extract_strided_slice %152 {offsets = [0, 128], sizes = [32, 128], strides = [1, 1]} : vector<32x256xbf16> to vector<32x128xbf16>
    %160 = arith.negf %159 : vector<32x128xbf16>
    %161 = math.exp %160 : vector<32x128xbf16>
    %cst_60 = arith.constant 1.000000e+00 : bf16
    %162 = vector.broadcast %cst_60 : bf16 to vector<32x128xbf16>
    %163 = arith.addf %162, %161 : vector<32x128xbf16>
    %164 = arith.divf %162, %163 : vector<32x128xbf16>
    %c96_61 = arith.constant 96 : index
    %c256_62 = arith.constant 256 : index
    %165 = vector.load %arg8[%c96_61, %c256_62] : memref<384x512xbf16, #tpu.memory_space<vmem>>, vector<32x256xbf16>
    %c0_63 = arith.constant 0 : index
    %c256_64 = arith.constant 256 : index
    %166 = vector.load %arg3[%c0_63, %c256_64] : memref<128x512xbf16, #tpu.memory_space<vmem>>, vector<128x256xbf16>
    %cst_65 = arith.constant dense<0.000000e+00> : vector<32x256xf32>
    %167 = tpu.matmul %140, %166, %cst_65 {dimension_numbers = #tpu.dot_dimension_numbers<[1], [0], [0], [1], [0, 0, 1, 1], [], []>} : vector<32x128xbf16>, vector<128x256xbf16>, vector<32x256xf32> -> vector<32x256xf32>
    %168 = arith.extf %165 : vector<32x256xbf16> to vector<32x256xf32>
    %169 = arith.addf %168, %167 : vector<32x256xf32>
    %170 = arith.truncf %169 : vector<32x256xf32> to vector<32x256xbf16>
    %171 = vector.extract_strided_slice %170 {offsets = [0, 0], sizes = [32, 128], strides = [1, 1]} : vector<32x256xbf16> to vector<32x128xbf16>
    %172 = math.tanh %171 : vector<32x128xbf16>
    %173 = vector.extract_strided_slice %170 {offsets = [0, 128], sizes = [32, 128], strides = [1, 1]} : vector<32x256xbf16> to vector<32x128xbf16>
    %174 = arith.negf %173 : vector<32x128xbf16>
    %175 = math.exp %174 : vector<32x128xbf16>
    %cst_66 = arith.constant 1.000000e+00 : bf16
    %176 = vector.broadcast %cst_66 : bf16 to vector<32x128xbf16>
    %177 = arith.addf %176, %175 : vector<32x128xbf16>
    %178 = arith.divf %176, %177 : vector<32x128xbf16>
    %179 = arith.extf %164 : vector<32x128xbf16> to vector<32x128xf32>
    %180 = arith.mulf %179, %137 : vector<32x128xf32>
    %181 = arith.mulf %158, %172 : vector<32x128xbf16>
    %182 = arith.extf %181 : vector<32x128xbf16> to vector<32x128xf32>
    %183 = arith.addf %180, %182 : vector<32x128xf32>
    %184 = arith.truncf %183 : vector<32x128xf32> to vector<32x128xbf16>
    %185 = math.tanh %184 : vector<32x128xbf16>
    %186 = arith.mulf %178, %185 : vector<32x128xbf16>
    %c0_67 = arith.constant 0 : index
    %c0_68 = arith.constant 0 : index
    %187 = vector.load %arg4[%c0_67, %c0_68] : memref<1x128xbf16, #tpu.memory_space<vmem>>, vector<1x128xbf16>
    %cst_69 = arith.constant dense<0.000000e+00> : vector<1x32xf32>
    %188 = tpu.matmul %187, %186, %cst_69 {dimension_numbers = #tpu.dot_dimension_numbers<[1], [1], [0], [0], [0, 0, 1, 0], [], []>} : vector<1x128xbf16>, vector<32x128xbf16>, vector<1x32xf32> -> vector<1x32xf32>
    %c3 = arith.constant 3 : index
    %189 = memref.load %arg5[%c3] : memref<12xf32, #tpu.memory_space<smem>>
    %190 = vector.broadcast %189 : f32 to vector<1x32xf32>
    %191 = arith.mulf %190, %188 : vector<1x32xf32>
    %192 = arith.addf %146, %191 : vector<1x32xf32>
    %c128 = arith.constant 128 : index
    %c0_70 = arith.constant 0 : index
    %193 = vector.load %arg8[%c128, %c0_70] : memref<384x512xbf16, #tpu.memory_space<vmem>>, vector<32x256xbf16>
    %c0_71 = arith.constant 0 : index
    %c0_72 = arith.constant 0 : index
    %194 = vector.load %arg3[%c0_71, %c0_72] : memref<128x512xbf16, #tpu.memory_space<vmem>>, vector<128x256xbf16>
    %cst_73 = arith.constant dense<0.000000e+00> : vector<32x256xf32>
    %195 = tpu.matmul %186, %194, %cst_73 {dimension_numbers = #tpu.dot_dimension_numbers<[1], [0], [0], [1], [0, 0, 1, 1], [], []>} : vector<32x128xbf16>, vector<128x256xbf16>, vector<32x256xf32> -> vector<32x256xf32>
    %196 = arith.extf %193 : vector<32x256xbf16> to vector<32x256xf32>
    %197 = arith.addf %196, %195 : vector<32x256xf32>
    %198 = arith.truncf %197 : vector<32x256xf32> to vector<32x256xbf16>
    %199 = vector.extract_strided_slice %198 {offsets = [0, 0], sizes = [32, 128], strides = [1, 1]} : vector<32x256xbf16> to vector<32x128xbf16>
    %200 = arith.negf %199 : vector<32x128xbf16>
    %201 = math.exp %200 : vector<32x128xbf16>
    %cst_74 = arith.constant 1.000000e+00 : bf16
    %202 = vector.broadcast %cst_74 : bf16 to vector<32x128xbf16>
    %203 = arith.addf %202, %201 : vector<32x128xbf16>
    %204 = arith.divf %202, %203 : vector<32x128xbf16>
    %205 = vector.extract_strided_slice %198 {offsets = [0, 128], sizes = [32, 128], strides = [1, 1]} : vector<32x256xbf16> to vector<32x128xbf16>
    %206 = arith.negf %205 : vector<32x128xbf16>
    %207 = math.exp %206 : vector<32x128xbf16>
    %cst_75 = arith.constant 1.000000e+00 : bf16
    %208 = vector.broadcast %cst_75 : bf16 to vector<32x128xbf16>
    %209 = arith.addf %208, %207 : vector<32x128xbf16>
    %210 = arith.divf %208, %209 : vector<32x128xbf16>
    %c128_76 = arith.constant 128 : index
    %c256_77 = arith.constant 256 : index
    %211 = vector.load %arg8[%c128_76, %c256_77] : memref<384x512xbf16, #tpu.memory_space<vmem>>, vector<32x256xbf16>
    %c0_78 = arith.constant 0 : index
    %c256_79 = arith.constant 256 : index
    %212 = vector.load %arg3[%c0_78, %c256_79] : memref<128x512xbf16, #tpu.memory_space<vmem>>, vector<128x256xbf16>
    %cst_80 = arith.constant dense<0.000000e+00> : vector<32x256xf32>
    %213 = tpu.matmul %186, %212, %cst_80 {dimension_numbers = #tpu.dot_dimension_numbers<[1], [0], [0], [1], [0, 0, 1, 1], [], []>} : vector<32x128xbf16>, vector<128x256xbf16>, vector<32x256xf32> -> vector<32x256xf32>
    %214 = arith.extf %211 : vector<32x256xbf16> to vector<32x256xf32>
    %215 = arith.addf %214, %213 : vector<32x256xf32>
    %216 = arith.truncf %215 : vector<32x256xf32> to vector<32x256xbf16>
    %217 = vector.extract_strided_slice %216 {offsets = [0, 0], sizes = [32, 128], strides = [1, 1]} : vector<32x256xbf16> to vector<32x128xbf16>
    %218 = math.tanh %217 : vector<32x128xbf16>
    %219 = vector.extract_strided_slice %216 {offsets = [0, 128], sizes = [32, 128], strides = [1, 1]} : vector<32x256xbf16> to vector<32x128xbf16>
    %220 = arith.negf %219 : vector<32x128xbf16>
    %221 = math.exp %220 : vector<32x128xbf16>
    %cst_81 = arith.constant 1.000000e+00 : bf16
    %222 = vector.broadcast %cst_81 : bf16 to vector<32x128xbf16>
    %223 = arith.addf %222, %221 : vector<32x128xbf16>
    %224 = arith.divf %222, %223 : vector<32x128xbf16>
    %225 = arith.extf %210 : vector<32x128xbf16> to vector<32x128xf32>
    %226 = arith.mulf %225, %183 : vector<32x128xf32>
    %227 = arith.mulf %204, %218 : vector<32x128xbf16>
    %228 = arith.extf %227 : vector<32x128xbf16> to vector<32x128xf32>
    %229 = arith.addf %226, %228 : vector<32x128xf32>
    %230 = arith.truncf %229 : vector<32x128xf32> to vector<32x128xbf16>
    %231 = math.tanh %230 : vector<32x128xbf16>
    %232 = arith.mulf %224, %231 : vector<32x128xbf16>
    %c0_82 = arith.constant 0 : index
    %c0_83 = arith.constant 0 : index
    %233 = vector.load %arg4[%c0_82, %c0_83] : memref<1x128xbf16, #tpu.memory_space<vmem>>, vector<1x128xbf16>
    %cst_84 = arith.constant dense<0.000000e+00> : vector<1x32xf32>
    %234 = tpu.matmul %233, %232, %cst_84 {dimension_numbers = #tpu.dot_dimension_numbers<[1], [1], [0], [0], [0, 0, 1, 0], [], []>} : vector<1x128xbf16>, vector<32x128xbf16>, vector<1x32xf32> -> vector<1x32xf32>
    %c4 = arith.constant 4 : index
    %235 = memref.load %arg5[%c4] : memref<12xf32, #tpu.memory_space<smem>>
    %236 = vector.broadcast %235 : f32 to vector<1x32xf32>
    %237 = arith.mulf %236, %234 : vector<1x32xf32>
    %238 = arith.addf %192, %237 : vector<1x32xf32>
    %c160 = arith.constant 160 : index
    %c0_85 = arith.constant 0 : index
    %239 = vector.load %arg8[%c160, %c0_85] : memref<384x512xbf16, #tpu.memory_space<vmem>>, vector<32x256xbf16>
    %c0_86 = arith.constant 0 : index
    %c0_87 = arith.constant 0 : index
    %240 = vector.load %arg3[%c0_86, %c0_87] : memref<128x512xbf16, #tpu.memory_space<vmem>>, vector<128x256xbf16>
    %cst_88 = arith.constant dense<0.000000e+00> : vector<32x256xf32>
    %241 = tpu.matmul %232, %240, %cst_88 {dimension_numbers = #tpu.dot_dimension_numbers<[1], [0], [0], [1], [0, 0, 1, 1], [], []>} : vector<32x128xbf16>, vector<128x256xbf16>, vector<32x256xf32> -> vector<32x256xf32>
    %242 = arith.extf %239 : vector<32x256xbf16> to vector<32x256xf32>
    %243 = arith.addf %242, %241 : vector<32x256xf32>
    %244 = arith.truncf %243 : vector<32x256xf32> to vector<32x256xbf16>
    %245 = vector.extract_strided_slice %244 {offsets = [0, 0], sizes = [32, 128], strides = [1, 1]} : vector<32x256xbf16> to vector<32x128xbf16>
    %246 = arith.negf %245 : vector<32x128xbf16>
    %247 = math.exp %246 : vector<32x128xbf16>
    %cst_89 = arith.constant 1.000000e+00 : bf16
    %248 = vector.broadcast %cst_89 : bf16 to vector<32x128xbf16>
    %249 = arith.addf %248, %247 : vector<32x128xbf16>
    %250 = arith.divf %248, %249 : vector<32x128xbf16>
    %251 = vector.extract_strided_slice %244 {offsets = [0, 128], sizes = [32, 128], strides = [1, 1]} : vector<32x256xbf16> to vector<32x128xbf16>
    %252 = arith.negf %251 : vector<32x128xbf16>
    %253 = math.exp %252 : vector<32x128xbf16>
    %cst_90 = arith.constant 1.000000e+00 : bf16
    %254 = vector.broadcast %cst_90 : bf16 to vector<32x128xbf16>
    %255 = arith.addf %254, %253 : vector<32x128xbf16>
    %256 = arith.divf %254, %255 : vector<32x128xbf16>
    %c160_91 = arith.constant 160 : index
    %c256_92 = arith.constant 256 : index
    %257 = vector.load %arg8[%c160_91, %c256_92] : memref<384x512xbf16, #tpu.memory_space<vmem>>, vector<32x256xbf16>
    %c0_93 = arith.constant 0 : index
    %c256_94 = arith.constant 256 : index
    %258 = vector.load %arg3[%c0_93, %c256_94] : memref<128x512xbf16, #tpu.memory_space<vmem>>, vector<128x256xbf16>
    %cst_95 = arith.constant dense<0.000000e+00> : vector<32x256xf32>
    %259 = tpu.matmul %232, %258, %cst_95 {dimension_numbers = #tpu.dot_dimension_numbers<[1], [0], [0], [1], [0, 0, 1, 1], [], []>} : vector<32x128xbf16>, vector<128x256xbf16>, vector<32x256xf32> -> vector<32x256xf32>
    %260 = arith.extf %257 : vector<32x256xbf16> to vector<32x256xf32>
    %261 = arith.addf %260, %259 : vector<32x256xf32>
    %262 = arith.truncf %261 : vector<32x256xf32> to vector<32x256xbf16>
    %263 = vector.extract_strided_slice %262 {offsets = [0, 0], sizes = [32, 128], strides = [1, 1]} : vector<32x256xbf16> to vector<32x128xbf16>
    %264 = math.tanh %263 : vector<32x128xbf16>
    %265 = vector.extract_strided_slice %262 {offsets = [0, 128], sizes = [32, 128], strides = [1, 1]} : vector<32x256xbf16> to vector<32x128xbf16>
    %266 = arith.negf %265 : vector<32x128xbf16>
    %267 = math.exp %266 : vector<32x128xbf16>
    %cst_96 = arith.constant 1.000000e+00 : bf16
    %268 = vector.broadcast %cst_96 : bf16 to vector<32x128xbf16>
    %269 = arith.addf %268, %267 : vector<32x128xbf16>
    %270 = arith.divf %268, %269 : vector<32x128xbf16>
    %271 = arith.extf %256 : vector<32x128xbf16> to vector<32x128xf32>
    %272 = arith.mulf %271, %229 : vector<32x128xf32>
    %273 = arith.mulf %250, %264 : vector<32x128xbf16>
    %274 = arith.extf %273 : vector<32x128xbf16> to vector<32x128xf32>
    %275 = arith.addf %272, %274 : vector<32x128xf32>
    %276 = arith.truncf %275 : vector<32x128xf32> to vector<32x128xbf16>
    %277 = math.tanh %276 : vector<32x128xbf16>
    %278 = arith.mulf %270, %277 : vector<32x128xbf16>
    %c0_97 = arith.constant 0 : index
    %c0_98 = arith.constant 0 : index
    %279 = vector.load %arg4[%c0_97, %c0_98] : memref<1x128xbf16, #tpu.memory_space<vmem>>, vector<1x128xbf16>
    %cst_99 = arith.constant dense<0.000000e+00> : vector<1x32xf32>
    %280 = tpu.matmul %279, %278, %cst_99 {dimension_numbers = #tpu.dot_dimension_numbers<[1], [1], [0], [0], [0, 0, 1, 0], [], []>} : vector<1x128xbf16>, vector<32x128xbf16>, vector<1x32xf32> -> vector<1x32xf32>
    %c5 = arith.constant 5 : index
    %281 = memref.load %arg5[%c5] : memref<12xf32, #tpu.memory_space<smem>>
    %282 = vector.broadcast %281 : f32 to vector<1x32xf32>
    %283 = arith.mulf %282, %280 : vector<1x32xf32>
    %284 = arith.addf %238, %283 : vector<1x32xf32>
    %c192 = arith.constant 192 : index
    %c0_100 = arith.constant 0 : index
    %285 = vector.load %arg8[%c192, %c0_100] : memref<384x512xbf16, #tpu.memory_space<vmem>>, vector<32x256xbf16>
    %c0_101 = arith.constant 0 : index
    %c0_102 = arith.constant 0 : index
    %286 = vector.load %arg3[%c0_101, %c0_102] : memref<128x512xbf16, #tpu.memory_space<vmem>>, vector<128x256xbf16>
    %cst_103 = arith.constant dense<0.000000e+00> : vector<32x256xf32>
    %287 = tpu.matmul %278, %286, %cst_103 {dimension_numbers = #tpu.dot_dimension_numbers<[1], [0], [0], [1], [0, 0, 1, 1], [], []>} : vector<32x128xbf16>, vector<128x256xbf16>, vector<32x256xf32> -> vector<32x256xf32>
    %288 = arith.extf %285 : vector<32x256xbf16> to vector<32x256xf32>
    %289 = arith.addf %288, %287 : vector<32x256xf32>
    %290 = arith.truncf %289 : vector<32x256xf32> to vector<32x256xbf16>
    %291 = vector.extract_strided_slice %290 {offsets = [0, 0], sizes = [32, 128], strides = [1, 1]} : vector<32x256xbf16> to vector<32x128xbf16>
    %292 = arith.negf %291 : vector<32x128xbf16>
    %293 = math.exp %292 : vector<32x128xbf16>
    %cst_104 = arith.constant 1.000000e+00 : bf16
    %294 = vector.broadcast %cst_104 : bf16 to vector<32x128xbf16>
    %295 = arith.addf %294, %293 : vector<32x128xbf16>
    %296 = arith.divf %294, %295 : vector<32x128xbf16>
    %297 = vector.extract_strided_slice %290 {offsets = [0, 128], sizes = [32, 128], strides = [1, 1]} : vector<32x256xbf16> to vector<32x128xbf16>
    %298 = arith.negf %297 : vector<32x128xbf16>
    %299 = math.exp %298 : vector<32x128xbf16>
    %cst_105 = arith.constant 1.000000e+00 : bf16
    %300 = vector.broadcast %cst_105 : bf16 to vector<32x128xbf16>
    %301 = arith.addf %300, %299 : vector<32x128xbf16>
    %302 = arith.divf %300, %301 : vector<32x128xbf16>
    %c192_106 = arith.constant 192 : index
    %c256_107 = arith.constant 256 : index
    %303 = vector.load %arg8[%c192_106, %c256_107] : memref<384x512xbf16, #tpu.memory_space<vmem>>, vector<32x256xbf16>
    %c0_108 = arith.constant 0 : index
    %c256_109 = arith.constant 256 : index
    %304 = vector.load %arg3[%c0_108, %c256_109] : memref<128x512xbf16, #tpu.memory_space<vmem>>, vector<128x256xbf16>
    %cst_110 = arith.constant dense<0.000000e+00> : vector<32x256xf32>
    %305 = tpu.matmul %278, %304, %cst_110 {dimension_numbers = #tpu.dot_dimension_numbers<[1], [0], [0], [1], [0, 0, 1, 1], [], []>} : vector<32x128xbf16>, vector<128x256xbf16>, vector<32x256xf32> -> vector<32x256xf32>
    %306 = arith.extf %303 : vector<32x256xbf16> to vector<32x256xf32>
    %307 = arith.addf %306, %305 : vector<32x256xf32>
    %308 = arith.truncf %307 : vector<32x256xf32> to vector<32x256xbf16>
    %309 = vector.extract_strided_slice %308 {offsets = [0, 0], sizes = [32, 128], strides = [1, 1]} : vector<32x256xbf16> to vector<32x128xbf16>
    %310 = math.tanh %309 : vector<32x128xbf16>
    %311 = vector.extract_strided_slice %308 {offsets = [0, 128], sizes = [32, 128], strides = [1, 1]} : vector<32x256xbf16> to vector<32x128xbf16>
    %312 = arith.negf %311 : vector<32x128xbf16>
    %313 = math.exp %312 : vector<32x128xbf16>
    %cst_111 = arith.constant 1.000000e+00 : bf16
    %314 = vector.broadcast %cst_111 : bf16 to vector<32x128xbf16>
    %315 = arith.addf %314, %313 : vector<32x128xbf16>
    %316 = arith.divf %314, %315 : vector<32x128xbf16>
    %317 = arith.extf %302 : vector<32x128xbf16> to vector<32x128xf32>
    %318 = arith.mulf %317, %275 : vector<32x128xf32>
    %319 = arith.mulf %296, %310 : vector<32x128xbf16>
    %320 = arith.extf %319 : vector<32x128xbf16> to vector<32x128xf32>
    %321 = arith.addf %318, %320 : vector<32x128xf32>
    %322 = arith.truncf %321 : vector<32x128xf32> to vector<32x128xbf16>
    %323 = math.tanh %322 : vector<32x128xbf16>
    %324 = arith.mulf %316, %323 : vector<32x128xbf16>
    %c0_112 = arith.constant 0 : index
    %c0_113 = arith.constant 0 : index
    %325 = vector.load %arg4[%c0_112, %c0_113] : memref<1x128xbf16, #tpu.memory_space<vmem>>, vector<1x128xbf16>
    %cst_114 = arith.constant dense<0.000000e+00> : vector<1x32xf32>
    %326 = tpu.matmul %325, %324, %cst_114 {dimension_numbers = #tpu.dot_dimension_numbers<[1], [1], [0], [0], [0, 0, 1, 0], [], []>} : vector<1x128xbf16>, vector<32x128xbf16>, vector<1x32xf32> -> vector<1x32xf32>
    %c6 = arith.constant 6 : index
    %327 = memref.load %arg5[%c6] : memref<12xf32, #tpu.memory_space<smem>>
    %328 = vector.broadcast %327 : f32 to vector<1x32xf32>
    %329 = arith.mulf %328, %326 : vector<1x32xf32>
    %330 = arith.addf %284, %329 : vector<1x32xf32>
    %c224 = arith.constant 224 : index
    %c0_115 = arith.constant 0 : index
    %331 = vector.load %arg8[%c224, %c0_115] : memref<384x512xbf16, #tpu.memory_space<vmem>>, vector<32x256xbf16>
    %c0_116 = arith.constant 0 : index
    %c0_117 = arith.constant 0 : index
    %332 = vector.load %arg3[%c0_116, %c0_117] : memref<128x512xbf16, #tpu.memory_space<vmem>>, vector<128x256xbf16>
    %cst_118 = arith.constant dense<0.000000e+00> : vector<32x256xf32>
    %333 = tpu.matmul %324, %332, %cst_118 {dimension_numbers = #tpu.dot_dimension_numbers<[1], [0], [0], [1], [0, 0, 1, 1], [], []>} : vector<32x128xbf16>, vector<128x256xbf16>, vector<32x256xf32> -> vector<32x256xf32>
    %334 = arith.extf %331 : vector<32x256xbf16> to vector<32x256xf32>
    %335 = arith.addf %334, %333 : vector<32x256xf32>
    %336 = arith.truncf %335 : vector<32x256xf32> to vector<32x256xbf16>
    %337 = vector.extract_strided_slice %336 {offsets = [0, 0], sizes = [32, 128], strides = [1, 1]} : vector<32x256xbf16> to vector<32x128xbf16>
    %338 = arith.negf %337 : vector<32x128xbf16>
    %339 = math.exp %338 : vector<32x128xbf16>
    %cst_119 = arith.constant 1.000000e+00 : bf16
    %340 = vector.broadcast %cst_119 : bf16 to vector<32x128xbf16>
    %341 = arith.addf %340, %339 : vector<32x128xbf16>
    %342 = arith.divf %340, %341 : vector<32x128xbf16>
    %343 = vector.extract_strided_slice %336 {offsets = [0, 128], sizes = [32, 128], strides = [1, 1]} : vector<32x256xbf16> to vector<32x128xbf16>
    %344 = arith.negf %343 : vector<32x128xbf16>
    %345 = math.exp %344 : vector<32x128xbf16>
    %cst_120 = arith.constant 1.000000e+00 : bf16
    %346 = vector.broadcast %cst_120 : bf16 to vector<32x128xbf16>
    %347 = arith.addf %346, %345 : vector<32x128xbf16>
    %348 = arith.divf %346, %347 : vector<32x128xbf16>
    %c224_121 = arith.constant 224 : index
    %c256_122 = arith.constant 256 : index
    %349 = vector.load %arg8[%c224_121, %c256_122] : memref<384x512xbf16, #tpu.memory_space<vmem>>, vector<32x256xbf16>
    %c0_123 = arith.constant 0 : index
    %c256_124 = arith.constant 256 : index
    %350 = vector.load %arg3[%c0_123, %c256_124] : memref<128x512xbf16, #tpu.memory_space<vmem>>, vector<128x256xbf16>
    %cst_125 = arith.constant dense<0.000000e+00> : vector<32x256xf32>
    %351 = tpu.matmul %324, %350, %cst_125 {dimension_numbers = #tpu.dot_dimension_numbers<[1], [0], [0], [1], [0, 0, 1, 1], [], []>} : vector<32x128xbf16>, vector<128x256xbf16>, vector<32x256xf32> -> vector<32x256xf32>
    %352 = arith.extf %349 : vector<32x256xbf16> to vector<32x256xf32>
    %353 = arith.addf %352, %351 : vector<32x256xf32>
    %354 = arith.truncf %353 : vector<32x256xf32> to vector<32x256xbf16>
    %355 = vector.extract_strided_slice %354 {offsets = [0, 0], sizes = [32, 128], strides = [1, 1]} : vector<32x256xbf16> to vector<32x128xbf16>
    %356 = math.tanh %355 : vector<32x128xbf16>
    %357 = vector.extract_strided_slice %354 {offsets = [0, 128], sizes = [32, 128], strides = [1, 1]} : vector<32x256xbf16> to vector<32x128xbf16>
    %358 = arith.negf %357 : vector<32x128xbf16>
    %359 = math.exp %358 : vector<32x128xbf16>
    %cst_126 = arith.constant 1.000000e+00 : bf16
    %360 = vector.broadcast %cst_126 : bf16 to vector<32x128xbf16>
    %361 = arith.addf %360, %359 : vector<32x128xbf16>
    %362 = arith.divf %360, %361 : vector<32x128xbf16>
    %363 = arith.extf %348 : vector<32x128xbf16> to vector<32x128xf32>
    %364 = arith.mulf %363, %321 : vector<32x128xf32>
    %365 = arith.mulf %342, %356 : vector<32x128xbf16>
    %366 = arith.extf %365 : vector<32x128xbf16> to vector<32x128xf32>
    %367 = arith.addf %364, %366 : vector<32x128xf32>
    %368 = arith.truncf %367 : vector<32x128xf32> to vector<32x128xbf16>
    %369 = math.tanh %368 : vector<32x128xbf16>
    %370 = arith.mulf %362, %369 : vector<32x128xbf16>
    %c0_127 = arith.constant 0 : index
    %c0_128 = arith.constant 0 : index
    %371 = vector.load %arg4[%c0_127, %c0_128] : memref<1x128xbf16, #tpu.memory_space<vmem>>, vector<1x128xbf16>
    %cst_129 = arith.constant dense<0.000000e+00> : vector<1x32xf32>
    %372 = tpu.matmul %371, %370, %cst_129 {dimension_numbers = #tpu.dot_dimension_numbers<[1], [1], [0], [0], [0, 0, 1, 0], [], []>} : vector<1x128xbf16>, vector<32x128xbf16>, vector<1x32xf32> -> vector<1x32xf32>
    %c7 = arith.constant 7 : index
    %373 = memref.load %arg5[%c7] : memref<12xf32, #tpu.memory_space<smem>>
    %374 = vector.broadcast %373 : f32 to vector<1x32xf32>
    %375 = arith.mulf %374, %372 : vector<1x32xf32>
    %376 = arith.addf %330, %375 : vector<1x32xf32>
    %c256_130 = arith.constant 256 : index
    %c0_131 = arith.constant 0 : index
    %377 = vector.load %arg8[%c256_130, %c0_131] : memref<384x512xbf16, #tpu.memory_space<vmem>>, vector<32x256xbf16>
    %c0_132 = arith.constant 0 : index
    %c0_133 = arith.constant 0 : index
    %378 = vector.load %arg3[%c0_132, %c0_133] : memref<128x512xbf16, #tpu.memory_space<vmem>>, vector<128x256xbf16>
    %cst_134 = arith.constant dense<0.000000e+00> : vector<32x256xf32>
    %379 = tpu.matmul %370, %378, %cst_134 {dimension_numbers = #tpu.dot_dimension_numbers<[1], [0], [0], [1], [0, 0, 1, 1], [], []>} : vector<32x128xbf16>, vector<128x256xbf16>, vector<32x256xf32> -> vector<32x256xf32>
    %380 = arith.extf %377 : vector<32x256xbf16> to vector<32x256xf32>
    %381 = arith.addf %380, %379 : vector<32x256xf32>
    %382 = arith.truncf %381 : vector<32x256xf32> to vector<32x256xbf16>
    %383 = vector.extract_strided_slice %382 {offsets = [0, 0], sizes = [32, 128], strides = [1, 1]} : vector<32x256xbf16> to vector<32x128xbf16>
    %384 = arith.negf %383 : vector<32x128xbf16>
    %385 = math.exp %384 : vector<32x128xbf16>
    %cst_135 = arith.constant 1.000000e+00 : bf16
    %386 = vector.broadcast %cst_135 : bf16 to vector<32x128xbf16>
    %387 = arith.addf %386, %385 : vector<32x128xbf16>
    %388 = arith.divf %386, %387 : vector<32x128xbf16>
    %389 = vector.extract_strided_slice %382 {offsets = [0, 128], sizes = [32, 128], strides = [1, 1]} : vector<32x256xbf16> to vector<32x128xbf16>
    %390 = arith.negf %389 : vector<32x128xbf16>
    %391 = math.exp %390 : vector<32x128xbf16>
    %cst_136 = arith.constant 1.000000e+00 : bf16
    %392 = vector.broadcast %cst_136 : bf16 to vector<32x128xbf16>
    %393 = arith.addf %392, %391 : vector<32x128xbf16>
    %394 = arith.divf %392, %393 : vector<32x128xbf16>
    %c256_137 = arith.constant 256 : index
    %c256_138 = arith.constant 256 : index
    %395 = vector.load %arg8[%c256_137, %c256_138] : memref<384x512xbf16, #tpu.memory_space<vmem>>, vector<32x256xbf16>
    %c0_139 = arith.constant 0 : index
    %c256_140 = arith.constant 256 : index
    %396 = vector.load %arg3[%c0_139, %c256_140] : memref<128x512xbf16, #tpu.memory_space<vmem>>, vector<128x256xbf16>
    %cst_141 = arith.constant dense<0.000000e+00> : vector<32x256xf32>
    %397 = tpu.matmul %370, %396, %cst_141 {dimension_numbers = #tpu.dot_dimension_numbers<[1], [0], [0], [1], [0, 0, 1, 1], [], []>} : vector<32x128xbf16>, vector<128x256xbf16>, vector<32x256xf32> -> vector<32x256xf32>
    %398 = arith.extf %395 : vector<32x256xbf16> to vector<32x256xf32>
    %399 = arith.addf %398, %397 : vector<32x256xf32>
    %400 = arith.truncf %399 : vector<32x256xf32> to vector<32x256xbf16>
    %401 = vector.extract_strided_slice %400 {offsets = [0, 0], sizes = [32, 128], strides = [1, 1]} : vector<32x256xbf16> to vector<32x128xbf16>
    %402 = math.tanh %401 : vector<32x128xbf16>
    %403 = vector.extract_strided_slice %400 {offsets = [0, 128], sizes = [32, 128], strides = [1, 1]} : vector<32x256xbf16> to vector<32x128xbf16>
    %404 = arith.negf %403 : vector<32x128xbf16>
    %405 = math.exp %404 : vector<32x128xbf16>
    %cst_142 = arith.constant 1.000000e+00 : bf16
    %406 = vector.broadcast %cst_142 : bf16 to vector<32x128xbf16>
    %407 = arith.addf %406, %405 : vector<32x128xbf16>
    %408 = arith.divf %406, %407 : vector<32x128xbf16>
    %409 = arith.extf %394 : vector<32x128xbf16> to vector<32x128xf32>
    %410 = arith.mulf %409, %367 : vector<32x128xf32>
    %411 = arith.mulf %388, %402 : vector<32x128xbf16>
    %412 = arith.extf %411 : vector<32x128xbf16> to vector<32x128xf32>
    %413 = arith.addf %410, %412 : vector<32x128xf32>
    %414 = arith.truncf %413 : vector<32x128xf32> to vector<32x128xbf16>
    %415 = math.tanh %414 : vector<32x128xbf16>
    %416 = arith.mulf %408, %415 : vector<32x128xbf16>
    %c0_143 = arith.constant 0 : index
    %c0_144 = arith.constant 0 : index
    %417 = vector.load %arg4[%c0_143, %c0_144] : memref<1x128xbf16, #tpu.memory_space<vmem>>, vector<1x128xbf16>
    %cst_145 = arith.constant dense<0.000000e+00> : vector<1x32xf32>
    %418 = tpu.matmul %417, %416, %cst_145 {dimension_numbers = #tpu.dot_dimension_numbers<[1], [1], [0], [0], [0, 0, 1, 0], [], []>} : vector<1x128xbf16>, vector<32x128xbf16>, vector<1x32xf32> -> vector<1x32xf32>
    %c8 = arith.constant 8 : index
    %419 = memref.load %arg5[%c8] : memref<12xf32, #tpu.memory_space<smem>>
    %420 = vector.broadcast %419 : f32 to vector<1x32xf32>
    %421 = arith.mulf %420, %418 : vector<1x32xf32>
    %422 = arith.addf %376, %421 : vector<1x32xf32>
    %c288 = arith.constant 288 : index
    %c0_146 = arith.constant 0 : index
    %423 = vector.load %arg8[%c288, %c0_146] : memref<384x512xbf16, #tpu.memory_space<vmem>>, vector<32x256xbf16>
    %c0_147 = arith.constant 0 : index
    %c0_148 = arith.constant 0 : index
    %424 = vector.load %arg3[%c0_147, %c0_148] : memref<128x512xbf16, #tpu.memory_space<vmem>>, vector<128x256xbf16>
    %cst_149 = arith.constant dense<0.000000e+00> : vector<32x256xf32>
    %425 = tpu.matmul %416, %424, %cst_149 {dimension_numbers = #tpu.dot_dimension_numbers<[1], [0], [0], [1], [0, 0, 1, 1], [], []>} : vector<32x128xbf16>, vector<128x256xbf16>, vector<32x256xf32> -> vector<32x256xf32>
    %426 = arith.extf %423 : vector<32x256xbf16> to vector<32x256xf32>
    %427 = arith.addf %426, %425 : vector<32x256xf32>
    %428 = arith.truncf %427 : vector<32x256xf32> to vector<32x256xbf16>
    %429 = vector.extract_strided_slice %428 {offsets = [0, 0], sizes = [32, 128], strides = [1, 1]} : vector<32x256xbf16> to vector<32x128xbf16>
    %430 = arith.negf %429 : vector<32x128xbf16>
    %431 = math.exp %430 : vector<32x128xbf16>
    %cst_150 = arith.constant 1.000000e+00 : bf16
    %432 = vector.broadcast %cst_150 : bf16 to vector<32x128xbf16>
    %433 = arith.addf %432, %431 : vector<32x128xbf16>
    %434 = arith.divf %432, %433 : vector<32x128xbf16>
    %435 = vector.extract_strided_slice %428 {offsets = [0, 128], sizes = [32, 128], strides = [1, 1]} : vector<32x256xbf16> to vector<32x128xbf16>
    %436 = arith.negf %435 : vector<32x128xbf16>
    %437 = math.exp %436 : vector<32x128xbf16>
    %cst_151 = arith.constant 1.000000e+00 : bf16
    %438 = vector.broadcast %cst_151 : bf16 to vector<32x128xbf16>
    %439 = arith.addf %438, %437 : vector<32x128xbf16>
    %440 = arith.divf %438, %439 : vector<32x128xbf16>
    %c288_152 = arith.constant 288 : index
    %c256_153 = arith.constant 256 : index
    %441 = vector.load %arg8[%c288_152, %c256_153] : memref<384x512xbf16, #tpu.memory_space<vmem>>, vector<32x256xbf16>
    %c0_154 = arith.constant 0 : index
    %c256_155 = arith.constant 256 : index
    %442 = vector.load %arg3[%c0_154, %c256_155] : memref<128x512xbf16, #tpu.memory_space<vmem>>, vector<128x256xbf16>
    %cst_156 = arith.constant dense<0.000000e+00> : vector<32x256xf32>
    %443 = tpu.matmul %416, %442, %cst_156 {dimension_numbers = #tpu.dot_dimension_numbers<[1], [0], [0], [1], [0, 0, 1, 1], [], []>} : vector<32x128xbf16>, vector<128x256xbf16>, vector<32x256xf32> -> vector<32x256xf32>
    %444 = arith.extf %441 : vector<32x256xbf16> to vector<32x256xf32>
    %445 = arith.addf %444, %443 : vector<32x256xf32>
    %446 = arith.truncf %445 : vector<32x256xf32> to vector<32x256xbf16>
    %447 = vector.extract_strided_slice %446 {offsets = [0, 0], sizes = [32, 128], strides = [1, 1]} : vector<32x256xbf16> to vector<32x128xbf16>
    %448 = math.tanh %447 : vector<32x128xbf16>
    %449 = vector.extract_strided_slice %446 {offsets = [0, 128], sizes = [32, 128], strides = [1, 1]} : vector<32x256xbf16> to vector<32x128xbf16>
    %450 = arith.negf %449 : vector<32x128xbf16>
    %451 = math.exp %450 : vector<32x128xbf16>
    %cst_157 = arith.constant 1.000000e+00 : bf16
    %452 = vector.broadcast %cst_157 : bf16 to vector<32x128xbf16>
    %453 = arith.addf %452, %451 : vector<32x128xbf16>
    %454 = arith.divf %452, %453 : vector<32x128xbf16>
    %455 = arith.extf %440 : vector<32x128xbf16> to vector<32x128xf32>
    %456 = arith.mulf %455, %413 : vector<32x128xf32>
    %457 = arith.mulf %434, %448 : vector<32x128xbf16>
    %458 = arith.extf %457 : vector<32x128xbf16> to vector<32x128xf32>
    %459 = arith.addf %456, %458 : vector<32x128xf32>
    %460 = arith.truncf %459 : vector<32x128xf32> to vector<32x128xbf16>
    %461 = math.tanh %460 : vector<32x128xbf16>
    %462 = arith.mulf %454, %461 : vector<32x128xbf16>
    %c0_158 = arith.constant 0 : index
    %c0_159 = arith.constant 0 : index
    %463 = vector.load %arg4[%c0_158, %c0_159] : memref<1x128xbf16, #tpu.memory_space<vmem>>, vector<1x128xbf16>
    %cst_160 = arith.constant dense<0.000000e+00> : vector<1x32xf32>
    %464 = tpu.matmul %463, %462, %cst_160 {dimension_numbers = #tpu.dot_dimension_numbers<[1], [1], [0], [0], [0, 0, 1, 0], [], []>} : vector<1x128xbf16>, vector<32x128xbf16>, vector<1x32xf32> -> vector<1x32xf32>
    %c9 = arith.constant 9 : index
    %465 = memref.load %arg5[%c9] : memref<12xf32, #tpu.memory_space<smem>>
    %466 = vector.broadcast %465 : f32 to vector<1x32xf32>
    %467 = arith.mulf %466, %464 : vector<1x32xf32>
    %468 = arith.addf %422, %467 : vector<1x32xf32>
    %c320 = arith.constant 320 : index
    %c0_161 = arith.constant 0 : index
    %469 = vector.load %arg8[%c320, %c0_161] : memref<384x512xbf16, #tpu.memory_space<vmem>>, vector<32x256xbf16>
    %c0_162 = arith.constant 0 : index
    %c0_163 = arith.constant 0 : index
    %470 = vector.load %arg3[%c0_162, %c0_163] : memref<128x512xbf16, #tpu.memory_space<vmem>>, vector<128x256xbf16>
    %cst_164 = arith.constant dense<0.000000e+00> : vector<32x256xf32>
    %471 = tpu.matmul %462, %470, %cst_164 {dimension_numbers = #tpu.dot_dimension_numbers<[1], [0], [0], [1], [0, 0, 1, 1], [], []>} : vector<32x128xbf16>, vector<128x256xbf16>, vector<32x256xf32> -> vector<32x256xf32>
    %472 = arith.extf %469 : vector<32x256xbf16> to vector<32x256xf32>
    %473 = arith.addf %472, %471 : vector<32x256xf32>
    %474 = arith.truncf %473 : vector<32x256xf32> to vector<32x256xbf16>
    %475 = vector.extract_strided_slice %474 {offsets = [0, 0], sizes = [32, 128], strides = [1, 1]} : vector<32x256xbf16> to vector<32x128xbf16>
    %476 = arith.negf %475 : vector<32x128xbf16>
    %477 = math.exp %476 : vector<32x128xbf16>
    %cst_165 = arith.constant 1.000000e+00 : bf16
    %478 = vector.broadcast %cst_165 : bf16 to vector<32x128xbf16>
    %479 = arith.addf %478, %477 : vector<32x128xbf16>
    %480 = arith.divf %478, %479 : vector<32x128xbf16>
    %481 = vector.extract_strided_slice %474 {offsets = [0, 128], sizes = [32, 128], strides = [1, 1]} : vector<32x256xbf16> to vector<32x128xbf16>
    %482 = arith.negf %481 : vector<32x128xbf16>
    %483 = math.exp %482 : vector<32x128xbf16>
    %cst_166 = arith.constant 1.000000e+00 : bf16
    %484 = vector.broadcast %cst_166 : bf16 to vector<32x128xbf16>
    %485 = arith.addf %484, %483 : vector<32x128xbf16>
    %486 = arith.divf %484, %485 : vector<32x128xbf16>
    %c320_167 = arith.constant 320 : index
    %c256_168 = arith.constant 256 : index
    %487 = vector.load %arg8[%c320_167, %c256_168] : memref<384x512xbf16, #tpu.memory_space<vmem>>, vector<32x256xbf16>
    %c0_169 = arith.constant 0 : index
    %c256_170 = arith.constant 256 : index
    %488 = vector.load %arg3[%c0_169, %c256_170] : memref<128x512xbf16, #tpu.memory_space<vmem>>, vector<128x256xbf16>
    %cst_171 = arith.constant dense<0.000000e+00> : vector<32x256xf32>
    %489 = tpu.matmul %462, %488, %cst_171 {dimension_numbers = #tpu.dot_dimension_numbers<[1], [0], [0], [1], [0, 0, 1, 1], [], []>} : vector<32x128xbf16>, vector<128x256xbf16>, vector<32x256xf32> -> vector<32x256xf32>
    %490 = arith.extf %487 : vector<32x256xbf16> to vector<32x256xf32>
    %491 = arith.addf %490, %489 : vector<32x256xf32>
    %492 = arith.truncf %491 : vector<32x256xf32> to vector<32x256xbf16>
    %493 = vector.extract_strided_slice %492 {offsets = [0, 0], sizes = [32, 128], strides = [1, 1]} : vector<32x256xbf16> to vector<32x128xbf16>
    %494 = math.tanh %493 : vector<32x128xbf16>
    %495 = vector.extract_strided_slice %492 {offsets = [0, 128], sizes = [32, 128], strides = [1, 1]} : vector<32x256xbf16> to vector<32x128xbf16>
    %496 = arith.negf %495 : vector<32x128xbf16>
    %497 = math.exp %496 : vector<32x128xbf16>
    %cst_172 = arith.constant 1.000000e+00 : bf16
    %498 = vector.broadcast %cst_172 : bf16 to vector<32x128xbf16>
    %499 = arith.addf %498, %497 : vector<32x128xbf16>
    %500 = arith.divf %498, %499 : vector<32x128xbf16>
    %501 = arith.extf %486 : vector<32x128xbf16> to vector<32x128xf32>
    %502 = arith.mulf %501, %459 : vector<32x128xf32>
    %503 = arith.mulf %480, %494 : vector<32x128xbf16>
    %504 = arith.extf %503 : vector<32x128xbf16> to vector<32x128xf32>
    %505 = arith.addf %502, %504 : vector<32x128xf32>
    %506 = arith.truncf %505 : vector<32x128xf32> to vector<32x128xbf16>
    %507 = math.tanh %506 : vector<32x128xbf16>
    %508 = arith.mulf %500, %507 : vector<32x128xbf16>
    %c0_173 = arith.constant 0 : index
    %c0_174 = arith.constant 0 : index
    %509 = vector.load %arg4[%c0_173, %c0_174] : memref<1x128xbf16, #tpu.memory_space<vmem>>, vector<1x128xbf16>
    %cst_175 = arith.constant dense<0.000000e+00> : vector<1x32xf32>
    %510 = tpu.matmul %509, %508, %cst_175 {dimension_numbers = #tpu.dot_dimension_numbers<[1], [1], [0], [0], [0, 0, 1, 0], [], []>} : vector<1x128xbf16>, vector<32x128xbf16>, vector<1x32xf32> -> vector<1x32xf32>
    %c10 = arith.constant 10 : index
    %511 = memref.load %arg5[%c10] : memref<12xf32, #tpu.memory_space<smem>>
    %512 = vector.broadcast %511 : f32 to vector<1x32xf32>
    %513 = arith.mulf %512, %510 : vector<1x32xf32>
    %514 = arith.addf %468, %513 : vector<1x32xf32>
    %c352 = arith.constant 352 : index
    %c0_176 = arith.constant 0 : index
    %515 = vector.load %arg8[%c352, %c0_176] : memref<384x512xbf16, #tpu.memory_space<vmem>>, vector<32x256xbf16>
    %c0_177 = arith.constant 0 : index
    %c0_178 = arith.constant 0 : index
    %516 = vector.load %arg3[%c0_177, %c0_178] : memref<128x512xbf16, #tpu.memory_space<vmem>>, vector<128x256xbf16>
    %cst_179 = arith.constant dense<0.000000e+00> : vector<32x256xf32>
    %517 = tpu.matmul %508, %516, %cst_179 {dimension_numbers = #tpu.dot_dimension_numbers<[1], [0], [0], [1], [0, 0, 1, 1], [], []>} : vector<32x128xbf16>, vector<128x256xbf16>, vector<32x256xf32> -> vector<32x256xf32>
    %518 = arith.extf %515 : vector<32x256xbf16> to vector<32x256xf32>
    %519 = arith.addf %518, %517 : vector<32x256xf32>
    %520 = arith.truncf %519 : vector<32x256xf32> to vector<32x256xbf16>
    %521 = vector.extract_strided_slice %520 {offsets = [0, 0], sizes = [32, 128], strides = [1, 1]} : vector<32x256xbf16> to vector<32x128xbf16>
    %522 = arith.negf %521 : vector<32x128xbf16>
    %523 = math.exp %522 : vector<32x128xbf16>
    %cst_180 = arith.constant 1.000000e+00 : bf16
    %524 = vector.broadcast %cst_180 : bf16 to vector<32x128xbf16>
    %525 = arith.addf %524, %523 : vector<32x128xbf16>
    %526 = arith.divf %524, %525 : vector<32x128xbf16>
    %527 = vector.extract_strided_slice %520 {offsets = [0, 128], sizes = [32, 128], strides = [1, 1]} : vector<32x256xbf16> to vector<32x128xbf16>
    %528 = arith.negf %527 : vector<32x128xbf16>
    %529 = math.exp %528 : vector<32x128xbf16>
    %cst_181 = arith.constant 1.000000e+00 : bf16
    %530 = vector.broadcast %cst_181 : bf16 to vector<32x128xbf16>
    %531 = arith.addf %530, %529 : vector<32x128xbf16>
    %532 = arith.divf %530, %531 : vector<32x128xbf16>
    %c352_182 = arith.constant 352 : index
    %c256_183 = arith.constant 256 : index
    %533 = vector.load %arg8[%c352_182, %c256_183] : memref<384x512xbf16, #tpu.memory_space<vmem>>, vector<32x256xbf16>
    %c0_184 = arith.constant 0 : index
    %c256_185 = arith.constant 256 : index
    %534 = vector.load %arg3[%c0_184, %c256_185] : memref<128x512xbf16, #tpu.memory_space<vmem>>, vector<128x256xbf16>
    %cst_186 = arith.constant dense<0.000000e+00> : vector<32x256xf32>
    %535 = tpu.matmul %508, %534, %cst_186 {dimension_numbers = #tpu.dot_dimension_numbers<[1], [0], [0], [1], [0, 0, 1, 1], [], []>} : vector<32x128xbf16>, vector<128x256xbf16>, vector<32x256xf32> -> vector<32x256xf32>
    %536 = arith.extf %533 : vector<32x256xbf16> to vector<32x256xf32>
    %537 = arith.addf %536, %535 : vector<32x256xf32>
    %538 = arith.truncf %537 : vector<32x256xf32> to vector<32x256xbf16>
    %539 = vector.extract_strided_slice %538 {offsets = [0, 0], sizes = [32, 128], strides = [1, 1]} : vector<32x256xbf16> to vector<32x128xbf16>
    %540 = math.tanh %539 : vector<32x128xbf16>
    %541 = vector.extract_strided_slice %538 {offsets = [0, 128], sizes = [32, 128], strides = [1, 1]} : vector<32x256xbf16> to vector<32x128xbf16>
    %542 = arith.negf %541 : vector<32x128xbf16>
    %543 = math.exp %542 : vector<32x128xbf16>
    %cst_187 = arith.constant 1.000000e+00 : bf16
    %544 = vector.broadcast %cst_187 : bf16 to vector<32x128xbf16>
    %545 = arith.addf %544, %543 : vector<32x128xbf16>
    %546 = arith.divf %544, %545 : vector<32x128xbf16>
    %547 = arith.extf %532 : vector<32x128xbf16> to vector<32x128xf32>
    %548 = arith.mulf %547, %505 : vector<32x128xf32>
    %549 = arith.mulf %526, %540 : vector<32x128xbf16>
    %550 = arith.extf %549 : vector<32x128xbf16> to vector<32x128xf32>
    %551 = arith.addf %548, %550 : vector<32x128xf32>
    %552 = arith.truncf %551 : vector<32x128xf32> to vector<32x128xbf16>
    %553 = math.tanh %552 : vector<32x128xbf16>
    %554 = arith.mulf %546, %553 : vector<32x128xbf16>
    %c0_188 = arith.constant 0 : index
    %c0_189 = arith.constant 0 : index
    %555 = vector.load %arg4[%c0_188, %c0_189] : memref<1x128xbf16, #tpu.memory_space<vmem>>, vector<1x128xbf16>
    %cst_190 = arith.constant dense<0.000000e+00> : vector<1x32xf32>
    %556 = tpu.matmul %555, %554, %cst_190 {dimension_numbers = #tpu.dot_dimension_numbers<[1], [1], [0], [0], [0, 0, 1, 0], [], []>} : vector<1x128xbf16>, vector<32x128xbf16>, vector<1x32xf32> -> vector<1x32xf32>
    %c11 = arith.constant 11 : index
    %557 = memref.load %arg5[%c11] : memref<12xf32, #tpu.memory_space<smem>>
    %558 = vector.broadcast %557 : f32 to vector<1x32xf32>
    %559 = arith.mulf %558, %556 : vector<1x32xf32>
    %560 = arith.addf %514, %559 : vector<1x32xf32>
    %c0_191 = arith.constant 0 : index
    %561 = memref.load %arg6[%c0_191] : memref<1xf32, #tpu.memory_space<smem>>
    %562 = vector.broadcast %561 : f32 to vector<1x32xf32>
    %563 = arith.addf %560, %562 : vector<1x32xf32>
    %c0_192 = arith.constant 0 : index
    %c0_193 = arith.constant 0 : index
    %564 = vector.load %arg7[%c0_192, %c0_193] : memref<1x32xf32, #tpu.memory_space<vmem>>, vector<1x32xf32>
    tpu.vector_store %arg7[%c0_192, %c0_193], %563 {strides = array<i32>} : memref<1x32xf32, #tpu.memory_space<vmem>>, vector<1x32xf32>,
    return
  }
  func.func @transform_0(%arg0: i32) -> (i32, i32, i32) {
    %c0_i32 = arith.constant 0 : i32
    %c0_i32_0 = arith.constant 0 : i32
    %c0_i32_1 = arith.constant 0 : i32
    return %c0_i32, %arg0, %c0_i32_0 : i32, i32, i32
  }
  func.func @transform_1(%arg0: i32) -> (i32, i32) {
    %c0_i32 = arith.constant 0 : i32
    %c0_i32_0 = arith.constant 0 : i32
    %c0_i32_1 = arith.constant 0 : i32
    return %c0_i32, %c0_i32_0 : i32, i32
  }
  func.func @transform_2(%arg0: i32) -> (i32, i32) {
    %c0_i32 = arith.constant 0 : i32
    %c0_i32_0 = arith.constant 0 : i32
    %c0_i32_1 = arith.constant 0 : i32
    return %c0_i32, %c0_i32_0 : i32, i32
  }
  func.func @transform_3(%arg0: i32) -> (i32, i32) {
    %c0_i32 = arith.constant 0 : i32
    %c0_i32_0 = arith.constant 0 : i32
    %c0_i32_1 = arith.constant 0 : i32
    return %c0_i32, %c0_i32_0 : i32, i32
  }
  func.func @transform_4(%arg0: i32) -> i32 {
    %c0_i32 = arith.constant 0 : i32
    %c0_i32_0 = arith.constant 0 : i32
    return %c0_i32 : i32
  }
  func.func @transform_5(%arg0: i32) -> i32 {
    %c0_i32 = arith.constant 0 : i32
    %c0_i32_0 = arith.constant 0 : i32
    return %c0_i32 : i32
  }
  func.func @transform_6(%arg0: i32) -> (i32, i32) {
    %c0_i32 = arith.constant 0 : i32
    %c0_i32_0 = arith.constant 0 : i32
    return %c0_i32, %arg0 : i32, i32
  }
}

</mosaic_0001>

<llo_original>
// kernel: squeeze.1
$region0: #{squeeze.1}
  %s0 = inlined_call_operand.vmem [shape: f32[32], index: 0, kind: input, shape index: {}]
  %s1 = inlined_call_operand.vmem [shape: f32[2,16], index: 1, kind: output, shape index: {}]
  $region1: #{squeeze.1} parent=0
    #allocation0 [shape = 'u8[4096]{0}', space=vmem, size = 0x1000, scoped, tag = 'scoped mem for output reshape']
    #allocation1 [shape = 'u8[4096]{0}', space=vmem, size = 0x1000, scoped, tag = 'scoped mem for input reshape']
    %s3 = sshllo.u32 0, 1
    %v4 = vld [vmem:[%s0] sm:%s3]
    %5 = vst [vmem:[#allocation1] sm:%s3] %v4
    %v6 = vld [vmem:[#allocation1] sm:$0x1]
    %vm7 = vcmask 130048
    %8 = vst.msk [vmem:[#allocation0] sm:$0x1] %vm7, %v6
    %v9 = vld [vmem:[#allocation1] sm:$0x1]
    %10 = vrot.lane.b32.xlu0 %v9, 112
    %v11 = vpop.permute.xlu0 %10
    %vm12 = vcmask 130048
    %s13 = scalar_lea.vmem [#allocation0], 1
    %14 = vst.msk [vmem:[%s13] sm:$0x1] %vm12, %v11
    %s16 = sshllo.u32 0, 2
    %v18 = vld [vmem:[#allocation0] sm:%s16]
    %s19 = sshllo.u32 0, 2
    %20 = vst [vmem:[%s1] sm:%s19] %v18

// kernel: neg.2
$region0: #{neg.2}
  #allocation0 [shape = 's32[1]{0}', space=sflag, size = 0x4, scoped, tag = 'scoped memory for neg.2']
  %s0 = inlined_call_operand.vmem [shape: f32[2,16], index: 0, kind: input, shape index: {}]
  %s1 = inlined_call_operand.vmem [shape: f32[2,16], index: 1, kind: output, shape index: {}]
  %v2 = vld [vmem:[%s0] sm:$0x3]
  %3 = xla_tuple %v2
  %4 = xla_tuple %3
  %v5 = vxor.u32 %v2, 2147483648
  %6 = xla_tuple %v5
  %7 = vst [vmem:[%s1] sm:$0x3] %v5

// kernel: pgnetwork_forward.1
$region0: #{pgnetwork_forward.1}
  #allocation0 [shape = 'u32[]', space=smem, size = 0x4, offset = 0x4, fixed_abs, tag = 'smem constant byte address 0x4 - core index']
  #allocation1 [shape = 'u32[144,128]{1,0:T(1,128)}', space=vmem, size = 0x12000, scoped, tag = 'internal scratch']
  #allocation2 [shape = 'bf16[384,512]{1,0:T(16,128)(2,1)}', space=vmem, size = 0x60000, scoped, tag = 'scratch operand']
  #allocation3 [shape = 'f32[1]{0:T(128)S(6)}', space=smem, size = 0x200, scoped, tag = 'scoped memory for pgnetwork_forward.1']
  %s0 = inlined_call_operand.vmem [shape: bf16[12,32,30], index: 0, kind: input, shape index: {}]
  %s1 = inlined_call_operand.vmem [shape: bf16[30,512], index: 1, kind: input, shape index: {}]
  %s2 = inlined_call_operand.vmem [shape: bf16[128,512], index: 2, kind: input, shape index: {}]
  %s3 = inlined_call_operand.vmem [shape: bf16[1,128], index: 3, kind: input, shape index: {}]
  %s4 = inlined_call_operand.vmem [shape: f32[12], index: 4, kind: input, shape index: {}]
  %s5 = inlined_call_operand.<no memory space> [shape: f32[1], index: 5, kind: input, shape index: {}]
  %s6 = inlined_call_operand.vmem [shape: f32[1,32], index: 6, kind: output, shape index: {}]
  %s7 = sld [smem:[#allocation0]]
  $region38: #{pgnetwork_forward.1} parent=0
    _
  %s9 = ssub.s32 1, %s7
  %s10 = scalar_select 0, %s9, %s7
  %11 = sst [smem:[#allocation3]] %s5
  $region1: #{pgnetwork_forward.1} parent=0
    #allocation4 [shape = 'u8[512]{0}', space=smem, size = 0x200, scoped, tag = 'input window, operand 4, single buffered']
    #allocation5 [shape = 's32[1]{0}', space=sflag, size = 0x4, scoped, tag = 'scoped memory for pgnetwork_forward.1']
    %12 = vsyncpa [#allocation5], 0
    // Predicated region
    $region2: #{pgnetwork_forward.1} parent=1 // pred_check
      _
    $region3: #{pgnetwork_forward.1} parent=1 // pred_check_branch
      %14 = sbr.rel (0) target = $region5
    $region4: #{pgnetwork_forward.1} parent=1 // pred_region
      _
    $region5: #{pgnetwork_forward.1} parent=1 // pred_fallthru
      _
    // Predicated region
    $region6: #{pgnetwork_forward.1} parent=1 // pred_check
      _
    $region7: #{pgnetwork_forward.1} parent=1 // pred_check_branch
      %16 = sbr.rel (0) target = $region9
    $region8: #{pgnetwork_forward.1} parent=1 // pred_region
      _
    $region9: #{pgnetwork_forward.1} parent=1 // pred_fallthru
      _
    // Predicated region
    $region10: #{pgnetwork_forward.1} parent=1 // pred_check
      _
    $region11: #{pgnetwork_forward.1} parent=1 // pred_check_branch
      %18 = sbr.rel (0) target = $region13
    $region12: #{pgnetwork_forward.1} parent=1 // pred_region
      _
    $region13: #{pgnetwork_forward.1} parent=1 // pred_fallthru
      _
    // Predicated region
    $region14: #{pgnetwork_forward.1} parent=1 // pred_check
      _
    $region15: #{pgnetwork_forward.1} parent=1 // pred_check_branch
      %20 = sbr.rel (0) target = $region17
    $region16: #{pgnetwork_forward.1} parent=1 // pred_region
      _
    $region17: #{pgnetwork_forward.1} parent=1 // pred_fallthru
      _
    // Predicated region
    $region18: #{pgnetwork_forward.1} parent=1 // pred_check
      _
    $region19: #{pgnetwork_forward.1} parent=1 // pred_check_branch
      %22 = sbr.rel (0) target = $region21
    $region20: #{pgnetwork_forward.1} parent=1 // pred_region
      %s24 = ssub.s32 16, 16
      %25 = vsyncadd [#allocation5], %s24
      %s27 = sshll.u32 %s4, 4
      %s28 = int_to_ptr.vmem [resolvable:$true] %s27
      %30 = dma.vmem_to_smem %s28, 16, [#allocation4], [#allocation5]
    $region21: #{pgnetwork_forward.1} parent=1 // pred_fallthru
      _
    // Predicated region
    $region22: #{pgnetwork_forward.1} parent=1 // pred_check
      _
    $region23: #{pgnetwork_forward.1} parent=1 // pred_check_branch
      %32 = sbr.rel (0) target = $region25
    $region24: #{pgnetwork_forward.1} parent=1 // pred_region
      _
    $region25: #{pgnetwork_forward.1} parent=1 // pred_fallthru
      _
    // Predicated region
    $region26: #{pgnetwork_forward.1} parent=1 // pred_check
      _
    $region27: #{pgnetwork_forward.1} parent=1 // pred_check_branch
      %34 = sbr.rel (0) target = $region29
    $region28: #{pgnetwork_forward.1} parent=1 // pred_region
      %35 = dma.done [#allocation5], 16
    $region29: #{pgnetwork_forward.1} parent=1 // pred_fallthru
      _
    %36 = sfence
    %v39 = vld [vmem:[%s0] sm:$0xf]
    %v40 = vld [vmem:[%s0 + $0x4] sm:$0xf]
    %v41 = vld [vmem:[%s0 + $0x8] sm:$0xf]
    %v42 = vld [vmem:[%s0 + $0xc] sm:$0xf]
    %v43 = vld [vmem:[%s0 + $0x10] sm:$0xf]
    %v44 = vld [vmem:[%s0 + $0x14] sm:$0xf]
    %v45 = vld [vmem:[%s0 + $0x18] sm:$0xf]
    %v46 = vld [vmem:[%s0 + $0x1c] sm:$0xf]
    %v47 = vld [vmem:[%s0 + $0x20] sm:$0xf]
    %v48 = vld [vmem:[%s0 + $0x24] sm:$0xf]
    %v49 = vld [vmem:[%s0 + $0x28] sm:$0xf]
    %v50 = vld [vmem:[%s0 + $0x2c] sm:$0xf]
    %v51 = vld [vmem:[%s0 + $0x30] sm:$0xf]
    %v52 = vld [vmem:[%s0 + $0x34] sm:$0xf]
    %v53 = vld [vmem:[%s0 + $0x38] sm:$0xf]
    %v54 = vld [vmem:[%s0 + $0x3c] sm:$0xf]
    %v55 = vld [vmem:[%s0 + $0x40] sm:$0xf]
    %v56 = vld [vmem:[%s0 + $0x44] sm:$0xf]
    %v57 = vld [vmem:[%s0 + $0x48] sm:$0xf]
    %v58 = vld [vmem:[%s0 + $0x4c] sm:$0xf]
    %v59 = vld [vmem:[%s0 + $0x50] sm:$0xf]
    %v60 = vld [vmem:[%s0 + $0x54] sm:$0xf]
    %v61 = vld [vmem:[%s0 + $0x58] sm:$0xf]
    %v62 = vld [vmem:[%s0 + $0x5c] sm:$0xf]
    %v63 = vld [vmem:[%s0 + $0x60] sm:$0xf]
    %v64 = vld [vmem:[%s0 + $0x64] sm:$0xf]
    %v65 = vld [vmem:[%s0 + $0x68] sm:$0xf]
    %v66 = vld [vmem:[%s0 + $0x6c] sm:$0xf]
    %v67 = vld [vmem:[%s0 + $0x70] sm:$0xf]
    %v68 = vld [vmem:[%s0 + $0x74] sm:$0xf]
    %v69 = vld [vmem:[%s0 + $0x78] sm:$0xf]
    %v70 = vld [vmem:[%s0 + $0x7c] sm:$0xf]
    %v71 = vld [vmem:[%s0 + $0x80] sm:$0xf]
    %v72 = vld [vmem:[%s0 + $0x84] sm:$0xf]
    %v73 = vld [vmem:[%s0 + $0x88] sm:$0xf]
    %v74 = vld [vmem:[%s0 + $0x8c] sm:$0xf]
    %v75 = vld [vmem:[%s0 + $0x90] sm:$0xf]
    %v76 = vld [vmem:[%s0 + $0x94] sm:$0xf]
    %v77 = vld [vmem:[%s0 + $0x98] sm:$0xf]
    %v78 = vld [vmem:[%s0 + $0x9c] sm:$0xf]
    %v79 = vld [vmem:[%s0 + $0xa0] sm:$0xf]
    %v80 = vld [vmem:[%s0 + $0xa4] sm:$0xf]
    %v81 = vld [vmem:[%s0 + $0xa8] sm:$0xf]
    %v82 = vld [vmem:[%s0 + $0xac] sm:$0xf]
    %v83 = vld [vmem:[%s0 + $0xb0] sm:$0xf]
    %v84 = vld [vmem:[%s0 + $0xb4] sm:$0xf]
    %v85 = vld [vmem:[%s0 + $0xb8] sm:$0xf]
    %v86 = vld [vmem:[%s0 + $0xbc] sm:$0xf]
    %v87 = vld [vmem:[%s1] sm:$0xff]
    %v88 = vld [vmem:[%s1 + $0x8] sm:$0xff]
    %v89 = vld [vmem:[%s1 + $0x10] sm:$0xff]
    %v90 = vld [vmem:[%s1 + $0x18] sm:$0xff]
    %v91 = vld [vmem:[%s1 + $0x20] sm:$0xff]
    %v92 = vld [vmem:[%s1 + $0x28] sm:$0xff]
    %v93 = vld [vmem:[%s1 + $0x30] sm:$0x77]
    %v94 = vld [vmem:[%s1 + $0x38] sm:$0x77]
    %v143 = vunpack.c.l.b16 %v39
    %v144 = vunpack.c.l.b16 %v40
    %v145 = vunpack.c.l.b16 %v41
    %v146 = vunpack.c.l.b16 %v42
    %v147 = vunpack.c.l.b16 %v43
    %v148 = vunpack.c.l.b16 %v44
    %v149 = vunpack.c.l.b16 %v45
    %v150 = vunpack.c.l.b16 %v46
    %v151 = vunpack.c.l.b16 %v47
    %v152 = vunpack.c.l.b16 %v48
    %v153 = vunpack.c.l.b16 %v49
    %v154 = vunpack.c.l.b16 %v50
    %v155 = vunpack.c.l.b16 %v51
    %v156 = vunpack.c.l.b16 %v52
    %v157 = vunpack.c.l.b16 %v53
    %v158 = vunpack.c.l.b16 %v54
    %v159 = vunpack.c.l.b16 %v55
    %v160 = vunpack.c.l.b16 %v56
    %v161 = vunpack.c.l.b16 %v57
    %v162 = vunpack.c.l.b16 %v58
    %v163 = vunpack.c.l.b16 %v59
    %v164 = vunpack.c.l.b16 %v60
    %v165 = vunpack.c.l.b16 %v61
    %v166 = vunpack.c.l.b16 %v62
    %v167 = vunpack.c.l.b16 %v63
    %v168 = vunpack.c.l.b16 %v64
    %v169 = vunpack.c.l.b16 %v65
    %v170 = vunpack.c.l.b16 %v66
    %v171 = vunpack.c.l.b16 %v67
    %v172 = vunpack.c.l.b16 %v68
    %v173 = vunpack.c.l.b16 %v69
    %v174 = vunpack.c.l.b16 %v70
    %v175 = vunpack.c.l.b16 %v71
    %v176 = vunpack.c.l.b16 %v72
    %v177 = vunpack.c.l.b16 %v73
    %v178 = vunpack.c.l.b16 %v74
    %v179 = vunpack.c.l.b16 %v75
    %v180 = vunpack.c.l.b16 %v76
    %v181 = vunpack.c.l.b16 %v77
    %v182 = vunpack.c.l.b16 %v78
    %v183 = vunpack.c.l.b16 %v79
    %v184 = vunpack.c.l.b16 %v80
    %v185 = vunpack.c.l.b16 %v81
    %v186 = vunpack.c.l.b16 %v82
    %v187 = vunpack.c.l.b16 %v83
    %v188 = vunpack.c.l.b16 %v84
    %v189 = vunpack.c.l.b16 %v85
    %v190 = vunpack.c.l.b16 %v86
    %v191 = vpack.c.b16 %v144, %v143
    %v192 = vpack.c.b16 %v146, %v145
    %v193 = vpack.c.b16 %v148, %v147
    %v194 = vpack.c.b16 %v150, %v149
    %v195 = vpack.c.b16 %v152, %v151
    %v196 = vpack.c.b16 %v154, %v153
    %v197 = vpack.c.b16 %v156, %v155
    %v198 = vpack.c.b16 %v158, %v157
    %v199 = vpack.c.b16 %v160, %v159
    %v200 = vpack.c.b16 %v162, %v161
    %v201 = vpack.c.b16 %v164, %v163
    %v202 = vpack.c.b16 %v166, %v165
    %v203 = vpack.c.b16 %v168, %v167
    %v204 = vpack.c.b16 %v170, %v169
    %v205 = vpack.c.b16 %v172, %v171
    %v206 = vpack.c.b16 %v174, %v173
    %v207 = vpack.c.b16 %v176, %v175
    %v208 = vpack.c.b16 %v178, %v177
    %v209 = vpack.c.b16 %v180, %v179
    %v210 = vpack.c.b16 %v182, %v181
    %v211 = vpack.c.b16 %v184, %v183
    %v212 = vpack.c.b16 %v186, %v185
    %v213 = vpack.c.b16 %v188, %v187
    %v214 = vpack.c.b16 %v190, %v189
    %v223 = vunpack.c.l.b16 %v87
    %v224 = vunpack.c.h.b16 %v87
    %v225 = vunpack.c.l.b16 %v88
    %v226 = vunpack.c.h.b16 %v88
    %v227 = vunpack.c.l.b16 %v89
    %v228 = vunpack.c.h.b16 %v89
    %v229 = vunpack.c.l.b16 %v90
    %v230 = vunpack.c.h.b16 %v90
    %v231 = vunpack.c.l.b16 %v91
    %v232 = vunpack.c.h.b16 %v91
    %v233 = vunpack.c.l.b16 %v92
    %v234 = vunpack.c.h.b16 %v92
    %v235 = vunpack.c.l.b16 %v93
    %v236 = vunpack.c.h.b16 %v93
    %v237 = vunpack.c.l.b16 %v94
    %v238 = vunpack.c.h.b16 %v94
    %v239 = vpack.c.b16 %v227, %v223
    %v240 = vpack.c.b16 %v228, %v224
    %v241 = vpack.c.b16 %v229, %v225
    %v242 = vpack.c.b16 %v230, %v226
    %v243 = vpack.c.b16 %v235, %v231
    %v244 = vpack.c.b16 %v236, %v232
    %v245 = vpack.c.b16 %v237, %v233
    %v246 = vpack.c.b16 %v238, %v234
    %vm251 = vcmask 244736
    %v253 = vsel %vm251, %v191, 0
    %v256 = vsel %vm251, %v192, 0
    %v259 = vsel %vm251, %v193, 0
    %v262 = vsel %vm251, %v194, 0
    %v265 = vsel %vm251, %v195, 0
    %v268 = vsel %vm251, %v196, 0
    %v271 = vsel %vm251, %v197, 0
    %v274 = vsel %vm251, %v198, 0
    %v277 = vsel %vm251, %v199, 0
    %v280 = vsel %vm251, %v200, 0
    %v283 = vsel %vm251, %v201, 0
    %v286 = vsel %vm251, %v202, 0
    %v289 = vsel %vm251, %v203, 0
    %v292 = vsel %vm251, %v204, 0
    %v295 = vsel %vm251, %v205, 0
    %v298 = vsel %vm251, %v206, 0
    %v301 = vsel %vm251, %v207, 0
    %v304 = vsel %vm251, %v208, 0
    %v307 = vsel %vm251, %v209, 0
    %v310 = vsel %vm251, %v210, 0
    %v313 = vsel %vm251, %v211, 0
    %v316 = vsel %vm251, %v212, 0
    %v319 = vsel %vm251, %v213, 0
    %v322 = vsel %vm251, %v214, 0
    %vm324 = vcmask 1046528
    %v326 = vsel %vm324, %v243, 0
    %v329 = vsel %vm324, %v244, 0
    %v332 = vsel %vm324, %v245, 0
    %v335 = vsel %vm324, %v246, 0
    %337 = vmatprep.subr.bf16.mxu0 %v240
    %338 = vmatpush1.bf16.msra.mxu0 %v239
    %339 = vmatprep.subr.bf16.mxu0 %v329
    %340 = vmatpush1.bf16.msra.mxu0 %v326
    %341 = vmatprep.subr.bf16.mxu0 0
    %342 = vmatpush1.bf16.msra.mxu0 0
    %343 = vmatprep.subr.bf16.mxu0 0
    %344 = vmatpush1.bf16.msra.mxu0 0
    %345 = vmatprep.subr.bf16.mxu0 0
    %346 = vmatpush1.bf16.msra.mxu0 0
    %347 = vmatprep.subr.bf16.mxu0 0
    %348 = vmatpush1.bf16.msra.mxu0 0
    %349 = vmatprep.subr.bf16.mxu0 0
    %350 = vmatpush1.bf16.msra.mxu0 0
    %351 = vmatprep.subr.bf16.mxu0 0
    %352 = vmatpush1.bf16.msra.mxu0 0
    %353 = vmatprep.subr.bf16.mxu0 0
    %354 = vmatpush1.bf16.msra.mxu0 0
    %355 = vmatprep.subr.bf16.mxu0 0
    %356 = vmatpush1.bf16.msra.mxu0 0
    %357 = vmatprep.subr.bf16.mxu0 0
    %358 = vmatpush1.bf16.msra.mxu0 0
    %359 = vmatprep.subr.bf16.mxu0 0
    %360 = vmatpush1.bf16.msra.mxu0 0
    %361 = vmatprep.subr.bf16.mxu0 0
    %362 = vmatpush1.bf16.msra.mxu0 0
    %363 = vmatprep.subr.bf16.mxu0 0
    %364 = vmatpush1.bf16.msra.mxu0 0
    %365 = vmatprep.subr.bf16.mxu0 0
    %366 = vmatpush1.bf16.msra.mxu0 0
    %367 = vmatprep.subr.bf16.mxu0 0
    %368 = vmatpush1.bf16.msra.mxu0 0
    %369 = vmatprep.mubr.bf16.mxu0 0
    %370 = vmatmul.mubr.bf16.gmra.mrb[0].mxu0 %v253
    %v371 = vpop.f32.mrb[0].mxu0
    %v372 = vadd.f32 0.0, %v371
    %v373 = vpop.f32.mrb[0].mxu0
    %v374 = vadd.f32 0.0, %v373
    %v375 = vpop.f32.mrb[0].mxu0
    %v376 = vadd.f32 0.0, %v375
    %v377 = vpop.f32.mrb[0].mxu0
    %v378 = vadd.f32 0.0, %v377
    %379 = vmatprep.mubr.bf16.mxu0 0
    %380 = vmatmul.mubr.bf16.gmra.mrb[0].mxu0 %v256
    %v381 = vpop.f32.mrb[0].mxu0
    %v382 = vadd.f32 0.0, %v381
    %v383 = vpop.f32.mrb[0].mxu0
    %v384 = vadd.f32 0.0, %v383
    %v385 = vpop.f32.mrb[0].mxu0
    %v386 = vadd.f32 0.0, %v385
    %v387 = vpop.f32.mrb[0].mxu0
    %v388 = vadd.f32 0.0, %v387
    %389 = vmatprep.mubr.bf16.mxu0 0
    %390 = vmatmul.mubr.bf16.gmra.mrb[0].mxu0 %v259
    %v391 = vpop.f32.mrb[0].mxu0
    %v392 = vadd.f32 0.0, %v391
    %v393 = vpop.f32.mrb[0].mxu0
    %v394 = vadd.f32 0.0, %v393
    %v395 = vpop.f32.mrb[0].mxu0
    %v396 = vadd.f32 0.0, %v395
    %v397 = vpop.f32.mrb[0].mxu0
    %v398 = vadd.f32 0.0, %v397
    %399 = vmatprep.mubr.bf16.mxu0 0
    %400 = vmatmul.mubr.bf16.gmra.mrb[0].mxu0 %v262
    %v401 = vpop.f32.mrb[0].mxu0
    %v402 = vadd.f32 0.0, %v401
    %v403 = vpop.f32.mrb[0].mxu0
    %v404 = vadd.f32 0.0, %v403
    %v405 = vpop.f32.mrb[0].mxu0
    %v406 = vadd.f32 0.0, %v405
    %v407 = vpop.f32.mrb[0].mxu0
    %v408 = vadd.f32 0.0, %v407
    %409 = vmatprep.mubr.bf16.mxu0 0
    %410 = vmatmul.mubr.bf16.gmra.mrb[0].mxu0 %v265
    %v411 = vpop.f32.mrb[0].mxu0
    %v412 = vadd.f32 0.0, %v411
    %v413 = vpop.f32.mrb[0].mxu0
    %v414 = vadd.f32 0.0, %v413
    %v415 = vpop.f32.mrb[0].mxu0
    %v416 = vadd.f32 0.0, %v415
    %v417 = vpop.f32.mrb[0].mxu0
    %v418 = vadd.f32 0.0, %v417
    %419 = vmatprep.mubr.bf16.mxu0 0
    %420 = vmatmul.mubr.bf16.gmra.mrb[0].mxu0 %v268
    %v421 = vpop.f32.mrb[0].mxu0
    %v422 = vadd.f32 0.0, %v421
    %v423 = vpop.f32.mrb[0].mxu0
    %v424 = vadd.f32 0.0, %v423
    %v425 = vpop.f32.mrb[0].mxu0
    %v426 = vadd.f32 0.0, %v425
    %v427 = vpop.f32.mrb[0].mxu0
    %v428 = vadd.f32 0.0, %v427
    %429 = vmatprep.mubr.bf16.mxu0 0
    %430 = vmatmul.mubr.bf16.gmra.mrb[0].mxu0 %v271
    %v431 = vpop.f32.mrb[0].mxu0
    %v432 = vadd.f32 0.0, %v431
    %v433 = vpop.f32.mrb[0].mxu0
    %v434 = vadd.f32 0.0, %v433
    %v435 = vpop.f32.mrb[0].mxu0
    %v436 = vadd.f32 0.0, %v435
    %v437 = vpop.f32.mrb[0].mxu0
    %v438 = vadd.f32 0.0, %v437
    %439 = vmatprep.mubr.bf16.mxu0 0
    %440 = vmatmul.mubr.bf16.gmra.mrb[0].mxu0 %v274
    %v441 = vpop.f32.mrb[0].mxu0
    %v442 = vadd.f32 0.0, %v441
    %v443 = vpop.f32.mrb[0].mxu0
    %v444 = vadd.f32 0.0, %v443
    %v445 = vpop.f32.mrb[0].mxu0
    %v446 = vadd.f32 0.0, %v445
    %v447 = vpop.f32.mrb[0].mxu0
    %v448 = vadd.f32 0.0, %v447
    %449 = vmatprep.mubr.bf16.mxu0 0
    %450 = vmatmul.mubr.bf16.gmra.mrb[0].mxu0 %v277
    %v451 = vpop.f32.mrb[0].mxu0
    %v452 = vadd.f32 0.0, %v451
    %v453 = vpop.f32.mrb[0].mxu0
    %v454 = vadd.f32 0.0, %v453
    %v455 = vpop.f32.mrb[0].mxu0
    %v456 = vadd.f32 0.0, %v455
    %v457 = vpop.f32.mrb[0].mxu0
    %v458 = vadd.f32 0.0, %v457
    %459 = vmatprep.mubr.bf16.mxu0 0
    %460 = vmatmul.mubr.bf16.gmra.mrb[0].mxu0 %v280
    %v461 = vpop.f32.mrb[0].mxu0
    %v462 = vadd.f32 0.0, %v461
    %v463 = vpop.f32.mrb[0].mxu0
    %v464 = vadd.f32 0.0, %v463
    %v465 = vpop.f32.mrb[0].mxu0
    %v466 = vadd.f32 0.0, %v465
    %v467 = vpop.f32.mrb[0].mxu0
    %v468 = vadd.f32 0.0, %v467
    %469 = vmatprep.mubr.bf16.mxu0 0
    %470 = vmatmul.mubr.bf16.gmra.mrb[0].mxu0 %v283
    %v471 = vpop.f32.mrb[0].mxu0
    %v472 = vadd.f32 0.0, %v471
    %v473 = vpop.f32.mrb[0].mxu0
    %v474 = vadd.f32 0.0, %v473
    %v475 = vpop.f32.mrb[0].mxu0
    %v476 = vadd.f32 0.0, %v475
    %v477 = vpop.f32.mrb[0].mxu0
    %v478 = vadd.f32 0.0, %v477
    %479 = vmatprep.mubr.bf16.mxu0 0
    %480 = vmatmul.mubr.bf16.gmra.mrb[0].mxu0 %v286
    %v481 = vpop.f32.mrb[0].mxu0
    %v482 = vadd.f32 0.0, %v481
    %v483 = vpop.f32.mrb[0].mxu0
    %v484 = vadd.f32 0.0, %v483
    %v485 = vpop.f32.mrb[0].mxu0
    %v486 = vadd.f32 0.0, %v485
    %v487 = vpop.f32.mrb[0].mxu0
    %v488 = vadd.f32 0.0, %v487
    %489 = vmatprep.mubr.bf16.mxu0 0
    %490 = vmatmul.mubr.bf16.gmra.mrb[0].mxu0 %v289
    %v491 = vpop.f32.mrb[0].mxu0
    %v492 = vadd.f32 0.0, %v491
    %v493 = vpop.f32.mrb[0].mxu0
    %v494 = vadd.f32 0.0, %v493
    %v495 = vpop.f32.mrb[0].mxu0
    %v496 = vadd.f32 0.0, %v495
    %v497 = vpop.f32.mrb[0].mxu0
    %v498 = vadd.f32 0.0, %v497
    %499 = vmatprep.mubr.bf16.mxu0 0
    %500 = vmatmul.mubr.bf16.gmra.mrb[0].mxu0 %v292
    %v501 = vpop.f32.mrb[0].mxu0
    %v502 = vadd.f32 0.0, %v501
    %v503 = vpop.f32.mrb[0].mxu0
    %v504 = vadd.f32 0.0, %v503
    %v505 = vpop.f32.mrb[0].mxu0
    %v506 = vadd.f32 0.0, %v505
    %v507 = vpop.f32.mrb[0].mxu0
    %v508 = vadd.f32 0.0, %v507
    %509 = vmatprep.mubr.bf16.mxu0 0
    %510 = vmatmul.mubr.bf16.gmra.mrb[0].mxu0 %v295
    %v511 = vpop.f32.mrb[0].mxu0
    %v512 = vadd.f32 0.0, %v511
    %v513 = vpop.f32.mrb[0].mxu0
    %v514 = vadd.f32 0.0, %v513
    %v515 = vpop.f32.mrb[0].mxu0
    %v516 = vadd.f32 0.0, %v515
    %v517 = vpop.f32.mrb[0].mxu0
    %v518 = vadd.f32 0.0, %v517
    %519 = vmatprep.mubr.bf16.mxu0 0
    %520 = vmatmul.mubr.bf16.gmra.mrb[0].mxu0 %v298
    %v521 = vpop.f32.mrb[0].mxu0
    %v522 = vadd.f32 0.0, %v521
    %v523 = vpop.f32.mrb[0].mxu0
    %v524 = vadd.f32 0.0, %v523
    %v525 = vpop.f32.mrb[0].mxu0
    %v526 = vadd.f32 0.0, %v525
    %v527 = vpop.f32.mrb[0].mxu0
    %v528 = vadd.f32 0.0, %v527
    %529 = vmatprep.mubr.bf16.mxu0 0
    %530 = vmatmul.mubr.bf16.gmra.mrb[0].mxu0 %v301
    %v531 = vpop.f32.mrb[0].mxu0
    %v532 = vadd.f32 0.0, %v531
    %v533 = vpop.f32.mrb[0].mxu0
    %v534 = vadd.f32 0.0, %v533
    %v535 = vpop.f32.mrb[0].mxu0
    %v536 = vadd.f32 0.0, %v535
    %v537 = vpop.f32.mrb[0].mxu0
    %v538 = vadd.f32 0.0, %v537
    %539 = vmatprep.mubr.bf16.mxu0 0
    %540 = vmatmul.mubr.bf16.gmra.mrb[0].mxu0 %v304
    %v541 = vpop.f32.mrb[0].mxu0
    %v542 = vadd.f32 0.0, %v541
    %v543 = vpop.f32.mrb[0].mxu0
    %v544 = vadd.f32 0.0, %v543
    %v545 = vpop.f32.mrb[0].mxu0
    %v546 = vadd.f32 0.0, %v545
    %v547 = vpop.f32.mrb[0].mxu0
    %v548 = vadd.f32 0.0, %v547
    %549 = vmatprep.mubr.bf16.mxu0 0
    %550 = vmatmul.mubr.bf16.gmra.mrb[0].mxu0 %v307
    %v551 = vpop.f32.mrb[0].mxu0
    %v552 = vadd.f32 0.0, %v551
    %v553 = vpop.f32.mrb[0].mxu0
    %v554 = vadd.f32 0.0, %v553
    %v555 = vpop.f32.mrb[0].mxu0
    %v556 = vadd.f32 0.0, %v555
    %v557 = vpop.f32.mrb[0].mxu0
    %v558 = vadd.f32 0.0, %v557
    %559 = vmatprep.mubr.bf16.mxu0 0
    %560 = vmatmul.mubr.bf16.gmra.mrb[0].mxu0 %v310
    %v561 = vpop.f32.mrb[0].mxu0
    %v562 = vadd.f32 0.0, %v561
    %v563 = vpop.f32.mrb[0].mxu0
    %v564 = vadd.f32 0.0, %v563
    %v565 = vpop.f32.mrb[0].mxu0
    %v566 = vadd.f32 0.0, %v565
    %v567 = vpop.f32.mrb[0].mxu0
    %v568 = vadd.f32 0.0, %v567
    %569 = vmatprep.mubr.bf16.mxu0 0
    %570 = vmatmul.mubr.bf16.gmra.mrb[0].mxu0 %v313
    %v571 = vpop.f32.mrb[0].mxu0
    %v572 = vadd.f32 0.0, %v571
    %v573 = vpop.f32.mrb[0].mxu0
    %v574 = vadd.f32 0.0, %v573
    %v575 = vpop.f32.mrb[0].mxu0
    %v576 = vadd.f32 0.0, %v575
    %v577 = vpop.f32.mrb[0].mxu0
    %v578 = vadd.f32 0.0, %v577
    %579 = vmatprep.mubr.bf16.mxu0 0
    %580 = vmatmul.mubr.bf16.gmra.mrb[0].mxu0 %v316
    %v581 = vpop.f32.mrb[0].mxu0
    %v582 = vadd.f32 0.0, %v581
    %v583 = vpop.f32.mrb[0].mxu0
    %v584 = vadd.f32 0.0, %v583
    %v585 = vpop.f32.mrb[0].mxu0
    %v586 = vadd.f32 0.0, %v585
    %v587 = vpop.f32.mrb[0].mxu0
    %v588 = vadd.f32 0.0, %v587
    %589 = vmatprep.mubr.bf16.mxu0 0
    %590 = vmatmul.mubr.bf16.gmra.mrb[0].mxu0 %v319
    %v591 = vpop.f32.mrb[0].mxu0
    %v592 = vadd.f32 0.0, %v591
    %v593 = vpop.f32.mrb[0].mxu0
    %v594 = vadd.f32 0.0, %v593
    %v595 = vpop.f32.mrb[0].mxu0
    %v596 = vadd.f32 0.0, %v595
    %v597 = vpop.f32.mrb[0].mxu0
    %v598 = vadd.f32 0.0, %v597
    %599 = vmatprep.mubr.bf16.mxu0 0
    %600 = vmatmul.mubr.bf16.gmra.mrb[0].mxu0 %v322
    %v601 = vpop.f32.mrb[0].mxu0
    %v602 = vadd.f32 0.0, %v601
    %v603 = vpop.f32.mrb[0].mxu0
    %v604 = vadd.f32 0.0, %v603
    %v605 = vpop.f32.mrb[0].mxu0
    %v606 = vadd.f32 0.0, %v605
    %v607 = vpop.f32.mrb[0].mxu0
    %v608 = vadd.f32 0.0, %v607
    %609 = vdwg.mxu0
    %610 = vmatprep.subr.bf16.mxu0 %v242
    %611 = vmatpush1.bf16.msra.mxu0 %v241
    %612 = vmatprep.subr.bf16.mxu0 %v335
    %613 = vmatpush1.bf16.msra.mxu0 %v332
    %614 = vmatprep.subr.bf16.mxu0 0
    %615 = vmatpush1.bf16.msra.mxu0 0
    %616 = vmatprep.subr.bf16.mxu0 0
    %617 = vmatpush1.bf16.msra.mxu0 0
    %618 = vmatprep.subr.bf16.mxu0 0
    %619 = vmatpush1.bf16.msra.mxu0 0
    %620 = vmatprep.subr.bf16.mxu0 0
    %621 = vmatpush1.bf16.msra.mxu0 0
    %622 = vmatprep.subr.bf16.mxu0 0
    %623 = vmatpush1.bf16.msra.mxu0 0
    %624 = vmatprep.subr.bf16.mxu0 0
    %625 = vmatpush1.bf16.msra.mxu0 0
    %626 = vmatprep.subr.bf16.mxu0 0
    %627 = vmatpush1.bf16.msra.mxu0 0
    %628 = vmatprep.subr.bf16.mxu0 0
    %629 = vmatpush1.bf16.msra.mxu0 0
    %630 = vmatprep.subr.bf16.mxu0 0
    %631 = vmatpush1.bf16.msra.mxu0 0
    %632 = vmatprep.subr.bf16.mxu0 0
    %633 = vmatpush1.bf16.msra.mxu0 0
    %634 = vmatprep.subr.bf16.mxu0 0
    %635 = vmatpush1.bf16.msra.mxu0 0
    %636 = vmatprep.subr.bf16.mxu0 0
    %637 = vmatpush1.bf16.msra.mxu0 0
    %638 = vmatprep.subr.bf16.mxu0 0
    %639 = vmatpush1.bf16.msra.mxu0 0
    %640 = vmatprep.subr.bf16.mxu0 0
    %641 = vmatpush1.bf16.msra.mxu0 0
    %642 = vmatprep.mubr.bf16.mxu0 0
    %643 = vmatmul.mubr.bf16.gmra.mrb[0].mxu0 %v253
    %v644 = vpop.f32.mrb[0].mxu0
    %v645 = vadd.f32 0.0, %v644
    %v646 = vpop.f32.mrb[0].mxu0
    %v647 = vadd.f32 0.0, %v646
    %v648 = vpop.f32.mrb[0].mxu0
    %v649 = vadd.f32 0.0, %v648
    %v650 = vpop.f32.mrb[0].mxu0
    %v651 = vadd.f32 0.0, %v650
    %652 = vmatprep.mubr.bf16.mxu0 0
    %653 = vmatmul.mubr.bf16.gmra.mrb[0].mxu0 %v256
    %v654 = vpop.f32.mrb[0].mxu0
    %v655 = vadd.f32 0.0, %v654
    %v656 = vpop.f32.mrb[0].mxu0
    %v657 = vadd.f32 0.0, %v656
    %v658 = vpop.f32.mrb[0].mxu0
    %v659 = vadd.f32 0.0, %v658
    %v660 = vpop.f32.mrb[0].mxu0
    %v661 = vadd.f32 0.0, %v660
    %662 = vmatprep.mubr.bf16.mxu0 0
    %663 = vmatmul.mubr.bf16.gmra.mrb[0].mxu0 %v259
    %v664 = vpop.f32.mrb[0].mxu0
    %v665 = vadd.f32 0.0, %v664
    %v666 = vpop.f32.mrb[0].mxu0
    %v667 = vadd.f32 0.0, %v666
    %v668 = vpop.f32.mrb[0].mxu0
    %v669 = vadd.f32 0.0, %v668
    %v670 = vpop.f32.mrb[0].mxu0
    %v671 = vadd.f32 0.0, %v670
    %672 = vmatprep.mubr.bf16.mxu0 0
    %673 = vmatmul.mubr.bf16.gmra.mrb[0].mxu0 %v262
    %v674 = vpop.f32.mrb[0].mxu0
    %v675 = vadd.f32 0.0, %v674
    %v676 = vpop.f32.mrb[0].mxu0
    %v677 = vadd.f32 0.0, %v676
    %v678 = vpop.f32.mrb[0].mxu0
    %v679 = vadd.f32 0.0, %v678
    %v680 = vpop.f32.mrb[0].mxu0
    %v681 = vadd.f32 0.0, %v680
    %682 = vmatprep.mubr.bf16.mxu0 0
    %683 = vmatmul.mubr.bf16.gmra.mrb[0].mxu0 %v265
    %v684 = vpop.f32.mrb[0].mxu0
    %v685 = vadd.f32 0.0, %v684
    %v686 = vpop.f32.mrb[0].mxu0
    %v687 = vadd.f32 0.0, %v686
    %v688 = vpop.f32.mrb[0].mxu0
    %v689 = vadd.f32 0.0, %v688
    %v690 = vpop.f32.mrb[0].mxu0
    %v691 = vadd.f32 0.0, %v690
    %692 = vmatprep.mubr.bf16.mxu0 0
    %693 = vmatmul.mubr.bf16.gmra.mrb[0].mxu0 %v268
    %v694 = vpop.f32.mrb[0].mxu0
    %v695 = vadd.f32 0.0, %v694
    %v696 = vpop.f32.mrb[0].mxu0
    %v697 = vadd.f32 0.0, %v696
    %v698 = vpop.f32.mrb[0].mxu0
    %v699 = vadd.f32 0.0, %v698
    %v700 = vpop.f32.mrb[0].mxu0
    %v701 = vadd.f32 0.0, %v700
    %702 = vmatprep.mubr.bf16.mxu0 0
    %703 = vmatmul.mubr.bf16.gmra.mrb[0].mxu0 %v271
    %v704 = vpop.f32.mrb[0].mxu0
    %v705 = vadd.f32 0.0, %v704
    %v706 = vpop.f32.mrb[0].mxu0
    %v707 = vadd.f32 0.0, %v706
    %v708 = vpop.f32.mrb[0].mxu0
    %v709 = vadd.f32 0.0, %v708
    %v710 = vpop.f32.mrb[0].mxu0
    %v711 = vadd.f32 0.0, %v710
    %712 = vmatprep.mubr.bf16.mxu0 0
    %713 = vmatmul.mubr.bf16.gmra.mrb[0].mxu0 %v274
    %v714 = vpop.f32.mrb[0].mxu0
    %v715 = vadd.f32 0.0, %v714
    %v716 = vpop.f32.mrb[0].mxu0
    %v717 = vadd.f32 0.0, %v716
    %v718 = vpop.f32.mrb[0].mxu0
    %v719 = vadd.f32 0.0, %v718
    %v720 = vpop.f32.mrb[0].mxu0
    %v721 = vadd.f32 0.0, %v720
    %722 = vmatprep.mubr.bf16.mxu0 0
    %723 = vmatmul.mubr.bf16.gmra.mrb[0].mxu0 %v277
    %v724 = vpop.f32.mrb[0].mxu0
    %v725 = vadd.f32 0.0, %v724
    %v726 = vpop.f32.mrb[0].mxu0
    %v727 = vadd.f32 0.0, %v726
    %v728 = vpop.f32.mrb[0].mxu0
    %v729 = vadd.f32 0.0, %v728
    %v730 = vpop.f32.mrb[0].mxu0
    %v731 = vadd.f32 0.0, %v730
    %732 = vmatprep.mubr.bf16.mxu0 0
    %733 = vmatmul.mubr.bf16.gmra.mrb[0].mxu0 %v280
    %v734 = vpop.f32.mrb[0].mxu0
    %v735 = vadd.f32 0.0, %v734
    %v736 = vpop.f32.mrb[0].mxu0
    %v737 = vadd.f32 0.0, %v736
    %v738 = vpop.f32.mrb[0].mxu0
    %v739 = vadd.f32 0.0, %v738
    %v740 = vpop.f32.mrb[0].mxu0
    %v741 = vadd.f32 0.0, %v740
    %742 = vmatprep.mubr.bf16.mxu0 0
    %743 = vmatmul.mubr.bf16.gmra.mrb[0].mxu0 %v283
    %v744 = vpop.f32.mrb[0].mxu0
    %v745 = vadd.f32 0.0, %v744
    %v746 = vpop.f32.mrb[0].mxu0
    %v747 = vadd.f32 0.0, %v746
    %v748 = vpop.f32.mrb[0].mxu0
    %v749 = vadd.f32 0.0, %v748
    %v750 = vpop.f32.mrb[0].mxu0
    %v751 = vadd.f32 0.0, %v750
    %752 = vmatprep.mubr.bf16.mxu0 0
    %753 = vmatmul.mubr.bf16.gmra.mrb[0].mxu0 %v286
    %v754 = vpop.f32.mrb[0].mxu0
    %v755 = vadd.f32 0.0, %v754
    %v756 = vpop.f32.mrb[0].mxu0
    %v757 = vadd.f32 0.0, %v756
    %v758 = vpop.f32.mrb[0].mxu0
    %v759 = vadd.f32 0.0, %v758
    %v760 = vpop.f32.mrb[0].mxu0
    %v761 = vadd.f32 0.0, %v760
    %762 = vmatprep.mubr.bf16.mxu0 0
    %763 = vmatmul.mubr.bf16.gmra.mrb[0].mxu0 %v289
    %v764 = vpop.f32.mrb[0].mxu0
    %v765 = vadd.f32 0.0, %v764
    %v766 = vpop.f32.mrb[0].mxu0
    %v767 = vadd.f32 0.0, %v766
    %v768 = vpop.f32.mrb[0].mxu0
    %v769 = vadd.f32 0.0, %v768
    %v770 = vpop.f32.mrb[0].mxu0
    %v771 = vadd.f32 0.0, %v770
    %772 = vmatprep.mubr.bf16.mxu0 0
    %773 = vmatmul.mubr.bf16.gmra.mrb[0].mxu0 %v292
    %v774 = vpop.f32.mrb[0].mxu0
    %v775 = vadd.f32 0.0, %v774
    %v776 = vpop.f32.mrb[0].mxu0
    %v777 = vadd.f32 0.0, %v776
    %v778 = vpop.f32.mrb[0].mxu0
    %v779 = vadd.f32 0.0, %v778
    %v780 = vpop.f32.mrb[0].mxu0
    %v781 = vadd.f32 0.0, %v780
    %782 = vmatprep.mubr.bf16.mxu0 0
    %783 = vmatmul.mubr.bf16.gmra.mrb[0].mxu0 %v295
    %v784 = vpop.f32.mrb[0].mxu0
    %v785 = vadd.f32 0.0, %v784
    %v786 = vpop.f32.mrb[0].mxu0
    %v787 = vadd.f32 0.0, %v786
    %v788 = vpop.f32.mrb[0].mxu0
    %v789 = vadd.f32 0.0, %v788
    %v790 = vpop.f32.mrb[0].mxu0
    %v791 = vadd.f32 0.0, %v790
    %792 = vmatprep.mubr.bf16.mxu0 0
    %793 = vmatmul.mubr.bf16.gmra.mrb[0].mxu0 %v298
    %v794 = vpop.f32.mrb[0].mxu0
    %v795 = vadd.f32 0.0, %v794
    %v796 = vpop.f32.mrb[0].mxu0
    %v797 = vadd.f32 0.0, %v796
    %v798 = vpop.f32.mrb[0].mxu0
    %v799 = vadd.f32 0.0, %v798
    %v800 = vpop.f32.mrb[0].mxu0
    %v801 = vadd.f32 0.0, %v800
    %802 = vmatprep.mubr.bf16.mxu0 0
    %803 = vmatmul.mubr.bf16.gmra.mrb[0].mxu0 %v301
    %v804 = vpop.f32.mrb[0].mxu0
    %v805 = vadd.f32 0.0, %v804
    %v806 = vpop.f32.mrb[0].mxu0
    %v807 = vadd.f32 0.0, %v806
    %v808 = vpop.f32.mrb[0].mxu0
    %v809 = vadd.f32 0.0, %v808
    %v810 = vpop.f32.mrb[0].mxu0
    %v811 = vadd.f32 0.0, %v810
    %812 = vmatprep.mubr.bf16.mxu0 0
    %813 = vmatmul.mubr.bf16.gmra.mrb[0].mxu0 %v304
    %v814 = vpop.f32.mrb[0].mxu0
    %v815 = vadd.f32 0.0, %v814
    %v816 = vpop.f32.mrb[0].mxu0
    %v817 = vadd.f32 0.0, %v816
    %v818 = vpop.f32.mrb[0].mxu0
    %v819 = vadd.f32 0.0, %v818
    %v820 = vpop.f32.mrb[0].mxu0
    %v821 = vadd.f32 0.0, %v820
    %822 = vmatprep.mubr.bf16.mxu0 0
    %823 = vmatmul.mubr.bf16.gmra.mrb[0].mxu0 %v307
    %v824 = vpop.f32.mrb[0].mxu0
    %v825 = vadd.f32 0.0, %v824
    %v826 = vpop.f32.mrb[0].mxu0
    %v827 = vadd.f32 0.0, %v826
    %v828 = vpop.f32.mrb[0].mxu0
    %v829 = vadd.f32 0.0, %v828
    %v830 = vpop.f32.mrb[0].mxu0
    %v831 = vadd.f32 0.0, %v830
    %832 = vmatprep.mubr.bf16.mxu0 0
    %833 = vmatmul.mubr.bf16.gmra.mrb[0].mxu0 %v310
    %v834 = vpop.f32.mrb[0].mxu0
    %v835 = vadd.f32 0.0, %v834
    %v836 = vpop.f32.mrb[0].mxu0
    %v837 = vadd.f32 0.0, %v836
    %v838 = vpop.f32.mrb[0].mxu0
    %v839 = vadd.f32 0.0, %v838
    %v840 = vpop.f32.mrb[0].mxu0
    %v841 = vadd.f32 0.0, %v840
    %842 = vmatprep.mubr.bf16.mxu0 0
    %843 = vmatmul.mubr.bf16.gmra.mrb[0].mxu0 %v313
    %v844 = vpop.f32.mrb[0].mxu0
    %v845 = vadd.f32 0.0, %v844
    %v846 = vpop.f32.mrb[0].mxu0
    %v847 = vadd.f32 0.0, %v846
    %v848 = vpop.f32.mrb[0].mxu0
    %v849 = vadd.f32 0.0, %v848
    %v850 = vpop.f32.mrb[0].mxu0
    %v851 = vadd.f32 0.0, %v850
    %852 = vmatprep.mubr.bf16.mxu0 0
    %853 = vmatmul.mubr.bf16.gmra.mrb[0].mxu0 %v316
    %v854 = vpop.f32.mrb[0].mxu0
    %v855 = vadd.f32 0.0, %v854
    %v856 = vpop.f32.mrb[0].mxu0
    %v857 = vadd.f32 0.0, %v856
    %v858 = vpop.f32.mrb[0].mxu0
    %v859 = vadd.f32 0.0, %v858
    %v860 = vpop.f32.mrb[0].mxu0
    %v861 = vadd.f32 0.0, %v860
    %862 = vmatprep.mubr.bf16.mxu0 0
    %863 = vmatmul.mubr.bf16.gmra.mrb[0].mxu0 %v319
    %v864 = vpop.f32.mrb[0].mxu0
    %v865 = vadd.f32 0.0, %v864
    %v866 = vpop.f32.mrb[0].mxu0
    %v867 = vadd.f32 0.0, %v866
    %v868 = vpop.f32.mrb[0].mxu0
    %v869 = vadd.f32 0.0, %v868
    %v870 = vpop.f32.mrb[0].mxu0
    %v871 = vadd.f32 0.0, %v870
    %872 = vmatprep.mubr.bf16.mxu0 0
    %873 = vmatmul.mubr.bf16.gmra.mrb[0].mxu0 %v322
    %v874 = vpop.f32.mrb[0].mxu0
    %v875 = vadd.f32 0.0, %v874
    %v876 = vpop.f32.mrb[0].mxu0
    %v877 = vadd.f32 0.0, %v876
    %v878 = vpop.f32.mrb[0].mxu0
    %v879 = vadd.f32 0.0, %v878
    %v880 = vpop.f32.mrb[0].mxu0
    %v881 = vadd.f32 0.0, %v880
    %882 = vdwg.mxu0
    %v883 = vpack.c.bf16 %v376, %v372
    %v884 = vpack.c.bf16 %v378, %v374
    %v885 = vpack.c.bf16 %v649, %v645
    %v886 = vpack.c.bf16 %v651, %v647
    %v887 = vpack.c.bf16 %v386, %v382
    %v888 = vpack.c.bf16 %v388, %v384
    %v889 = vpack.c.bf16 %v659, %v655
    %v890 = vpack.c.bf16 %v661, %v657
    %v891 = vpack.c.bf16 %v396, %v392
    %v892 = vpack.c.bf16 %v398, %v394
    %v893 = vpack.c.bf16 %v669, %v665
    %v894 = vpack.c.bf16 %v671, %v667
    %v895 = vpack.c.bf16 %v406, %v402
    %v896 = vpack.c.bf16 %v408, %v404
    %v897 = vpack.c.bf16 %v679, %v675
    %v898 = vpack.c.bf16 %v681, %v677
    %v899 = vpack.c.bf16 %v416, %v412
    %v900 = vpack.c.bf16 %v418, %v414
    %v901 = vpack.c.bf16 %v689, %v685
    %v902 = vpack.c.bf16 %v691, %v687
    %v903 = vpack.c.bf16 %v426, %v422
    %v904 = vpack.c.bf16 %v428, %v424
    %v905 = vpack.c.bf16 %v699, %v695
    %v906 = vpack.c.bf16 %v701, %v697
    %v907 = vpack.c.bf16 %v436, %v432
    %v908 = vpack.c.bf16 %v438, %v434
    %v909 = vpack.c.bf16 %v709, %v705
    %v910 = vpack.c.bf16 %v711, %v707
    %v911 = vpack.c.bf16 %v446, %v442
    %v912 = vpack.c.bf16 %v448, %v444
    %v913 = vpack.c.bf16 %v719, %v715
    %v914 = vpack.c.bf16 %v721, %v717
    %v915 = vpack.c.bf16 %v456, %v452
    %v916 = vpack.c.bf16 %v458, %v454
    %v917 = vpack.c.bf16 %v729, %v725
    %v918 = vpack.c.bf16 %v731, %v727
    %v919 = vpack.c.bf16 %v466, %v462
    %v920 = vpack.c.bf16 %v468, %v464
    %v921 = vpack.c.bf16 %v739, %v735
    %v922 = vpack.c.bf16 %v741, %v737
    %v923 = vpack.c.bf16 %v476, %v472
    %v924 = vpack.c.bf16 %v478, %v474
    %v925 = vpack.c.bf16 %v749, %v745
    %v926 = vpack.c.bf16 %v751, %v747
    %v927 = vpack.c.bf16 %v486, %v482
    %v928 = vpack.c.bf16 %v488, %v484
    %v929 = vpack.c.bf16 %v759, %v755
    %v930 = vpack.c.bf16 %v761, %v757
    %v931 = vpack.c.bf16 %v496, %v492
    %v932 = vpack.c.bf16 %v498, %v494
    %v933 = vpack.c.bf16 %v769, %v765
    %v934 = vpack.c.bf16 %v771, %v767
    %v935 = vpack.c.bf16 %v506, %v502
    %v936 = vpack.c.bf16 %v508, %v504
    %v937 = vpack.c.bf16 %v779, %v775
    %v938 = vpack.c.bf16 %v781, %v777
    %v939 = vpack.c.bf16 %v516, %v512
    %v940 = vpack.c.bf16 %v518, %v514
    %v941 = vpack.c.bf16 %v789, %v785
    %v942 = vpack.c.bf16 %v791, %v787
    %v943 = vpack.c.bf16 %v526, %v522
    %v944 = vpack.c.bf16 %v528, %v524
    %v945 = vpack.c.bf16 %v799, %v795
    %v946 = vpack.c.bf16 %v801, %v797
    %v947 = vpack.c.bf16 %v536, %v532
    %v948 = vpack.c.bf16 %v538, %v534
    %v949 = vpack.c.bf16 %v809, %v805
    %v950 = vpack.c.bf16 %v811, %v807
    %v951 = vpack.c.bf16 %v546, %v542
    %v952 = vpack.c.bf16 %v548, %v544
    %v953 = vpack.c.bf16 %v819, %v815
    %v954 = vpack.c.bf16 %v821, %v817
    %v955 = vpack.c.bf16 %v556, %v552
    %v956 = vpack.c.bf16 %v558, %v554
    %v957 = vpack.c.bf16 %v829, %v825
    %v958 = vpack.c.bf16 %v831, %v827
    %v959 = vpack.c.bf16 %v566, %v562
    %v960 = vpack.c.bf16 %v568, %v564
    %v961 = vpack.c.bf16 %v839, %v835
    %v962 = vpack.c.bf16 %v841, %v837
    %v963 = vpack.c.bf16 %v576, %v572
    %v964 = vpack.c.bf16 %v578, %v574
    %v965 = vpack.c.bf16 %v849, %v845
    %v966 = vpack.c.bf16 %v851, %v847
    %v967 = vpack.c.bf16 %v586, %v582
    %v968 = vpack.c.bf16 %v588, %v584
    %v969 = vpack.c.bf16 %v859, %v855
    %v970 = vpack.c.bf16 %v861, %v857
    %v971 = vpack.c.bf16 %v596, %v592
    %v972 = vpack.c.bf16 %v598, %v594
    %v973 = vpack.c.bf16 %v869, %v865
    %v974 = vpack.c.bf16 %v871, %v867
    %v975 = vpack.c.bf16 %v606, %v602
    %v976 = vpack.c.bf16 %v608, %v604
    %v977 = vpack.c.bf16 %v879, %v875
    %v978 = vpack.c.bf16 %v881, %v877
    %979 = vst [vmem:[#allocation2] sm:$0xff] %v883
    %980 = vst [vmem:[#allocation2 + $0x8] sm:$0xff] %v884
    %981 = vst [vmem:[#allocation2 + $0x10] sm:$0xff] %v885
    %982 = vst [vmem:[#allocation2 + $0x18] sm:$0xff] %v886
    %983 = vst [vmem:[#allocation2 + $0x20] sm:$0xff] %v887
    %984 = vst [vmem:[#allocation2 + $0x28] sm:$0xff] %v888
    %985 = vst [vmem:[#allocation2 + $0x30] sm:$0xff] %v889
    %986 = vst [vmem:[#allocation2 + $0x38] sm:$0xff] %v890
    %987 = vst [vmem:[#allocation2 + $0x40] sm:$0xff] %v891
    %988 = vst [vmem:[#allocation2 + $0x48] sm:$0xff] %v892
    %989 = vst [vmem:[#allocation2 + $0x50] sm:$0xff] %v893
    %990 = vst [vmem:[#allocation2 + $0x58] sm:$0xff] %v894
    %991 = vst [vmem:[#allocation2 + $0x60] sm:$0xff] %v895
    %992 = vst [vmem:[#allocation2 + $0x68] sm:$0xff] %v896
    %993 = vst [vmem:[#allocation2 + $0x70] sm:$0xff] %v897
    %994 = vst [vmem:[#allocation2 + $0x78] sm:$0xff] %v898
    %995 = vst [vmem:[#allocation2 + $0x80] sm:$0xff] %v899
    %996 = vst [vmem:[#allocation2 + $0x88] sm:$0xff] %v900
    %997 = vst [vmem:[#allocation2 + $0x90] sm:$0xff] %v901
    %998 = vst [vmem:[#allocation2 + $0x98] sm:$0xff] %v902
    %999 = vst [vmem:[#allocation2 + $0xa0] sm:$0xff] %v903
    %1000 = vst [vmem:[#allocation2 + $0xa8] sm:$0xff] %v904
    %1001 = vst [vmem:[#allocation2 + $0xb0] sm:$0xff] %v905
    %1002 = vst [vmem:[#allocation2 + $0xb8] sm:$0xff] %v906
    %1003 = vst [vmem:[#allocation2 + $0xc0] sm:$0xff] %v907
    %1004 = vst [vmem:[#allocation2 + $0xc8] sm:$0xff] %v908
    %1005 = vst [vmem:[#allocation2 + $0xd0] sm:$0xff] %v909
    %1006 = vst [vmem:[#allocation2 + $0xd8] sm:$0xff] %v910
    %1007 = vst [vmem:[#allocation2 + $0xe0] sm:$0xff] %v911
    %1008 = vst [vmem:[#allocation2 + $0xe8] sm:$0xff] %v912
    %1009 = vst [vmem:[#allocation2 + $0xf0] sm:$0xff] %v913
    %1010 = vst [vmem:[#allocation2 + $0xf8] sm:$0xff] %v914
    %1011 = vst [vmem:[#allocation2 + $0x100] sm:$0xff] %v915
    %1012 = vst [vmem:[#allocation2 + $0x108] sm:$0xff] %v916
    %1013 = vst [vmem:[#allocation2 + $0x110] sm:$0xff] %v917
    %1014 = vst [vmem:[#allocation2 + $0x118] sm:$0xff] %v918
    %1015 = vst [vmem:[#allocation2 + $0x120] sm:$0xff] %v919
    %1016 = vst [vmem:[#allocation2 + $0x128] sm:$0xff] %v920
    %1017 = vst [vmem:[#allocation2 + $0x130] sm:$0xff] %v921
    %1018 = vst [vmem:[#allocation2 + $0x138] sm:$0xff] %v922
    %1019 = vst [vmem:[#allocation2 + $0x140] sm:$0xff] %v923
    %1020 = vst [vmem:[#allocation2 + $0x148] sm:$0xff] %v924
    %1021 = vst [vmem:[#allocation2 + $0x150] sm:$0xff] %v925
    %1022 = vst [vmem:[#allocation2 + $0x158] sm:$0xff] %v926
    %1023 = vst [vmem:[#allocation2 + $0x160] sm:$0xff] %v927
    %1024 = vst [vmem:[#allocation2 + $0x168] sm:$0xff] %v928
    %1025 = vst [vmem:[#allocation2 + $0x170] sm:$0xff] %v929
    %1026 = vst [vmem:[#allocation2 + $0x178] sm:$0xff] %v930
    %1027 = vst [vmem:[#allocation2 + $0x180] sm:$0xff] %v931
    %1028 = vst [vmem:[#allocation2 + $0x188] sm:$0xff] %v932
    %1029 = vst [vmem:[#allocation2 + $0x190] sm:$0xff] %v933
    %1030 = vst [vmem:[#allocation2 + $0x198] sm:$0xff] %v934
    %1031 = vst [vmem:[#allocation2 + $0x1a0] sm:$0xff] %v935
    %1032 = vst [vmem:[#allocation2 + $0x1a8] sm:$0xff] %v936
    %1033 = vst [vmem:[#allocation2 + $0x1b0] sm:$0xff] %v937
    %1034 = vst [vmem:[#allocation2 + $0x1b8] sm:$0xff] %v938
    %1035 = vst [vmem:[#allocation2 + $0x1c0] sm:$0xff] %v939
    %1036 = vst [vmem:[#allocation2 + $0x1c8] sm:$0xff] %v940
    %1037 = vst [vmem:[#allocation2 + $0x1d0] sm:$0xff] %v941
    %1038 = vst [vmem:[#allocation2 + $0x1d8] sm:$0xff] %v942
    %1039 = vst [vmem:[#allocation2 + $0x1e0] sm:$0xff] %v943
    %1040 = vst [vmem:[#allocation2 + $0x1e8] sm:$0xff] %v944
    %1041 = vst [vmem:[#allocation2 + $0x1f0] sm:$0xff] %v945
    %1042 = vst [vmem:[#allocation2 + $0x1f8] sm:$0xff] %v946
    %1043 = vst [vmem:[#allocation2 + $0x200] sm:$0xff] %v947
    %1044 = vst [vmem:[#allocation2 + $0x208] sm:$0xff] %v948
    %1045 = vst [vmem:[#allocation2 + $0x210] sm:$0xff] %v949
    %1046 = vst [vmem:[#allocation2 + $0x218] sm:$0xff] %v950
    %1047 = vst [vmem:[#allocation2 + $0x220] sm:$0xff] %v951
    %1048 = vst [vmem:[#allocation2 + $0x228] sm:$0xff] %v952
    %1049 = vst [vmem:[#allocation2 + $0x230] sm:$0xff] %v953
    %1050 = vst [vmem:[#allocation2 + $0x238] sm:$0xff] %v954
    %1051 = vst [vmem:[#allocation2 + $0x240] sm:$0xff] %v955
    %1052 = vst [vmem:[#allocation2 + $0x248] sm:$0xff] %v956
    %1053 = vst [vmem:[#allocation2 + $0x250] sm:$0xff] %v957
    %1054 = vst [vmem:[#allocation2 + $0x258] sm:$0xff] %v958
    %1055 = vst [vmem:[#allocation2 + $0x260] sm:$0xff] %v959
    %1056 = vst [vmem:[#allocation2 + $0x268] sm:$0xff] %v960
    %1057 = vst [vmem:[#allocation2 + $0x270] sm:$0xff] %v961
    %1058 = vst [vmem:[#allocation2 + $0x278] sm:$0xff] %v962
    %1059 = vst [vmem:[#allocation2 + $0x280] sm:$0xff] %v963
    %1060 = vst [vmem:[#allocation2 + $0x288] sm:$0xff] %v964
    %1061 = vst [vmem:[#allocation2 + $0x290] sm:$0xff] %v965
    %1062 = vst [vmem:[#allocation2 + $0x298] sm:$0xff] %v966
    %1063 = vst [vmem:[#allocation2 + $0x2a0] sm:$0xff] %v967
    %1064 = vst [vmem:[#allocation2 + $0x2a8] sm:$0xff] %v968
    %1065 = vst [vmem:[#allocation2 + $0x2b0] sm:$0xff] %v969
    %1066 = vst [vmem:[#allocation2 + $0x2b8] sm:$0xff] %v970
    %1067 = vst [vmem:[#allocation2 + $0x2c0] sm:$0xff] %v971
    %1068 = vst [vmem:[#allocation2 + $0x2c8] sm:$0xff] %v972
    %1069 = vst [vmem:[#allocation2 + $0x2d0] sm:$0xff] %v973
    %1070 = vst [vmem:[#allocation2 + $0x2d8] sm:$0xff] %v974
    %1071 = vst [vmem:[#allocation2 + $0x2e0] sm:$0xff] %v975
    %1072 = vst [vmem:[#allocation2 + $0x2e8] sm:$0xff] %v976
    %1073 = vst [vmem:[#allocation2 + $0x2f0] sm:$0xff] %v977
    %1074 = vst [vmem:[#allocation2 + $0x2f8] sm:$0xff] %v978
    %v1075 = vld [vmem:[#allocation2] sm:$0xff]
    %v1076 = vld [vmem:[#allocation2 + $0x8] sm:$0xff]
    %v1077 = vld [vmem:[#allocation2 + $0x20] sm:$0xff]
    %v1078 = vld [vmem:[#allocation2 + $0x28] sm:$0xff]
    %v1079 = vld [vmem:[%s2] sm:$0xff]
    %v1080 = vld [vmem:[%s2 + $0x10] sm:$0xff]
    %v1081 = vld [vmem:[%s2 + $0x20] sm:$0xff]
    %v1082 = vld [vmem:[%s2 + $0x30] sm:$0xff]
    %v1083 = vld [vmem:[%s2 + $0x40] sm:$0xff]
    %v1084 = vld [vmem:[%s2 + $0x50] sm:$0xff]
    %v1085 = vld [vmem:[%s2 + $0x60] sm:$0xff]
    %v1086 = vld [vmem:[%s2 + $0x70] sm:$0xff]
    %v1087 = vld [vmem:[%s2 + $0x80] sm:$0xff]
    %v1088 = vld [vmem:[%s2 + $0x90] sm:$0xff]
    %v1089 = vld [vmem:[%s2 + $0xa0] sm:$0xff]
    %v1090 = vld [vmem:[%s2 + $0xb0] sm:$0xff]
    %v1091 = vld [vmem:[%s2 + $0xc0] sm:$0xff]
    %v1092 = vld [vmem:[%s2 + $0xd0] sm:$0xff]
    %v1093 = vld [vmem:[%s2 + $0xe0] sm:$0xff]
    %v1094 = vld [vmem:[%s2 + $0xf0] sm:$0xff]
    %v1111 = vunpack.c.l.b16 %v1079
    %v1112 = vunpack.c.h.b16 %v1079
    %v1113 = vunpack.c.l.b16 %v1080
    %v1114 = vunpack.c.h.b16 %v1080
    %v1115 = vunpack.c.l.b16 %v1081
    %v1116 = vunpack.c.h.b16 %v1081
    %v1117 = vunpack.c.l.b16 %v1082
    %v1118 = vunpack.c.h.b16 %v1082
    %v1119 = vunpack.c.l.b16 %v1083
    %v1120 = vunpack.c.h.b16 %v1083
    %v1121 = vunpack.c.l.b16 %v1084
    %v1122 = vunpack.c.h.b16 %v1084
    %v1123 = vunpack.c.l.b16 %v1085
    %v1124 = vunpack.c.h.b16 %v1085
    %v1125 = vunpack.c.l.b16 %v1086
    %v1126 = vunpack.c.h.b16 %v1086
    %v1127 = vunpack.c.l.b16 %v1087
    %v1128 = vunpack.c.h.b16 %v1087
    %v1129 = vunpack.c.l.b16 %v1088
    %v1130 = vunpack.c.h.b16 %v1088
    %v1131 = vunpack.c.l.b16 %v1089
    %v1132 = vunpack.c.h.b16 %v1089
    %v1133 = vunpack.c.l.b16 %v1090
    %v1134 = vunpack.c.h.b16 %v1090
    %v1135 = vunpack.c.l.b16 %v1091
    %v1136 = vunpack.c.h.b16 %v1091
    %v1137 = vunpack.c.l.b16 %v1092
    %v1138 = vunpack.c.h.b16 %v1092
    %v1139 = vunpack.c.l.b16 %v1093
    %v1140 = vunpack.c.h.b16 %v1093
    %v1141 = vunpack.c.l.b16 %v1094
    %v1142 = vunpack.c.h.b16 %v1094
    %v1143 = vpack.c.b16 %v1113, %v1111
    %v1144 = vpack.c.b16 %v1114, %v1112
    %v1145 = vpack.c.b16 %v1117, %v1115
    %v1146 = vpack.c.b16 %v1118, %v1116
    %v1147 = vpack.c.b16 %v1121, %v1119
    %v1148 = vpack.c.b16 %v1122, %v1120
    %v1149 = vpack.c.b16 %v1125, %v1123
    %v1150 = vpack.c.b16 %v1126, %v1124
    %v1151 = vpack.c.b16 %v1129, %v1127
    %v1152 = vpack.c.b16 %v1130, %v1128
    %v1153 = vpack.c.b16 %v1133, %v1131
    %v1154 = vpack.c.b16 %v1134, %v1132
    %v1155 = vpack.c.b16 %v1137, %v1135
    %v1156 = vpack.c.b16 %v1138, %v1136
    %v1157 = vpack.c.b16 %v1141, %v1139
    %v1158 = vpack.c.b16 %v1142, %v1140
    %1175 = vmatprep.subr.bf16.mxu0 %v1144
    %1176 = vmatpush1.bf16.msra.mxu0 %v1143
    %1177 = vmatprep.subr.bf16.mxu0 %v1146
    %1178 = vmatpush1.bf16.msra.mxu0 %v1145
    %1179 = vmatprep.subr.bf16.mxu0 %v1148
    %1180 = vmatpush1.bf16.msra.mxu0 %v1147
    %1181 = vmatprep.subr.bf16.mxu0 %v1150
    %1182 = vmatpush1.bf16.msra.mxu0 %v1149
    %1183 = vmatprep.subr.bf16.mxu0 %v1152
    %1184 = vmatpush1.bf16.msra.mxu0 %v1151
    %1185 = vmatprep.subr.bf16.mxu0 %v1154
    %1186 = vmatpush1.bf16.msra.mxu0 %v1153
    %1187 = vmatprep.subr.bf16.mxu0 %v1156
    %1188 = vmatpush1.bf16.msra.mxu0 %v1155
    %1189 = vmatprep.subr.bf16.mxu0 %v1158
    %1190 = vmatpush1.bf16.msra.mxu0 %v1157
    %1191 = vmatprep.subr.bf16.mxu0 0
    %1192 = vmatpush1.bf16.msra.mxu0 0
    %1193 = vmatprep.subr.bf16.mxu0 0
    %1194 = vmatpush1.bf16.msra.mxu0 0
    %1195 = vmatprep.subr.bf16.mxu0 0
    %1196 = vmatpush1.bf16.msra.mxu0 0
    %1197 = vmatprep.subr.bf16.mxu0 0
    %1198 = vmatpush1.bf16.msra.mxu0 0
    %1199 = vmatprep.subr.bf16.mxu0 0
    %1200 = vmatpush1.bf16.msra.mxu0 0
    %1201 = vmatprep.subr.bf16.mxu0 0
    %1202 = vmatpush1.bf16.msra.mxu0 0
    %1203 = vmatprep.subr.bf16.mxu0 0
    %1204 = vmatpush1.bf16.msra.mxu0 0
    %1205 = vmatprep.subr.bf16.mxu0 0
    %1206 = vmatpush1.bf16.msra.mxu0 0
    %1207 = vmatprep.mubr.bf16.mxu0 0
    %1208 = vmatmul.mubr.bf16.gmra.mrb[0].mxu0 0
    %v1209 = vpop.f32.mrb[0].mxu0
    %v1210 = vadd.f32 0.0, %v1209
    %v1211 = vpop.f32.mrb[0].mxu0
    %v1212 = vadd.f32 0.0, %v1211
    %v1213 = vpop.f32.mrb[0].mxu0
    %v1214 = vadd.f32 0.0, %v1213
    %v1215 = vpop.f32.mrb[0].mxu0
    %v1216 = vadd.f32 0.0, %v1215
    %1217 = vmatprep.mubr.bf16.mxu0 0
    %1218 = vmatmul.mubr.bf16.gmra.mrb[0].mxu0 0
    %v1219 = vpop.f32.mrb[0].mxu0
    %v1220 = vadd.f32 0.0, %v1219
    %v1221 = vpop.f32.mrb[0].mxu0
    %v1222 = vadd.f32 0.0, %v1221
    %v1223 = vpop.f32.mrb[0].mxu0
    %v1224 = vadd.f32 0.0, %v1223
    %v1225 = vpop.f32.mrb[0].mxu0
    %v1226 = vadd.f32 0.0, %v1225
    %1227 = vdwg.mxu0
    %v1228 = vunpack.c.l.bf16 %v1075
    %v1229 = vunpack.c.l.bf16 %v1076
    %v1230 = vunpack.c.h.bf16 %v1075
    %v1231 = vunpack.c.h.bf16 %v1076
    %v1232 = vunpack.c.l.bf16 %v1077
    %v1233 = vunpack.c.l.bf16 %v1078
    %v1234 = vunpack.c.h.bf16 %v1077
    %v1235 = vunpack.c.h.bf16 %v1078
    %v1236 = vadd.f32 %v1228, %v1210
    %v1237 = vadd.f32 %v1229, %v1212
    %v1238 = vadd.f32 %v1230, %v1214
    %v1239 = vadd.f32 %v1231, %v1216
    %v1240 = vadd.f32 %v1232, %v1220
    %v1241 = vadd.f32 %v1233, %v1222
    %v1242 = vadd.f32 %v1234, %v1224
    %v1243 = vadd.f32 %v1235, %v1226
    %v1244 = vpack.c.bf16 %v1238, %v1236
    %v1245 = vpack.c.bf16 %v1239, %v1237
    %v1246 = vpack.c.bf16 %v1242, %v1240
    %v1247 = vpack.c.bf16 %v1243, %v1241
    %v1248 = vxor.u32 %v1244, 2147516416
    %v1249 = vxor.u32 %v1246, 2147516416
    %v1251 = vmul.bf16 %v1248, 1069105081
    %v1252 = vpow.bf16.pop %v1251
    %v1254 = vmul.bf16 %v1249, 1069105081
    %v1255 = vpow.bf16.pop %v1254
    %v1256 = vadd.bf16 %v1252, 1065369472
    %v1257 = vadd.bf16 %v1255, 1065369472
    %v1258 = vrcp.bf16.pop %v1256
    %v1259 = vmul.bf16 1065369472, %v1258
    %v1260 = vrcp.bf16.pop %v1257
    %v1261 = vmul.bf16 1065369472, %v1260
    %v1262 = vxor.u32 %v1245, 2147516416
    %v1263 = vxor.u32 %v1247, 2147516416
    %v1265 = vmul.bf16 %v1262, 1069105081
    %v1266 = vpow.bf16.pop %v1265
    %v1268 = vmul.bf16 %v1263, 1069105081
    %v1269 = vpow.bf16.pop %v1268
    %v1270 = vadd.bf16 %v1266, 1065369472
    %v1271 = vadd.bf16 %v1269, 1065369472
    %v1272 = vrcp.bf16.pop %v1270
    %v1273 = vmul.bf16 1065369472, %v1272
    %v1274 = vrcp.bf16.pop %v1271
    %v1275 = vmul.bf16 1065369472, %v1274
    %v1276 = vld [vmem:[#allocation2 + $0x10] sm:$0xff]
    %v1277 = vld [vmem:[#allocation2 + $0x18] sm:$0xff]
    %v1278 = vld [vmem:[#allocation2 + $0x30] sm:$0xff]
    %v1279 = vld [vmem:[#allocation2 + $0x38] sm:$0xff]
    %v1280 = vld [vmem:[%s2 + $0x8] sm:$0xff]
    %v1281 = vld [vmem:[%s2 + $0x18] sm:$0xff]
    %v1282 = vld [vmem:[%s2 + $0x28] sm:$0xff]
    %v1283 = vld [vmem:[%s2 + $0x38] sm:$0xff]
    %v1284 = vld [vmem:[%s2 + $0x48] sm:$0xff]
    %v1285 = vld [vmem:[%s2 + $0x58] sm:$0xff]
    %v1286 = vld [vmem:[%s2 + $0x68] sm:$0xff]
    %v1287 = vld [vmem:[%s2 + $0x78] sm:$0xff]
    %v1288 = vld [vmem:[%s2 + $0x88] sm:$0xff]
    %v1289 = vld [vmem:[%s2 + $0x98] sm:$0xff]
    %v1290 = vld [vmem:[%s2 + $0xa8] sm:$0xff]
    %v1291 = vld [vmem:[%s2 + $0xb8] sm:$0xff]
    %v1292 = vld [vmem:[%s2 + $0xc8] sm:$0xff]
    %v1293 = vld [vmem:[%s2 + $0xd8] sm:$0xff]
    %v1294 = vld [vmem:[%s2 + $0xe8] sm:$0xff]
    %v1295 = vld [vmem:[%s2 + $0xf8] sm:$0xff]
    %v1312 = vunpack.c.l.b16 %v1280
    %v1313 = vunpack.c.h.b16 %v1280
    %v1314 = vunpack.c.l.b16 %v1281
    %v1315 = vunpack.c.h.b16 %v1281
    %v1316 = vunpack.c.l.b16 %v1282
    %v1317 = vunpack.c.h.b16 %v1282
    %v1318 = vunpack.c.l.b16 %v1283
    %v1319 = vunpack.c.h.b16 %v1283
    %v1320 = vunpack.c.l.b16 %v1284
    %v1321 = vunpack.c.h.b16 %v1284
    %v1322 = vunpack.c.l.b16 %v1285
    %v1323 = vunpack.c.h.b16 %v1285
    %v1324 = vunpack.c.l.b16 %v1286
    %v1325 = vunpack.c.h.b16 %v1286
    %v1326 = vunpack.c.l.b16 %v1287
    %v1327 = vunpack.c.h.b16 %v1287
    %v1328 = vunpack.c.l.b16 %v1288
    %v1329 = vunpack.c.h.b16 %v1288
    %v1330 = vunpack.c.l.b16 %v1289
    %v1331 = vunpack.c.h.b16 %v1289
    %v1332 = vunpack.c.l.b16 %v1290
    %v1333 = vunpack.c.h.b16 %v1290
    %v1334 = vunpack.c.l.b16 %v1291
    %v1335 = vunpack.c.h.b16 %v1291
    %v1336 = vunpack.c.l.b16 %v1292
    %v1337 = vunpack.c.h.b16 %v1292
    %v1338 = vunpack.c.l.b16 %v1293
    %v1339 = vunpack.c.h.b16 %v1293
    %v1340 = vunpack.c.l.b16 %v1294
    %v1341 = vunpack.c.h.b16 %v1294
    %v1342 = vunpack.c.l.b16 %v1295
    %v1343 = vunpack.c.h.b16 %v1295
    %v1344 = vpack.c.b16 %v1314, %v1312
    %v1345 = vpack.c.b16 %v1315, %v1313
    %v1346 = vpack.c.b16 %v1318, %v1316
    %v1347 = vpack.c.b16 %v1319, %v1317
    %v1348 = vpack.c.b16 %v1322, %v1320
    %v1349 = vpack.c.b16 %v1323, %v1321
    %v1350 = vpack.c.b16 %v1326, %v1324
    %v1351 = vpack.c.b16 %v1327, %v1325
    %v1352 = vpack.c.b16 %v1330, %v1328
    %v1353 = vpack.c.b16 %v1331, %v1329
    %v1354 = vpack.c.b16 %v1334, %v1332
    %v1355 = vpack.c.b16 %v1335, %v1333
    %v1356 = vpack.c.b16 %v1338, %v1336
    %v1357 = vpack.c.b16 %v1339, %v1337
    %v1358 = vpack.c.b16 %v1342, %v1340
    %v1359 = vpack.c.b16 %v1343, %v1341
    %1376 = vmatprep.subr.bf16.mxu0 %v1345
    %1377 = vmatpush1.bf16.msra.mxu0 %v1344
    %1378 = vmatprep.subr.bf16.mxu0 %v1347
    %1379 = vmatpush1.bf16.msra.mxu0 %v1346
    %1380 = vmatprep.subr.bf16.mxu0 %v1349
    %1381 = vmatpush1.bf16.msra.mxu0 %v1348
    %1382 = vmatprep.subr.bf16.mxu0 %v1351
    %1383 = vmatpush1.bf16.msra.mxu0 %v1350
    %1384 = vmatprep.subr.bf16.mxu0 %v1353
    %1385 = vmatpush1.bf16.msra.mxu0 %v1352
    %1386 = vmatprep.subr.bf16.mxu0 %v1355
    %1387 = vmatpush1.bf16.msra.mxu0 %v1354
    %1388 = vmatprep.subr.bf16.mxu0 %v1357
    %1389 = vmatpush1.bf16.msra.mxu0 %v1356
    %1390 = vmatprep.subr.bf16.mxu0 %v1359
    %1391 = vmatpush1.bf16.msra.mxu0 %v1358
    %1392 = vmatprep.subr.bf16.mxu0 0
    %1393 = vmatpush1.bf16.msra.mxu0 0
    %1394 = vmatprep.subr.bf16.mxu0 0
    %1395 = vmatpush1.bf16.msra.mxu0 0
    %1396 = vmatprep.subr.bf16.mxu0 0
    %1397 = vmatpush1.bf16.msra.mxu0 0
    %1398 = vmatprep.subr.bf16.mxu0 0
    %1399 = vmatpush1.bf16.msra.mxu0 0
    %1400 = vmatprep.subr.bf16.mxu0 0
    %1401 = vmatpush1.bf16.msra.mxu0 0
    %1402 = vmatprep.subr.bf16.mxu0 0
    %1403 = vmatpush1.bf16.msra.mxu0 0
    %1404 = vmatprep.subr.bf16.mxu0 0
    %1405 = vmatpush1.bf16.msra.mxu0 0
    %1406 = vmatprep.subr.bf16.mxu0 0
    %1407 = vmatpush1.bf16.msra.mxu0 0
    %1408 = vmatprep.mubr.bf16.mxu0 0
    %1409 = vmatmul.mubr.bf16.gmra.mrb[0].mxu0 0
    %v1410 = vpop.f32.mrb[0].mxu0
    %v1411 = vadd.f32 0.0, %v1410
    %v1412 = vpop.f32.mrb[0].mxu0
    %v1413 = vadd.f32 0.0, %v1412
    %v1414 = vpop.f32.mrb[0].mxu0
    %v1415 = vadd.f32 0.0, %v1414
    %v1416 = vpop.f32.mrb[0].mxu0
    %v1417 = vadd.f32 0.0, %v1416
    %1418 = vmatprep.mubr.bf16.mxu0 0
    %1419 = vmatmul.mubr.bf16.gmra.mrb[0].mxu0 0
    %v1420 = vpop.f32.mrb[0].mxu0
    %v1421 = vadd.f32 0.0, %v1420
    %v1422 = vpop.f32.mrb[0].mxu0
    %v1423 = vadd.f32 0.0, %v1422
    %v1424 = vpop.f32.mrb[0].mxu0
    %v1425 = vadd.f32 0.0, %v1424
    %v1426 = vpop.f32.mrb[0].mxu0
    %v1427 = vadd.f32 0.0, %v1426
    %1428 = vdwg.mxu0
    %v1429 = vunpack.c.l.bf16 %v1276
    %v1430 = vunpack.c.l.bf16 %v1277
    %v1431 = vunpack.c.h.bf16 %v1276
    %v1432 = vunpack.c.h.bf16 %v1277
    %v1433 = vunpack.c.l.bf16 %v1278
    %v1434 = vunpack.c.l.bf16 %v1279
    %v1435 = vunpack.c.h.bf16 %v1278
    %v1436 = vunpack.c.h.bf16 %v1279
    %v1437 = vadd.f32 %v1429, %v1411
    %v1438 = vadd.f32 %v1430, %v1413
    %v1439 = vadd.f32 %v1431, %v1415
    %v1440 = vadd.f32 %v1432, %v1417
    %v1441 = vadd.f32 %v1433, %v1421
    %v1442 = vadd.f32 %v1434, %v1423
    %v1443 = vadd.f32 %v1435, %v1425
    %v1444 = vadd.f32 %v1436, %v1427
    %v1445 = vpack.c.bf16 %v1439, %v1437
    %v1446 = vpack.c.bf16 %v1440, %v1438
    %v1447 = vpack.c.bf16 %v1443, %v1441
    %v1448 = vpack.c.bf16 %v1444, %v1442
    %v1449 = vtanh.bf16.pop %v1445
    %v1450 = vtanh.bf16.pop %v1447
    %v1451 = vxor.u32 %v1446, 2147516416
    %v1452 = vxor.u32 %v1448, 2147516416
    %v1454 = vmul.bf16 %v1451, 1069105081
    %v1455 = vpow.bf16.pop %v1454
    %v1457 = vmul.bf16 %v1452, 1069105081
    %v1458 = vpow.bf16.pop %v1457
    %v1459 = vadd.bf16 %v1455, 1065369472
    %v1460 = vadd.bf16 %v1458, 1065369472
    %v1461 = vrcp.bf16.pop %v1459
    %v1462 = vmul.bf16 1065369472, %v1461
    %v1463 = vrcp.bf16.pop %v1460
    %v1464 = vmul.bf16 1065369472, %v1463
    %v1465 = vunpack.c.l.bf16 %v1273
    %v1466 = vunpack.c.h.bf16 %v1273
    %v1467 = vunpack.c.l.bf16 %v1275
    %v1468 = vunpack.c.h.bf16 %v1275
    %v1469 = vmul.f32 %v1465, 0.0
    %v1470 = vmul.f32 %v1466, 0.0
    %v1471 = vmul.f32 %v1467, 0.0
    %v1472 = vmul.f32 %v1468, 0.0
    %v1473 = vmul.bf16 %v1259, %v1449
    %v1474 = vmul.bf16 %v1261, %v1450
    %v1475 = vunpack.c.l.bf16 %v1473
    %v1476 = vunpack.c.h.bf16 %v1473
    %v1477 = vunpack.c.l.bf16 %v1474
    %v1478 = vunpack.c.h.bf16 %v1474
    %v1479 = vadd.f32 %v1469, %v1475
    %v1480 = vadd.f32 %v1470, %v1476
    %v1481 = vadd.f32 %v1471, %v1477
    %v1482 = vadd.f32 %v1472, %v1478
    %v1483 = vpack.c.bf16 %v1480, %v1479
    %v1484 = vpack.c.bf16 %v1482, %v1481
    %v1485 = vtanh.bf16.pop %v1483
    %v1486 = vtanh.bf16.pop %v1484
    %v1487 = vmul.bf16 %v1462, %v1485
    %v1488 = vmul.bf16 %v1464, %v1486
    %v1489 = vld [vmem:[%s3] sm:$0x1]
    %1490 = vmatprep.subr.bf16.mxu0 0
    %1491 = vmatpush1.bf16.xpose.msra.mxu0 %v1487
    %1492 = vmatprep.subr.bf16.mxu0 0
    %1493 = vmatpush1.bf16.xpose.msra.mxu0 %v1488
    %1494 = vmatprep.subr.bf16.mxu0 0
    %1495 = vmatpush1.bf16.xpose.msra.mxu0 0
    %1496 = vmatprep.subr.bf16.mxu0 0
    %1497 = vmatpush1.bf16.xpose.msra.mxu0 0
    %1498 = vmatprep.subr.bf16.mxu0 0
    %1499 = vmatpush1.bf16.xpose.msra.mxu0 0
    %1500 = vmatprep.subr.bf16.mxu0 0
    %1501 = vmatpush1.bf16.xpose.msra.mxu0 0
    %1502 = vmatprep.subr.bf16.mxu0 0
    %1503 = vmatpush1.bf16.xpose.msra.mxu0 0
    %1504 = vmatprep.subr.bf16.mxu0 0
    %1505 = vmatpush1.bf16.xpose.msra.mxu0 0
    %1506 = vmatprep.subr.bf16.mxu0 0
    %1507 = vmatpush1.bf16.xpose.msra.mxu0 0
    %1508 = vmatprep.subr.bf16.mxu0 0
    %1509 = vmatpush1.bf16.xpose.msra.mxu0 0
    %1510 = vmatprep.subr.bf16.mxu0 0
    %1511 = vmatpush1.bf16.xpose.msra.mxu0 0
    %1512 = vmatprep.subr.bf16.mxu0 0
    %1513 = vmatpush1.bf16.xpose.msra.mxu0 0
    %1514 = vmatprep.subr.bf16.mxu0 0
    %1515 = vmatpush1.bf16.xpose.msra.mxu0 0
    %1516 = vmatprep.subr.bf16.mxu0 0
    %1517 = vmatpush1.bf16.xpose.msra.mxu0 0
    %1518 = vmatprep.subr.bf16.mxu0 0
    %1519 = vmatpush1.bf16.xpose.msra.mxu0 0
    %1520 = vmatprep.subr.bf16.mxu0 0
    %1521 = vmatpush1.bf16.xpose.msra.mxu0 0
    %1522 = vmatprep.mubr.bf16.mxu0 0
    %1523 = vmatmul.mubr.bf16.gmra.mrb[0].mxu0 %v1489
    %v1524 = vpop.f32.mrb[0].mxu0
    %v1525 = vadd.f32 0.0, %v1524
    %v1526 = vpop.f32.mrb[0].mxu0
    %v1527 = vpop.f32.mrb[0].mxu0
    %v1528 = vpop.f32.mrb[0].mxu0
    %1529 = vdwg.mxu0
    %s1530 = sld [smem:[#allocation4]]
    %v1531 = vstv %s1530
    %v1532 = vmul.f32 %v1531, %v1525
    %v1533 = vadd.f32 %v1532, 0.0
    %v1534 = vld [vmem:[#allocation2 + $0x40] sm:$0xff]
    %v1535 = vld [vmem:[#allocation2 + $0x48] sm:$0xff]
    %v1536 = vld [vmem:[#allocation2 + $0x60] sm:$0xff]
    %v1537 = vld [vmem:[#allocation2 + $0x68] sm:$0xff]
    %1538 = vmatprep.subr.bf16.mxu0 %v1144
    %1539 = vmatpush1.bf16.msra.mxu0 %v1143
    %1540 = vmatprep.subr.bf16.mxu0 %v1146
    %1541 = vmatpush1.bf16.msra.mxu0 %v1145
    %1542 = vmatprep.subr.bf16.mxu0 %v1148
    %1543 = vmatpush1.bf16.msra.mxu0 %v1147
    %1544 = vmatprep.subr.bf16.mxu0 %v1150
    %1545 = vmatpush1.bf16.msra.mxu0 %v1149
    %1546 = vmatprep.subr.bf16.mxu0 %v1152
    %1547 = vmatpush1.bf16.msra.mxu0 %v1151
    %1548 = vmatprep.subr.bf16.mxu0 %v1154
    %1549 = vmatpush1.bf16.msra.mxu0 %v1153
    %1550 = vmatprep.subr.bf16.mxu0 %v1156
    %1551 = vmatpush1.bf16.msra.mxu0 %v1155
    %1552 = vmatprep.subr.bf16.mxu0 %v1158
    %1553 = vmatpush1.bf16.msra.mxu0 %v1157
    %1554 = vmatprep.subr.bf16.mxu0 0
    %1555 = vmatpush1.bf16.msra.mxu0 0
    %1556 = vmatprep.subr.bf16.mxu0 0
    %1557 = vmatpush1.bf16.msra.mxu0 0
    %1558 = vmatprep.subr.bf16.mxu0 0
    %1559 = vmatpush1.bf16.msra.mxu0 0
    %1560 = vmatprep.subr.bf16.mxu0 0
    %1561 = vmatpush1.bf16.msra.mxu0 0
    %1562 = vmatprep.subr.bf16.mxu0 0
    %1563 = vmatpush1.bf16.msra.mxu0 0
    %1564 = vmatprep.subr.bf16.mxu0 0
    %1565 = vmatpush1.bf16.msra.mxu0 0
    %1566 = vmatprep.subr.bf16.mxu0 0
    %1567 = vmatpush1.bf16.msra.mxu0 0
    %1568 = vmatprep.subr.bf16.mxu0 0
    %1569 = vmatpush1.bf16.msra.mxu0 0
    %1570 = vmatprep.mubr.bf16.mxu0 0
    %1571 = vmatmul.mubr.bf16.gmra.mrb[0].mxu0 %v1487
    %v1572 = vpop.f32.mrb[0].mxu0
    %v1573 = vadd.f32 0.0, %v1572
    %v1574 = vpop.f32.mrb[0].mxu0
    %v1575 = vadd.f32 0.0, %v1574
    %v1576 = vpop.f32.mrb[0].mxu0
    %v1577 = vadd.f32 0.0, %v1576
    %v1578 = vpop.f32.mrb[0].mxu0
    %v1579 = vadd.f32 0.0, %v1578
    %1580 = vmatprep.mubr.bf16.mxu0 0
    %1581 = vmatmul.mubr.bf16.gmra.mrb[0].mxu0 %v1488
    %v1582 = vpop.f32.mrb[0].mxu0
    %v1583 = vadd.f32 0.0, %v1582
    %v1584 = vpop.f32.mrb[0].mxu0
    %v1585 = vadd.f32 0.0, %v1584
    %v1586 = vpop.f32.mrb[0].mxu0
    %v1587 = vadd.f32 0.0, %v1586
    %v1588 = vpop.f32.mrb[0].mxu0
    %v1589 = vadd.f32 0.0, %v1588
    %1590 = vdwg.mxu0
    %v1591 = vunpack.c.l.bf16 %v1534
    %v1592 = vunpack.c.l.bf16 %v1535
    %v1593 = vunpack.c.h.bf16 %v1534
    %v1594 = vunpack.c.h.bf16 %v1535
    %v1595 = vunpack.c.l.bf16 %v1536
    %v1596 = vunpack.c.l.bf16 %v1537
    %v1597 = vunpack.c.h.bf16 %v1536
    %v1598 = vunpack.c.h.bf16 %v1537
    %v1599 = vadd.f32 %v1591, %v1573
    %v1600 = vadd.f32 %v1592, %v1575
    %v1601 = vadd.f32 %v1593, %v1577
    %v1602 = vadd.f32 %v1594, %v1579
    %v1603 = vadd.f32 %v1595, %v1583
    %v1604 = vadd.f32 %v1596, %v1585
    %v1605 = vadd.f32 %v1597, %v1587
    %v1606 = vadd.f32 %v1598, %v1589
    %v1607 = vpack.c.bf16 %v1601, %v1599
    %v1608 = vpack.c.bf16 %v1602, %v1600
    %v1609 = vpack.c.bf16 %v1605, %v1603
    %v1610 = vpack.c.bf16 %v1606, %v1604
    %v1611 = vxor.u32 %v1607, 2147516416
    %v1612 = vxor.u32 %v1609, 2147516416
    %v1614 = vmul.bf16 %v1611, 1069105081
    %v1615 = vpow.bf16.pop %v1614
    %v1617 = vmul.bf16 %v1612, 1069105081
    %v1618 = vpow.bf16.pop %v1617
    %v1619 = vadd.bf16 %v1615, 1065369472
    %v1620 = vadd.bf16 %v1618, 1065369472
    %v1621 = vrcp.bf16.pop %v1619
    %v1622 = vmul.bf16 1065369472, %v1621
    %v1623 = vrcp.bf16.pop %v1620
    %v1624 = vmul.bf16 1065369472, %v1623
    %v1625 = vxor.u32 %v1608, 2147516416
    %v1626 = vxor.u32 %v1610, 2147516416
    %v1628 = vmul.bf16 %v1625, 1069105081
    %v1629 = vpow.bf16.pop %v1628
    %v1631 = vmul.bf16 %v1626, 1069105081
    %v1632 = vpow.bf16.pop %v1631
    %v1633 = vadd.bf16 %v1629, 1065369472
    %v1634 = vadd.bf16 %v1632, 1065369472
    %v1635 = vrcp.bf16.pop %v1633
    %v1636 = vmul.bf16 1065369472, %v1635
    %v1637 = vrcp.bf16.pop %v1634
    %v1638 = vmul.bf16 1065369472, %v1637
    %v1639 = vld [vmem:[#allocation2 + $0x50] sm:$0xff]
    %v1640 = vld [vmem:[#allocation2 + $0x58] sm:$0xff]
    %v1641 = vld [vmem:[#allocation2 + $0x70] sm:$0xff]
    %v1642 = vld [vmem:[#allocation2 + $0x78] sm:$0xff]
    %1643 = vmatprep.subr.bf16.mxu0 %v1345
    %1644 = vmatpush1.bf16.msra.mxu0 %v1344
    %1645 = vmatprep.subr.bf16.mxu0 %v1347
    %1646 = vmatpush1.bf16.msra.mxu0 %v1346
    %1647 = vmatprep.subr.bf16.mxu0 %v1349
    %1648 = vmatpush1.bf16.msra.mxu0 %v1348
    %1649 = vmatprep.subr.bf16.mxu0 %v1351
    %1650 = vmatpush1.bf16.msra.mxu0 %v1350
    %1651 = vmatprep.subr.bf16.mxu0 %v1353
    %1652 = vmatpush1.bf16.msra.mxu0 %v1352
    %1653 = vmatprep.subr.bf16.mxu0 %v1355
    %1654 = vmatpush1.bf16.msra.mxu0 %v1354
    %1655 = vmatprep.subr.bf16.mxu0 %v1357
    %1656 = vmatpush1.bf16.msra.mxu0 %v1356
    %1657 = vmatprep.subr.bf16.mxu0 %v1359
    %1658 = vmatpush1.bf16.msra.mxu0 %v1358
    %1659 = vmatprep.subr.bf16.mxu0 0
    %1660 = vmatpush1.bf16.msra.mxu0 0
    %1661 = vmatprep.subr.bf16.mxu0 0
    %1662 = vmatpush1.bf16.msra.mxu0 0
    %1663 = vmatprep.subr.bf16.mxu0 0
    %1664 = vmatpush1.bf16.msra.mxu0 0
    %1665 = vmatprep.subr.bf16.mxu0 0
    %1666 = vmatpush1.bf16.msra.mxu0 0
    %1667 = vmatprep.subr.bf16.mxu0 0
    %1668 = vmatpush1.bf16.msra.mxu0 0
    %1669 = vmatprep.subr.bf16.mxu0 0
    %1670 = vmatpush1.bf16.msra.mxu0 0
    %1671 = vmatprep.subr.bf16.mxu0 0
    %1672 = vmatpush1.bf16.msra.mxu0 0
    %1673 = vmatprep.subr.bf16.mxu0 0
    %1674 = vmatpush1.bf16.msra.mxu0 0
    %1675 = vmatprep.mubr.bf16.mxu0 0
    %1676 = vmatmul.mubr.bf16.gmra.mrb[0].mxu0 %v1487
    %v1677 = vpop.f32.mrb[0].mxu0
    %v1678 = vadd.f32 0.0, %v1677
    %v1679 = vpop.f32.mrb[0].mxu0
    %v1680 = vadd.f32 0.0, %v1679
    %v1681 = vpop.f32.mrb[0].mxu0
    %v1682 = vadd.f32 0.0, %v1681
    %v1683 = vpop.f32.mrb[0].mxu0
    %v1684 = vadd.f32 0.0, %v1683
    %1685 = vmatprep.mubr.bf16.mxu0 0
    %1686 = vmatmul.mubr.bf16.gmra.mrb[0].mxu0 %v1488
    %v1687 = vpop.f32.mrb[0].mxu0
    %v1688 = vadd.f32 0.0, %v1687
    %v1689 = vpop.f32.mrb[0].mxu0
    %v1690 = vadd.f32 0.0, %v1689
    %v1691 = vpop.f32.mrb[0].mxu0
    %v1692 = vadd.f32 0.0, %v1691
    %v1693 = vpop.f32.mrb[0].mxu0
    %v1694 = vadd.f32 0.0, %v1693
    %1695 = vdwg.mxu0
    %v1696 = vunpack.c.l.bf16 %v1639
    %v1697 = vunpack.c.l.bf16 %v1640
    %v1698 = vunpack.c.h.bf16 %v1639
    %v1699 = vunpack.c.h.bf16 %v1640
    %v1700 = vunpack.c.l.bf16 %v1641
    %v1701 = vunpack.c.l.bf16 %v1642
    %v1702 = vunpack.c.h.bf16 %v1641
    %v1703 = vunpack.c.h.bf16 %v1642
    %v1704 = vadd.f32 %v1696, %v1678
    %v1705 = vadd.f32 %v1697, %v1680
    %v1706 = vadd.f32 %v1698, %v1682
    %v1707 = vadd.f32 %v1699, %v1684
    %v1708 = vadd.f32 %v1700, %v1688
    %v1709 = vadd.f32 %v1701, %v1690
    %v1710 = vadd.f32 %v1702, %v1692
    %v1711 = vadd.f32 %v1703, %v1694
    %v1712 = vpack.c.bf16 %v1706, %v1704
    %v1713 = vpack.c.bf16 %v1707, %v1705
    %v1714 = vpack.c.bf16 %v1710, %v1708
    %v1715 = vpack.c.bf16 %v1711, %v1709
    %v1716 = vtanh.bf16.pop %v1712
    %v1717 = vtanh.bf16.pop %v1714
    %v1718 = vxor.u32 %v1713, 2147516416
    %v1719 = vxor.u32 %v1715, 2147516416
    %v1721 = vmul.bf16 %v1718, 1069105081
    %v1722 = vpow.bf16.pop %v1721
    %v1724 = vmul.bf16 %v1719, 1069105081
    %v1725 = vpow.bf16.pop %v1724
    %v1726 = vadd.bf16 %v1722, 1065369472
    %v1727 = vadd.bf16 %v1725, 1065369472
    %v1728 = vrcp.bf16.pop %v1726
    %v1729 = vmul.bf16 1065369472, %v1728
    %v1730 = vrcp.bf16.pop %v1727
    %v1731 = vmul.bf16 1065369472, %v1730
    %v1732 = vunpack.c.l.bf16 %v1636
    %v1733 = vunpack.c.h.bf16 %v1636
    %v1734 = vunpack.c.l.bf16 %v1638
    %v1735 = vunpack.c.h.bf16 %v1638
    %v1736 = vmul.f32 %v1732, %v1479
    %v1737 = vmul.f32 %v1733, %v1480
    %v1738 = vmul.f32 %v1734, %v1481
    %v1739 = vmul.f32 %v1735, %v1482
    %v1740 = vmul.bf16 %v1622, %v1716
    %v1741 = vmul.bf16 %v1624, %v1717
    %v1742 = vunpack.c.l.bf16 %v1740
    %v1743 = vunpack.c.h.bf16 %v1740
    %v1744 = vunpack.c.l.bf16 %v1741
    %v1745 = vunpack.c.h.bf16 %v1741
    %v1746 = vadd.f32 %v1736, %v1742
    %v1747 = vadd.f32 %v1737, %v1743
    %v1748 = vadd.f32 %v1738, %v1744
    %v1749 = vadd.f32 %v1739, %v1745
    %v1750 = vpack.c.bf16 %v1747, %v1746
    %v1751 = vpack.c.bf16 %v1749, %v1748
    %v1752 = vtanh.bf16.pop %v1750
    %v1753 = vtanh.bf16.pop %v1751
    %v1754 = vmul.bf16 %v1729, %v1752
    %v1755 = vmul.bf16 %v1731, %v1753
    %1756 = vmatprep.subr.bf16.mxu0 0
    %1757 = vmatpush1.bf16.xpose.msra.mxu0 %v1754
    %1758 = vmatprep.subr.bf16.mxu0 0
    %1759 = vmatpush1.bf16.xpose.msra.mxu0 %v1755
    %1760 = vmatprep.subr.bf16.mxu0 0
    %1761 = vmatpush1.bf16.xpose.msra.mxu0 0
    %1762 = vmatprep.subr.bf16.mxu0 0
    %1763 = vmatpush1.bf16.xpose.msra.mxu0 0
    %1764 = vmatprep.subr.bf16.mxu0 0
    %1765 = vmatpush1.bf16.xpose.msra.mxu0 0
    %1766 = vmatprep.subr.bf16.mxu0 0
    %1767 = vmatpush1.bf16.xpose.msra.mxu0 0
    %1768 = vmatprep.subr.bf16.mxu0 0
    %1769 = vmatpush1.bf16.xpose.msra.mxu0 0
    %1770 = vmatprep.subr.bf16.mxu0 0
    %1771 = vmatpush1.bf16.xpose.msra.mxu0 0
    %1772 = vmatprep.subr.bf16.mxu0 0
    %1773 = vmatpush1.bf16.xpose.msra.mxu0 0
    %1774 = vmatprep.subr.bf16.mxu0 0
    %1775 = vmatpush1.bf16.xpose.msra.mxu0 0
    %1776 = vmatprep.subr.bf16.mxu0 0
    %1777 = vmatpush1.bf16.xpose.msra.mxu0 0
    %1778 = vmatprep.subr.bf16.mxu0 0
    %1779 = vmatpush1.bf16.xpose.msra.mxu0 0
    %1780 = vmatprep.subr.bf16.mxu0 0
    %1781 = vmatpush1.bf16.xpose.msra.mxu0 0
    %1782 = vmatprep.subr.bf16.mxu0 0
    %1783 = vmatpush1.bf16.xpose.msra.mxu0 0
    %1784 = vmatprep.subr.bf16.mxu0 0
    %1785 = vmatpush1.bf16.xpose.msra.mxu0 0
    %1786 = vmatprep.subr.bf16.mxu0 0
    %1787 = vmatpush1.bf16.xpose.msra.mxu0 0
    %1788 = vmatprep.mubr.bf16.mxu0 0
    %1789 = vmatmul.mubr.bf16.gmra.mrb[0].mxu0 %v1489
    %v1790 = vpop.f32.mrb[0].mxu0
    %v1791 = vadd.f32 0.0, %v1790
    %v1792 = vpop.f32.mrb[0].mxu0
    %v1793 = vpop.f32.mrb[0].mxu0
    %v1794 = vpop.f32.mrb[0].mxu0
    %1795 = vdwg.mxu0
    %s1796 = sld [smem:[#allocation4 + $0x1]]
    %v1797 = vstv %s1796
    %v1798 = vmul.f32 %v1797, %v1791
    %v1799 = vadd.f32 %v1533, %v1798
    %v1800 = vld [vmem:[#allocation2 + $0x80] sm:$0xff]
    %v1801 = vld [vmem:[#allocation2 + $0x88] sm:$0xff]
    %v1802 = vld [vmem:[#allocation2 + $0xa0] sm:$0xff]
    %v1803 = vld [vmem:[#allocation2 + $0xa8] sm:$0xff]
    %1804 = vmatprep.subr.bf16.mxu0 %v1144
    %1805 = vmatpush1.bf16.msra.mxu0 %v1143
    %1806 = vmatprep.subr.bf16.mxu0 %v1146
    %1807 = vmatpush1.bf16.msra.mxu0 %v1145
    %1808 = vmatprep.subr.bf16.mxu0 %v1148
    %1809 = vmatpush1.bf16.msra.mxu0 %v1147
    %1810 = vmatprep.subr.bf16.mxu0 %v1150
    %1811 = vmatpush1.bf16.msra.mxu0 %v1149
    %1812 = vmatprep.subr.bf16.mxu0 %v1152
    %1813 = vmatpush1.bf16.msra.mxu0 %v1151
    %1814 = vmatprep.subr.bf16.mxu0 %v1154
    %1815 = vmatpush1.bf16.msra.mxu0 %v1153
    %1816 = vmatprep.subr.bf16.mxu0 %v1156
    %1817 = vmatpush1.bf16.msra.mxu0 %v1155
    %1818 = vmatprep.subr.bf16.mxu0 %v1158
    %1819 = vmatpush1.bf16.msra.mxu0 %v1157
    %1820 = vmatprep.subr.bf16.mxu0 0
    %1821 = vmatpush1.bf16.msra.mxu0 0
    %1822 = vmatprep.subr.bf16.mxu0 0
    %1823 = vmatpush1.bf16.msra.mxu0 0
    %1824 = vmatprep.subr.bf16.mxu0 0
    %1825 = vmatpush1.bf16.msra.mxu0 0
    %1826 = vmatprep.subr.bf16.mxu0 0
    %1827 = vmatpush1.bf16.msra.mxu0 0
    %1828 = vmatprep.subr.bf16.mxu0 0
    %1829 = vmatpush1.bf16.msra.mxu0 0
    %1830 = vmatprep.subr.bf16.mxu0 0
    %1831 = vmatpush1.bf16.msra.mxu0 0
    %1832 = vmatprep.subr.bf16.mxu0 0
    %1833 = vmatpush1.bf16.msra.mxu0 0
    %1834 = vmatprep.subr.bf16.mxu0 0
    %1835 = vmatpush1.bf16.msra.mxu0 0
    %1836 = vmatprep.mubr.bf16.mxu0 0
    %1837 = vmatmul.mubr.bf16.gmra.mrb[0].mxu0 %v1754
    %v1838 = vpop.f32.mrb[0].mxu0
    %v1839 = vadd.f32 0.0, %v1838
    %v1840 = vpop.f32.mrb[0].mxu0
    %v1841 = vadd.f32 0.0, %v1840
    %v1842 = vpop.f32.mrb[0].mxu0
    %v1843 = vadd.f32 0.0, %v1842
    %v1844 = vpop.f32.mrb[0].mxu0
    %v1845 = vadd.f32 0.0, %v1844
    %1846 = vmatprep.mubr.bf16.mxu0 0
    %1847 = vmatmul.mubr.bf16.gmra.mrb[0].mxu0 %v1755
    %v1848 = vpop.f32.mrb[0].mxu0
    %v1849 = vadd.f32 0.0, %v1848
    %v1850 = vpop.f32.mrb[0].mxu0
    %v1851 = vadd.f32 0.0, %v1850
    %v1852 = vpop.f32.mrb[0].mxu0
    %v1853 = vadd.f32 0.0, %v1852
    %v1854 = vpop.f32.mrb[0].mxu0
    %v1855 = vadd.f32 0.0, %v1854
    %1856 = vdwg.mxu0
    %v1857 = vunpack.c.l.bf16 %v1800
    %v1858 = vunpack.c.l.bf16 %v1801
    %v1859 = vunpack.c.h.bf16 %v1800
    %v1860 = vunpack.c.h.bf16 %v1801
    %v1861 = vunpack.c.l.bf16 %v1802
    %v1862 = vunpack.c.l.bf16 %v1803
    %v1863 = vunpack.c.h.bf16 %v1802
    %v1864 = vunpack.c.h.bf16 %v1803
    %v1865 = vadd.f32 %v1857, %v1839
    %v1866 = vadd.f32 %v1858, %v1841
    %v1867 = vadd.f32 %v1859, %v1843
    %v1868 = vadd.f32 %v1860, %v1845
    %v1869 = vadd.f32 %v1861, %v1849
    %v1870 = vadd.f32 %v1862, %v1851
    %v1871 = vadd.f32 %v1863, %v1853
    %v1872 = vadd.f32 %v1864, %v1855
    %v1873 = vpack.c.bf16 %v1867, %v1865
    %v1874 = vpack.c.bf16 %v1868, %v1866
    %v1875 = vpack.c.bf16 %v1871, %v1869
    %v1876 = vpack.c.bf16 %v1872, %v1870
    %v1877 = vxor.u32 %v1873, 2147516416
    %v1878 = vxor.u32 %v1875, 2147516416
    %v1880 = vmul.bf16 %v1877, 1069105081
    %v1881 = vpow.bf16.pop %v1880
    %v1883 = vmul.bf16 %v1878, 1069105081
    %v1884 = vpow.bf16.pop %v1883
    %v1885 = vadd.bf16 %v1881, 1065369472
    %v1886 = vadd.bf16 %v1884, 1065369472
    %v1887 = vrcp.bf16.pop %v1885
    %v1888 = vmul.bf16 1065369472, %v1887
    %v1889 = vrcp.bf16.pop %v1886
    %v1890 = vmul.bf16 1065369472, %v1889
    %v1891 = vxor.u32 %v1874, 2147516416
    %v1892 = vxor.u32 %v1876, 2147516416
    %v1894 = vmul.bf16 %v1891, 1069105081
    %v1895 = vpow.bf16.pop %v1894
    %v1897 = vmul.bf16 %v1892, 1069105081
    %v1898 = vpow.bf16.pop %v1897
    %v1899 = vadd.bf16 %v1895, 1065369472
    %v1900 = vadd.bf16 %v1898, 1065369472
    %v1901 = vrcp.bf16.pop %v1899
    %v1902 = vmul.bf16 1065369472, %v1901
    %v1903 = vrcp.bf16.pop %v1900
    %v1904 = vmul.bf16 1065369472, %v1903
    %v1905 = vld [vmem:[#allocation2 + $0x90] sm:$0xff]
    %v1906 = vld [vmem:[#allocation2 + $0x98] sm:$0xff]
    %v1907 = vld [vmem:[#allocation2 + $0xb0] sm:$0xff]
    %v1908 = vld [vmem:[#allocation2 + $0xb8] sm:$0xff]
    %1909 = vmatprep.subr.bf16.mxu0 %v1345
    %1910 = vmatpush1.bf16.msra.mxu0 %v1344
    %1911 = vmatprep.subr.bf16.mxu0 %v1347
    %1912 = vmatpush1.bf16.msra.mxu0 %v1346
    %1913 = vmatprep.subr.bf16.mxu0 %v1349
    %1914 = vmatpush1.bf16.msra.mxu0 %v1348
    %1915 = vmatprep.subr.bf16.mxu0 %v1351
    %1916 = vmatpush1.bf16.msra.mxu0 %v1350
    %1917 = vmatprep.subr.bf16.mxu0 %v1353
    %1918 = vmatpush1.bf16.msra.mxu0 %v1352
    %1919 = vmatprep.subr.bf16.mxu0 %v1355
    %1920 = vmatpush1.bf16.msra.mxu0 %v1354
    %1921 = vmatprep.subr.bf16.mxu0 %v1357
    %1922 = vmatpush1.bf16.msra.mxu0 %v1356
    %1923 = vmatprep.subr.bf16.mxu0 %v1359
    %1924 = vmatpush1.bf16.msra.mxu0 %v1358
    %1925 = vmatprep.subr.bf16.mxu0 0
    %1926 = vmatpush1.bf16.msra.mxu0 0
    %1927 = vmatprep.subr.bf16.mxu0 0
    %1928 = vmatpush1.bf16.msra.mxu0 0
    %1929 = vmatprep.subr.bf16.mxu0 0
    %1930 = vmatpush1.bf16.msra.mxu0 0
    %1931 = vmatprep.subr.bf16.mxu0 0
    %1932 = vmatpush1.bf16.msra.mxu0 0
    %1933 = vmatprep.subr.bf16.mxu0 0
    %1934 = vmatpush1.bf16.msra.mxu0 0
    %1935 = vmatprep.subr.bf16.mxu0 0
    %1936 = vmatpush1.bf16.msra.mxu0 0
    %1937 = vmatprep.subr.bf16.mxu0 0
    %1938 = vmatpush1.bf16.msra.mxu0 0
    %1939 = vmatprep.subr.bf16.mxu0 0
    %1940 = vmatpush1.bf16.msra.mxu0 0
    %1941 = vmatprep.mubr.bf16.mxu0 0
    %1942 = vmatmul.mubr.bf16.gmra.mrb[0].mxu0 %v1754
    %v1943 = vpop.f32.mrb[0].mxu0
    %v1944 = vadd.f32 0.0, %v1943
    %v1945 = vpop.f32.mrb[0].mxu0
    %v1946 = vadd.f32 0.0, %v1945
    %v1947 = vpop.f32.mrb[0].mxu0
    %v1948 = vadd.f32 0.0, %v1947
    %v1949 = vpop.f32.mrb[0].mxu0
    %v1950 = vadd.f32 0.0, %v1949
    %1951 = vmatprep.mubr.bf16.mxu0 0
    %1952 = vmatmul.mubr.bf16.gmra.mrb[0].mxu0 %v1755
    %v1953 = vpop.f32.mrb[0].mxu0
    %v1954 = vadd.f32 0.0, %v1953
    %v1955 = vpop.f32.mrb[0].mxu0
    %v1956 = vadd.f32 0.0, %v1955
    %v1957 = vpop.f32.mrb[0].mxu0
    %v1958 = vadd.f32 0.0, %v1957
    %v1959 = vpop.f32.mrb[0].mxu0
    %v1960 = vadd.f32 0.0, %v1959
    %1961 = vdwg.mxu0
    %v1962 = vunpack.c.l.bf16 %v1905
    %v1963 = vunpack.c.l.bf16 %v1906
    %v1964 = vunpack.c.h.bf16 %v1905
    %v1965 = vunpack.c.h.bf16 %v1906
    %v1966 = vunpack.c.l.bf16 %v1907
    %v1967 = vunpack.c.l.bf16 %v1908
    %v1968 = vunpack.c.h.bf16 %v1907
    %v1969 = vunpack.c.h.bf16 %v1908
    %v1970 = vadd.f32 %v1962, %v1944
    %v1971 = vadd.f32 %v1963, %v1946
    %v1972 = vadd.f32 %v1964, %v1948
    %v1973 = vadd.f32 %v1965, %v1950
    %v1974 = vadd.f32 %v1966, %v1954
    %v1975 = vadd.f32 %v1967, %v1956
    %v1976 = vadd.f32 %v1968, %v1958
    %v1977 = vadd.f32 %v1969, %v1960
    %v1978 = vpack.c.bf16 %v1972, %v1970
    %v1979 = vpack.c.bf16 %v1973, %v1971
    %v1980 = vpack.c.bf16 %v1976, %v1974
    %v1981 = vpack.c.bf16 %v1977, %v1975
    %v1982 = vtanh.bf16.pop %v1978
    %v1983 = vtanh.bf16.pop %v1980
    %v1984 = vxor.u32 %v1979, 2147516416
    %v1985 = vxor.u32 %v1981, 2147516416
    %v1987 = vmul.bf16 %v1984, 1069105081
    %v1988 = vpow.bf16.pop %v1987
    %v1990 = vmul.bf16 %v1985, 1069105081
    %v1991 = vpow.bf16.pop %v1990
    %v1992 = vadd.bf16 %v1988, 1065369472
    %v1993 = vadd.bf16 %v1991, 1065369472
    %v1994 = vrcp.bf16.pop %v1992
    %v1995 = vmul.bf16 1065369472, %v1994
    %v1996 = vrcp.bf16.pop %v1993
    %v1997 = vmul.bf16 1065369472, %v1996
    %v1998 = vunpack.c.l.bf16 %v1902
    %v1999 = vunpack.c.h.bf16 %v1902
    %v2000 = vunpack.c.l.bf16 %v1904
    %v2001 = vunpack.c.h.bf16 %v1904
    %v2002 = vmul.f32 %v1998, %v1746
    %v2003 = vmul.f32 %v1999, %v1747
    %v2004 = vmul.f32 %v2000, %v1748
    %v2005 = vmul.f32 %v2001, %v1749
    %v2006 = vmul.bf16 %v1888, %v1982
    %v2007 = vmul.bf16 %v1890, %v1983
    %v2008 = vunpack.c.l.bf16 %v2006
    %v2009 = vunpack.c.h.bf16 %v2006
    %v2010 = vunpack.c.l.bf16 %v2007
    %v2011 = vunpack.c.h.bf16 %v2007
    %v2012 = vadd.f32 %v2002, %v2008
    %v2013 = vadd.f32 %v2003, %v2009
    %v2014 = vadd.f32 %v2004, %v2010
    %v2015 = vadd.f32 %v2005, %v2011
    %v2016 = vpack.c.bf16 %v2013, %v2012
    %v2017 = vpack.c.bf16 %v2015, %v2014
    %v2018 = vtanh.bf16.pop %v2016
    %v2019 = vtanh.bf16.pop %v2017
    %v2020 = vmul.bf16 %v1995, %v2018
    %v2021 = vmul.bf16 %v1997, %v2019
    %2022 = vmatprep.subr.bf16.mxu0 0
    %2023 = vmatpush1.bf16.xpose.msra.mxu0 %v2020
    %2024 = vmatprep.subr.bf16.mxu0 0
    %2025 = vmatpush1.bf16.xpose.msra.mxu0 %v2021
    %2026 = vmatprep.subr.bf16.mxu0 0
    %2027 = vmatpush1.bf16.xpose.msra.mxu0 0
    %2028 = vmatprep.subr.bf16.mxu0 0
    %2029 = vmatpush1.bf16.xpose.msra.mxu0 0
    %2030 = vmatprep.subr.bf16.mxu0 0
    %2031 = vmatpush1.bf16.xpose.msra.mxu0 0
    %2032 = vmatprep.subr.bf16.mxu0 0
    %2033 = vmatpush1.bf16.xpose.msra.mxu0 0
    %2034 = vmatprep.subr.bf16.mxu0 0
    %2035 = vmatpush1.bf16.xpose.msra.mxu0 0
    %2036 = vmatprep.subr.bf16.mxu0 0
    %2037 = vmatpush1.bf16.xpose.msra.mxu0 0
    %2038 = vmatprep.subr.bf16.mxu0 0
    %2039 = vmatpush1.bf16.xpose.msra.mxu0 0
    %2040 = vmatprep.subr.bf16.mxu0 0
    %2041 = vmatpush1.bf16.xpose.msra.mxu0 0
    %2042 = vmatprep.subr.bf16.mxu0 0
    %2043 = vmatpush1.bf16.xpose.msra.mxu0 0
    %2044 = vmatprep.subr.bf16.mxu0 0
    %2045 = vmatpush1.bf16.xpose.msra.mxu0 0
    %2046 = vmatprep.subr.bf16.mxu0 0
    %2047 = vmatpush1.bf16.xpose.msra.mxu0 0
    %2048 = vmatprep.subr.bf16.mxu0 0
    %2049 = vmatpush1.bf16.xpose.msra.mxu0 0
    %2050 = vmatprep.subr.bf16.mxu0 0
    %2051 = vmatpush1.bf16.xpose.msra.mxu0 0
    %2052 = vmatprep.subr.bf16.mxu0 0
    %2053 = vmatpush1.bf16.xpose.msra.mxu0 0
    %2054 = vmatprep.mubr.bf16.mxu0 0
    %2055 = vmatmul.mubr.bf16.gmra.mrb[0].mxu0 %v1489
    %v2056 = vpop.f32.mrb[0].mxu0
    %v2057 = vadd.f32 0.0, %v2056
    %v2058 = vpop.f32.mrb[0].mxu0
    %v2059 = vpop.f32.mrb[0].mxu0
    %v2060 = vpop.f32.mrb[0].mxu0
    %2061 = vdwg.mxu0
    %s2062 = sld [smem:[#allocation4 + $0x2]]
    %v2063 = vstv %s2062
    %v2064 = vmul.f32 %v2063, %v2057
    %v2065 = vadd.f32 %v1799, %v2064
    %v2066 = vld [vmem:[#allocation2 + $0xc0] sm:$0xff]
    %v2067 = vld [vmem:[#allocation2 + $0xc8] sm:$0xff]
    %v2068 = vld [vmem:[#allocation2 + $0xe0] sm:$0xff]
    %v2069 = vld [vmem:[#allocation2 + $0xe8] sm:$0xff]
    %2070 = vmatprep.subr.bf16.mxu0 %v1144
    %2071 = vmatpush1.bf16.msra.mxu0 %v1143
    %2072 = vmatprep.subr.bf16.mxu0 %v1146
    %2073 = vmatpush1.bf16.msra.mxu0 %v1145
    %2074 = vmatprep.subr.bf16.mxu0 %v1148
    %2075 = vmatpush1.bf16.msra.mxu0 %v1147
    %2076 = vmatprep.subr.bf16.mxu0 %v1150
    %2077 = vmatpush1.bf16.msra.mxu0 %v1149
    %2078 = vmatprep.subr.bf16.mxu0 %v1152
    %2079 = vmatpush1.bf16.msra.mxu0 %v1151
    %2080 = vmatprep.subr.bf16.mxu0 %v1154
    %2081 = vmatpush1.bf16.msra.mxu0 %v1153
    %2082 = vmatprep.subr.bf16.mxu0 %v1156
    %2083 = vmatpush1.bf16.msra.mxu0 %v1155
    %2084 = vmatprep.subr.bf16.mxu0 %v1158
    %2085 = vmatpush1.bf16.msra.mxu0 %v1157
    %2086 = vmatprep.subr.bf16.mxu0 0
    %2087 = vmatpush1.bf16.msra.mxu0 0
    %2088 = vmatprep.subr.bf16.mxu0 0
    %2089 = vmatpush1.bf16.msra.mxu0 0
    %2090 = vmatprep.subr.bf16.mxu0 0
    %2091 = vmatpush1.bf16.msra.mxu0 0
    %2092 = vmatprep.subr.bf16.mxu0 0
    %2093 = vmatpush1.bf16.msra.mxu0 0
    %2094 = vmatprep.subr.bf16.mxu0 0
    %2095 = vmatpush1.bf16.msra.mxu0 0
    %2096 = vmatprep.subr.bf16.mxu0 0
    %2097 = vmatpush1.bf16.msra.mxu0 0
    %2098 = vmatprep.subr.bf16.mxu0 0
    %2099 = vmatpush1.bf16.msra.mxu0 0
    %2100 = vmatprep.subr.bf16.mxu0 0
    %2101 = vmatpush1.bf16.msra.mxu0 0
    %2102 = vmatprep.mubr.bf16.mxu0 0
    %2103 = vmatmul.mubr.bf16.gmra.mrb[0].mxu0 %v2020
    %v2104 = vpop.f32.mrb[0].mxu0
    %v2105 = vadd.f32 0.0, %v2104
    %v2106 = vpop.f32.mrb[0].mxu0
    %v2107 = vadd.f32 0.0, %v2106
    %v2108 = vpop.f32.mrb[0].mxu0
    %v2109 = vadd.f32 0.0, %v2108
    %v2110 = vpop.f32.mrb[0].mxu0
    %v2111 = vadd.f32 0.0, %v2110
    %2112 = vmatprep.mubr.bf16.mxu0 0
    %2113 = vmatmul.mubr.bf16.gmra.mrb[0].mxu0 %v2021
    %v2114 = vpop.f32.mrb[0].mxu0
    %v2115 = vadd.f32 0.0, %v2114
    %v2116 = vpop.f32.mrb[0].mxu0
    %v2117 = vadd.f32 0.0, %v2116
    %v2118 = vpop.f32.mrb[0].mxu0
    %v2119 = vadd.f32 0.0, %v2118
    %v2120 = vpop.f32.mrb[0].mxu0
    %v2121 = vadd.f32 0.0, %v2120
    %2122 = vdwg.mxu0
    %v2123 = vunpack.c.l.bf16 %v2066
    %v2124 = vunpack.c.l.bf16 %v2067
    %v2125 = vunpack.c.h.bf16 %v2066
    %v2126 = vunpack.c.h.bf16 %v2067
    %v2127 = vunpack.c.l.bf16 %v2068
    %v2128 = vunpack.c.l.bf16 %v2069
    %v2129 = vunpack.c.h.bf16 %v2068
    %v2130 = vunpack.c.h.bf16 %v2069
    %v2131 = vadd.f32 %v2123, %v2105
    %v2132 = vadd.f32 %v2124, %v2107
    %v2133 = vadd.f32 %v2125, %v2109
    %v2134 = vadd.f32 %v2126, %v2111
    %v2135 = vadd.f32 %v2127, %v2115
    %v2136 = vadd.f32 %v2128, %v2117
    %v2137 = vadd.f32 %v2129, %v2119
    %v2138 = vadd.f32 %v2130, %v2121
    %v2139 = vpack.c.bf16 %v2133, %v2131
    %v2140 = vpack.c.bf16 %v2134, %v2132
    %v2141 = vpack.c.bf16 %v2137, %v2135
    %v2142 = vpack.c.bf16 %v2138, %v2136
    %v2143 = vxor.u32 %v2139, 2147516416
    %v2144 = vxor.u32 %v2141, 2147516416
    %v2146 = vmul.bf16 %v2143, 1069105081
    %v2147 = vpow.bf16.pop %v2146
    %v2149 = vmul.bf16 %v2144, 1069105081
    %v2150 = vpow.bf16.pop %v2149
    %v2151 = vadd.bf16 %v2147, 1065369472
    %v2152 = vadd.bf16 %v2150, 1065369472
    %v2153 = vrcp.bf16.pop %v2151
    %v2154 = vmul.bf16 1065369472, %v2153
    %v2155 = vrcp.bf16.pop %v2152
    %v2156 = vmul.bf16 1065369472, %v2155
    %v2157 = vxor.u32 %v2140, 2147516416
    %v2158 = vxor.u32 %v2142, 2147516416
    %v2160 = vmul.bf16 %v2157, 1069105081
    %v2161 = vpow.bf16.pop %v2160
    %v2163 = vmul.bf16 %v2158, 1069105081
    %v2164 = vpow.bf16.pop %v2163
    %v2165 = vadd.bf16 %v2161, 1065369472
    %v2166 = vadd.bf16 %v2164, 1065369472
    %v2167 = vrcp.bf16.pop %v2165
    %v2168 = vmul.bf16 1065369472, %v2167
    %v2169 = vrcp.bf16.pop %v2166
    %v2170 = vmul.bf16 1065369472, %v2169
    %v2171 = vld [vmem:[#allocation2 + $0xd0] sm:$0xff]
    %v2172 = vld [vmem:[#allocation2 + $0xd8] sm:$0xff]
    %v2173 = vld [vmem:[#allocation2 + $0xf0] sm:$0xff]
    %v2174 = vld [vmem:[#allocation2 + $0xf8] sm:$0xff]
    %2175 = vmatprep.subr.bf16.mxu0 %v1345
    %2176 = vmatpush1.bf16.msra.mxu0 %v1344
    %2177 = vmatprep.subr.bf16.mxu0 %v1347
    %2178 = vmatpush1.bf16.msra.mxu0 %v1346
    %2179 = vmatprep.subr.bf16.mxu0 %v1349
    %2180 = vmatpush1.bf16.msra.mxu0 %v1348
    %2181 = vmatprep.subr.bf16.mxu0 %v1351
    %2182 = vmatpush1.bf16.msra.mxu0 %v1350
    %2183 = vmatprep.subr.bf16.mxu0 %v1353
    %2184 = vmatpush1.bf16.msra.mxu0 %v1352
    %2185 = vmatprep.subr.bf16.mxu0 %v1355
    %2186 = vmatpush1.bf16.msra.mxu0 %v1354
    %2187 = vmatprep.subr.bf16.mxu0 %v1357
    %2188 = vmatpush1.bf16.msra.mxu0 %v1356
    %2189 = vmatprep.subr.bf16.mxu0 %v1359
    %2190 = vmatpush1.bf16.msra.mxu0 %v1358
    %2191 = vmatprep.subr.bf16.mxu0 0
    %2192 = vmatpush1.bf16.msra.mxu0 0
    %2193 = vmatprep.subr.bf16.mxu0 0
    %2194 = vmatpush1.bf16.msra.mxu0 0
    %2195 = vmatprep.subr.bf16.mxu0 0
    %2196 = vmatpush1.bf16.msra.mxu0 0
    %2197 = vmatprep.subr.bf16.mxu0 0
    %2198 = vmatpush1.bf16.msra.mxu0 0
    %2199 = vmatprep.subr.bf16.mxu0 0
    %2200 = vmatpush1.bf16.msra.mxu0 0
    %2201 = vmatprep.subr.bf16.mxu0 0
    %2202 = vmatpush1.bf16.msra.mxu0 0
    %2203 = vmatprep.subr.bf16.mxu0 0
    %2204 = vmatpush1.bf16.msra.mxu0 0
    %2205 = vmatprep.subr.bf16.mxu0 0
    %2206 = vmatpush1.bf16.msra.mxu0 0
    %2207 = vmatprep.mubr.bf16.mxu0 0
    %2208 = vmatmul.mubr.bf16.gmra.mrb[0].mxu0 %v2020
    %v2209 = vpop.f32.mrb[0].mxu0
    %v2210 = vadd.f32 0.0, %v2209
    %v2211 = vpop.f32.mrb[0].mxu0
    %v2212 = vadd.f32 0.0, %v2211
    %v2213 = vpop.f32.mrb[0].mxu0
    %v2214 = vadd.f32 0.0, %v2213
    %v2215 = vpop.f32.mrb[0].mxu0
    %v2216 = vadd.f32 0.0, %v2215
    %2217 = vmatprep.mubr.bf16.mxu0 0
    %2218 = vmatmul.mubr.bf16.gmra.mrb[0].mxu0 %v2021
    %v2219 = vpop.f32.mrb[0].mxu0
    %v2220 = vadd.f32 0.0, %v2219
    %v2221 = vpop.f32.mrb[0].mxu0
    %v2222 = vadd.f32 0.0, %v2221
    %v2223 = vpop.f32.mrb[0].mxu0
    %v2224 = vadd.f32 0.0, %v2223
    %v2225 = vpop.f32.mrb[0].mxu0
    %v2226 = vadd.f32 0.0, %v2225
    %2227 = vdwg.mxu0
    %v2228 = vunpack.c.l.bf16 %v2171
    %v2229 = vunpack.c.l.bf16 %v2172
    %v2230 = vunpack.c.h.bf16 %v2171
    %v2231 = vunpack.c.h.bf16 %v2172
    %v2232 = vunpack.c.l.bf16 %v2173
    %v2233 = vunpack.c.l.bf16 %v2174
    %v2234 = vunpack.c.h.bf16 %v2173
    %v2235 = vunpack.c.h.bf16 %v2174
    %v2236 = vadd.f32 %v2228, %v2210
    %v2237 = vadd.f32 %v2229, %v2212
    %v2238 = vadd.f32 %v2230, %v2214
    %v2239 = vadd.f32 %v2231, %v2216
    %v2240 = vadd.f32 %v2232, %v2220
    %v2241 = vadd.f32 %v2233, %v2222
    %v2242 = vadd.f32 %v2234, %v2224
    %v2243 = vadd.f32 %v2235, %v2226
    %v2244 = vpack.c.bf16 %v2238, %v2236
    %v2245 = vpack.c.bf16 %v2239, %v2237
    %v2246 = vpack.c.bf16 %v2242, %v2240
    %v2247 = vpack.c.bf16 %v2243, %v2241
    %v2248 = vtanh.bf16.pop %v2244
    %v2249 = vtanh.bf16.pop %v2246
    %v2250 = vxor.u32 %v2245, 2147516416
    %v2251 = vxor.u32 %v2247, 2147516416
    %v2253 = vmul.bf16 %v2250, 1069105081
    %v2254 = vpow.bf16.pop %v2253
    %v2256 = vmul.bf16 %v2251, 1069105081
    %v2257 = vpow.bf16.pop %v2256
    %v2258 = vadd.bf16 %v2254, 1065369472
    %v2259 = vadd.bf16 %v2257, 1065369472
    %v2260 = vrcp.bf16.pop %v2258
    %v2261 = vmul.bf16 1065369472, %v2260
    %v2262 = vrcp.bf16.pop %v2259
    %v2263 = vmul.bf16 1065369472, %v2262
    %v2264 = vunpack.c.l.bf16 %v2168
    %v2265 = vunpack.c.h.bf16 %v2168
    %v2266 = vunpack.c.l.bf16 %v2170
    %v2267 = vunpack.c.h.bf16 %v2170
    %v2268 = vmul.f32 %v2264, %v2012
    %v2269 = vmul.f32 %v2265, %v2013
    %v2270 = vmul.f32 %v2266, %v2014
    %v2271 = vmul.f32 %v2267, %v2015
    %v2272 = vmul.bf16 %v2154, %v2248
    %v2273 = vmul.bf16 %v2156, %v2249
    %v2274 = vunpack.c.l.bf16 %v2272
    %v2275 = vunpack.c.h.bf16 %v2272
    %v2276 = vunpack.c.l.bf16 %v2273
    %v2277 = vunpack.c.h.bf16 %v2273
    %v2278 = vadd.f32 %v2268, %v2274
    %v2279 = vadd.f32 %v2269, %v2275
    %v2280 = vadd.f32 %v2270, %v2276
    %v2281 = vadd.f32 %v2271, %v2277
    %v2282 = vpack.c.bf16 %v2279, %v2278
    %v2283 = vpack.c.bf16 %v2281, %v2280
    %v2284 = vtanh.bf16.pop %v2282
    %v2285 = vtanh.bf16.pop %v2283
    %v2286 = vmul.bf16 %v2261, %v2284
    %v2287 = vmul.bf16 %v2263, %v2285
    %2288 = vmatprep.subr.bf16.mxu0 0
    %2289 = vmatpush1.bf16.xpose.msra.mxu0 %v2286
    %2290 = vmatprep.subr.bf16.mxu0 0
    %2291 = vmatpush1.bf16.xpose.msra.mxu0 %v2287
    %2292 = vmatprep.subr.bf16.mxu0 0
    %2293 = vmatpush1.bf16.xpose.msra.mxu0 0
    %2294 = vmatprep.subr.bf16.mxu0 0
    %2295 = vmatpush1.bf16.xpose.msra.mxu0 0
    %2296 = vmatprep.subr.bf16.mxu0 0
    %2297 = vmatpush1.bf16.xpose.msra.mxu0 0
    %2298 = vmatprep.subr.bf16.mxu0 0
    %2299 = vmatpush1.bf16.xpose.msra.mxu0 0
    %2300 = vmatprep.subr.bf16.mxu0 0
    %2301 = vmatpush1.bf16.xpose.msra.mxu0 0
    %2302 = vmatprep.subr.bf16.mxu0 0
    %2303 = vmatpush1.bf16.xpose.msra.mxu0 0
    %2304 = vmatprep.subr.bf16.mxu0 0
    %2305 = vmatpush1.bf16.xpose.msra.mxu0 0
    %2306 = vmatprep.subr.bf16.mxu0 0
    %2307 = vmatpush1.bf16.xpose.msra.mxu0 0
    %2308 = vmatprep.subr.bf16.mxu0 0
    %2309 = vmatpush1.bf16.xpose.msra.mxu0 0
    %2310 = vmatprep.subr.bf16.mxu0 0
    %2311 = vmatpush1.bf16.xpose.msra.mxu0 0
    %2312 = vmatprep.subr.bf16.mxu0 0
    %2313 = vmatpush1.bf16.xpose.msra.mxu0 0
    %2314 = vmatprep.subr.bf16.mxu0 0
    %2315 = vmatpush1.bf16.xpose.msra.mxu0 0
    %2316 = vmatprep.subr.bf16.mxu0 0
    %2317 = vmatpush1.bf16.xpose.msra.mxu0 0
    %2318 = vmatprep.subr.bf16.mxu0 0
    %2319 = vmatpush1.bf16.xpose.msra.mxu0 0
    %2320 = vmatprep.mubr.bf16.mxu0 0
    %2321 = vmatmul.mubr.bf16.gmra.mrb[0].mxu0 %v1489
    %v2322 = vpop.f32.mrb[0].mxu0
    %v2323 = vadd.f32 0.0, %v2322
    %v2324 = vpop.f32.mrb[0].mxu0
    %v2325 = vpop.f32.mrb[0].mxu0
    %v2326 = vpop.f32.mrb[0].mxu0
    %2327 = vdwg.mxu0
    %s2328 = sld [smem:[#allocation4 + $0x3]]
    %v2329 = vstv %s2328
    %v2330 = vmul.f32 %v2329, %v2323
    %v2331 = vadd.f32 %v2065, %v2330
    %v2332 = vld [vmem:[#allocation2 + $0x100] sm:$0xff]
    %v2333 = vld [vmem:[#allocation2 + $0x108] sm:$0xff]
    %v2334 = vld [vmem:[#allocation2 + $0x120] sm:$0xff]
    %v2335 = vld [vmem:[#allocation2 + $0x128] sm:$0xff]
    %2336 = vmatprep.subr.bf16.mxu0 %v1144
    %2337 = vmatpush1.bf16.msra.mxu0 %v1143
    %2338 = vmatprep.subr.bf16.mxu0 %v1146
    %2339 = vmatpush1.bf16.msra.mxu0 %v1145
    %2340 = vmatprep.subr.bf16.mxu0 %v1148
    %2341 = vmatpush1.bf16.msra.mxu0 %v1147
    %2342 = vmatprep.subr.bf16.mxu0 %v1150
    %2343 = vmatpush1.bf16.msra.mxu0 %v1149
    %2344 = vmatprep.subr.bf16.mxu0 %v1152
    %2345 = vmatpush1.bf16.msra.mxu0 %v1151
    %2346 = vmatprep.subr.bf16.mxu0 %v1154
    %2347 = vmatpush1.bf16.msra.mxu0 %v1153
    %2348 = vmatprep.subr.bf16.mxu0 %v1156
    %2349 = vmatpush1.bf16.msra.mxu0 %v1155
    %2350 = vmatprep.subr.bf16.mxu0 %v1158
    %2351 = vmatpush1.bf16.msra.mxu0 %v1157
    %2352 = vmatprep.subr.bf16.mxu0 0
    %2353 = vmatpush1.bf16.msra.mxu0 0
    %2354 = vmatprep.subr.bf16.mxu0 0
    %2355 = vmatpush1.bf16.msra.mxu0 0
    %2356 = vmatprep.subr.bf16.mxu0 0
    %2357 = vmatpush1.bf16.msra.mxu0 0
    %2358 = vmatprep.subr.bf16.mxu0 0
    %2359 = vmatpush1.bf16.msra.mxu0 0
    %2360 = vmatprep.subr.bf16.mxu0 0
    %2361 = vmatpush1.bf16.msra.mxu0 0
    %2362 = vmatprep.subr.bf16.mxu0 0
    %2363 = vmatpush1.bf16.msra.mxu0 0
    %2364 = vmatprep.subr.bf16.mxu0 0
    %2365 = vmatpush1.bf16.msra.mxu0 0
    %2366 = vmatprep.subr.bf16.mxu0 0
    %2367 = vmatpush1.bf16.msra.mxu0 0
    %2368 = vmatprep.mubr.bf16.mxu0 0
    %2369 = vmatmul.mubr.bf16.gmra.mrb[0].mxu0 %v2286
    %v2370 = vpop.f32.mrb[0].mxu0
    %v2371 = vadd.f32 0.0, %v2370
    %v2372 = vpop.f32.mrb[0].mxu0
    %v2373 = vadd.f32 0.0, %v2372
    %v2374 = vpop.f32.mrb[0].mxu0
    %v2375 = vadd.f32 0.0, %v2374
    %v2376 = vpop.f32.mrb[0].mxu0
    %v2377 = vadd.f32 0.0, %v2376
    %2378 = vmatprep.mubr.bf16.mxu0 0
    %2379 = vmatmul.mubr.bf16.gmra.mrb[0].mxu0 %v2287
    %v2380 = vpop.f32.mrb[0].mxu0
    %v2381 = vadd.f32 0.0, %v2380
    %v2382 = vpop.f32.mrb[0].mxu0
    %v2383 = vadd.f32 0.0, %v2382
    %v2384 = vpop.f32.mrb[0].mxu0
    %v2385 = vadd.f32 0.0, %v2384
    %v2386 = vpop.f32.mrb[0].mxu0
    %v2387 = vadd.f32 0.0, %v2386
    %2388 = vdwg.mxu0
    %v2389 = vunpack.c.l.bf16 %v2332
    %v2390 = vunpack.c.l.bf16 %v2333
    %v2391 = vunpack.c.h.bf16 %v2332
    %v2392 = vunpack.c.h.bf16 %v2333
    %v2393 = vunpack.c.l.bf16 %v2334
    %v2394 = vunpack.c.l.bf16 %v2335
    %v2395 = vunpack.c.h.bf16 %v2334
    %v2396 = vunpack.c.h.bf16 %v2335
    %v2397 = vadd.f32 %v2389, %v2371
    %v2398 = vadd.f32 %v2390, %v2373
    %v2399 = vadd.f32 %v2391, %v2375
    %v2400 = vadd.f32 %v2392, %v2377
    %v2401 = vadd.f32 %v2393, %v2381
    %v2402 = vadd.f32 %v2394, %v2383
    %v2403 = vadd.f32 %v2395, %v2385
    %v2404 = vadd.f32 %v2396, %v2387
    %v2405 = vpack.c.bf16 %v2399, %v2397
    %v2406 = vpack.c.bf16 %v2400, %v2398
    %v2407 = vpack.c.bf16 %v2403, %v2401
    %v2408 = vpack.c.bf16 %v2404, %v2402
    %v2409 = vxor.u32 %v2405, 2147516416
    %v2410 = vxor.u32 %v2407, 2147516416
    %v2412 = vmul.bf16 %v2409, 1069105081
    %v2413 = vpow.bf16.pop %v2412
    %v2415 = vmul.bf16 %v2410, 1069105081
    %v2416 = vpow.bf16.pop %v2415
    %v2417 = vadd.bf16 %v2413, 1065369472
    %v2418 = vadd.bf16 %v2416, 1065369472
    %v2419 = vrcp.bf16.pop %v2417
    %v2420 = vmul.bf16 1065369472, %v2419
    %v2421 = vrcp.bf16.pop %v2418
    %v2422 = vmul.bf16 1065369472, %v2421
    %v2423 = vxor.u32 %v2406, 2147516416
    %v2424 = vxor.u32 %v2408, 2147516416
    %v2426 = vmul.bf16 %v2423, 1069105081
    %v2427 = vpow.bf16.pop %v2426
    %v2429 = vmul.bf16 %v2424, 1069105081
    %v2430 = vpow.bf16.pop %v2429
    %v2431 = vadd.bf16 %v2427, 1065369472
    %v2432 = vadd.bf16 %v2430, 1065369472
    %v2433 = vrcp.bf16.pop %v2431
    %v2434 = vmul.bf16 1065369472, %v2433
    %v2435 = vrcp.bf16.pop %v2432
    %v2436 = vmul.bf16 1065369472, %v2435
    %v2437 = vld [vmem:[#allocation2 + $0x110] sm:$0xff]
    %v2438 = vld [vmem:[#allocation2 + $0x118] sm:$0xff]
    %v2439 = vld [vmem:[#allocation2 + $0x130] sm:$0xff]
    %v2440 = vld [vmem:[#allocation2 + $0x138] sm:$0xff]
    %2441 = vmatprep.subr.bf16.mxu0 %v1345
    %2442 = vmatpush1.bf16.msra.mxu0 %v1344
    %2443 = vmatprep.subr.bf16.mxu0 %v1347
    %2444 = vmatpush1.bf16.msra.mxu0 %v1346
    %2445 = vmatprep.subr.bf16.mxu0 %v1349
    %2446 = vmatpush1.bf16.msra.mxu0 %v1348
    %2447 = vmatprep.subr.bf16.mxu0 %v1351
    %2448 = vmatpush1.bf16.msra.mxu0 %v1350
    %2449 = vmatprep.subr.bf16.mxu0 %v1353
    %2450 = vmatpush1.bf16.msra.mxu0 %v1352
    %2451 = vmatprep.subr.bf16.mxu0 %v1355
    %2452 = vmatpush1.bf16.msra.mxu0 %v1354
    %2453 = vmatprep.subr.bf16.mxu0 %v1357
    %2454 = vmatpush1.bf16.msra.mxu0 %v1356
    %2455 = vmatprep.subr.bf16.mxu0 %v1359
    %2456 = vmatpush1.bf16.msra.mxu0 %v1358
    %2457 = vmatprep.subr.bf16.mxu0 0
    %2458 = vmatpush1.bf16.msra.mxu0 0
    %2459 = vmatprep.subr.bf16.mxu0 0
    %2460 = vmatpush1.bf16.msra.mxu0 0
    %2461 = vmatprep.subr.bf16.mxu0 0
    %2462 = vmatpush1.bf16.msra.mxu0 0
    %2463 = vmatprep.subr.bf16.mxu0 0
    %2464 = vmatpush1.bf16.msra.mxu0 0
    %2465 = vmatprep.subr.bf16.mxu0 0
    %2466 = vmatpush1.bf16.msra.mxu0 0
    %2467 = vmatprep.subr.bf16.mxu0 0
    %2468 = vmatpush1.bf16.msra.mxu0 0
    %2469 = vmatprep.subr.bf16.mxu0 0
    %2470 = vmatpush1.bf16.msra.mxu0 0
    %2471 = vmatprep.subr.bf16.mxu0 0
    %2472 = vmatpush1.bf16.msra.mxu0 0
    %2473 = vmatprep.mubr.bf16.mxu0 0
    %2474 = vmatmul.mubr.bf16.gmra.mrb[0].mxu0 %v2286
    %v2475 = vpop.f32.mrb[0].mxu0
    %v2476 = vadd.f32 0.0, %v2475
    %v2477 = vpop.f32.mrb[0].mxu0
    %v2478 = vadd.f32 0.0, %v2477
    %v2479 = vpop.f32.mrb[0].mxu0
    %v2480 = vadd.f32 0.0, %v2479
    %v2481 = vpop.f32.mrb[0].mxu0
    %v2482 = vadd.f32 0.0, %v2481
    %2483 = vmatprep.mubr.bf16.mxu0 0
    %2484 = vmatmul.mubr.bf16.gmra.mrb[0].mxu0 %v2287
    %v2485 = vpop.f32.mrb[0].mxu0
    %v2486 = vadd.f32 0.0, %v2485
    %v2487 = vpop.f32.mrb[0].mxu0
    %v2488 = vadd.f32 0.0, %v2487
    %v2489 = vpop.f32.mrb[0].mxu0
    %v2490 = vadd.f32 0.0, %v2489
    %v2491 = vpop.f32.mrb[0].mxu0
    %v2492 = vadd.f32 0.0, %v2491
    %2493 = vdwg.mxu0
    %v2494 = vunpack.c.l.bf16 %v2437
    %v2495 = vunpack.c.l.bf16 %v2438
    %v2496 = vunpack.c.h.bf16 %v2437
    %v2497 = vunpack.c.h.bf16 %v2438
    %v2498 = vunpack.c.l.bf16 %v2439
    %v2499 = vunpack.c.l.bf16 %v2440
    %v2500 = vunpack.c.h.bf16 %v2439
    %v2501 = vunpack.c.h.bf16 %v2440
    %v2502 = vadd.f32 %v2494, %v2476
    %v2503 = vadd.f32 %v2495, %v2478
    %v2504 = vadd.f32 %v2496, %v2480
    %v2505 = vadd.f32 %v2497, %v2482
    %v2506 = vadd.f32 %v2498, %v2486
    %v2507 = vadd.f32 %v2499, %v2488
    %v2508 = vadd.f32 %v2500, %v2490
    %v2509 = vadd.f32 %v2501, %v2492
    %v2510 = vpack.c.bf16 %v2504, %v2502
    %v2511 = vpack.c.bf16 %v2505, %v2503
    %v2512 = vpack.c.bf16 %v2508, %v2506
    %v2513 = vpack.c.bf16 %v2509, %v2507
    %v2514 = vtanh.bf16.pop %v2510
    %v2515 = vtanh.bf16.pop %v2512
    %v2516 = vxor.u32 %v2511, 2147516416
    %v2517 = vxor.u32 %v2513, 2147516416
    %v2519 = vmul.bf16 %v2516, 1069105081
    %v2520 = vpow.bf16.pop %v2519
    %v2522 = vmul.bf16 %v2517, 1069105081
    %v2523 = vpow.bf16.pop %v2522
    %v2524 = vadd.bf16 %v2520, 1065369472
    %v2525 = vadd.bf16 %v2523, 1065369472
    %v2526 = vrcp.bf16.pop %v2524
    %v2527 = vmul.bf16 1065369472, %v2526
    %v2528 = vrcp.bf16.pop %v2525
    %v2529 = vmul.bf16 1065369472, %v2528
    %v2530 = vunpack.c.l.bf16 %v2434
    %v2531 = vunpack.c.h.bf16 %v2434
    %v2532 = vunpack.c.l.bf16 %v2436
    %v2533 = vunpack.c.h.bf16 %v2436
    %v2534 = vmul.f32 %v2530, %v2278
    %v2535 = vmul.f32 %v2531, %v2279
    %v2536 = vmul.f32 %v2532, %v2280
    %v2537 = vmul.f32 %v2533, %v2281
    %v2538 = vmul.bf16 %v2420, %v2514
    %v2539 = vmul.bf16 %v2422, %v2515
    %v2540 = vunpack.c.l.bf16 %v2538
    %v2541 = vunpack.c.h.bf16 %v2538
    %v2542 = vunpack.c.l.bf16 %v2539
    %v2543 = vunpack.c.h.bf16 %v2539
    %v2544 = vadd.f32 %v2534, %v2540
    %v2545 = vadd.f32 %v2535, %v2541
    %v2546 = vadd.f32 %v2536, %v2542
    %v2547 = vadd.f32 %v2537, %v2543
    %v2548 = vpack.c.bf16 %v2545, %v2544
    %v2549 = vpack.c.bf16 %v2547, %v2546
    %v2550 = vtanh.bf16.pop %v2548
    %v2551 = vtanh.bf16.pop %v2549
    %v2552 = vmul.bf16 %v2527, %v2550
    %v2553 = vmul.bf16 %v2529, %v2551
    %2554 = vmatprep.subr.bf16.mxu0 0
    %2555 = vmatpush1.bf16.xpose.msra.mxu0 %v2552
    %2556 = vmatprep.subr.bf16.mxu0 0
    %2557 = vmatpush1.bf16.xpose.msra.mxu0 %v2553
    %2558 = vmatprep.subr.bf16.mxu0 0
    %2559 = vmatpush1.bf16.xpose.msra.mxu0 0
    %2560 = vmatprep.subr.bf16.mxu0 0
    %2561 = vmatpush1.bf16.xpose.msra.mxu0 0
    %2562 = vmatprep.subr.bf16.mxu0 0
    %2563 = vmatpush1.bf16.xpose.msra.mxu0 0
    %2564 = vmatprep.subr.bf16.mxu0 0
    %2565 = vmatpush1.bf16.xpose.msra.mxu0 0
    %2566 = vmatprep.subr.bf16.mxu0 0
    %2567 = vmatpush1.bf16.xpose.msra.mxu0 0
    %2568 = vmatprep.subr.bf16.mxu0 0
    %2569 = vmatpush1.bf16.xpose.msra.mxu0 0
    %2570 = vmatprep.subr.bf16.mxu0 0
    %2571 = vmatpush1.bf16.xpose.msra.mxu0 0
    %2572 = vmatprep.subr.bf16.mxu0 0
    %2573 = vmatpush1.bf16.xpose.msra.mxu0 0
    %2574 = vmatprep.subr.bf16.mxu0 0
    %2575 = vmatpush1.bf16.xpose.msra.mxu0 0
    %2576 = vmatprep.subr.bf16.mxu0 0
    %2577 = vmatpush1.bf16.xpose.msra.mxu0 0
    %2578 = vmatprep.subr.bf16.mxu0 0
    %2579 = vmatpush1.bf16.xpose.msra.mxu0 0
    %2580 = vmatprep.subr.bf16.mxu0 0
    %2581 = vmatpush1.bf16.xpose.msra.mxu0 0
    %2582 = vmatprep.subr.bf16.mxu0 0
    %2583 = vmatpush1.bf16.xpose.msra.mxu0 0
    %2584 = vmatprep.subr.bf16.mxu0 0
    %2585 = vmatpush1.bf16.xpose.msra.mxu0 0
    %2586 = vmatprep.mubr.bf16.mxu0 0
    %2587 = vmatmul.mubr.bf16.gmra.mrb[0].mxu0 %v1489
    %v2588 = vpop.f32.mrb[0].mxu0
    %v2589 = vadd.f32 0.0, %v2588
    %v2590 = vpop.f32.mrb[0].mxu0
    %v2591 = vpop.f32.mrb[0].mxu0
    %v2592 = vpop.f32.mrb[0].mxu0
    %2593 = vdwg.mxu0
    %s2594 = sld [smem:[#allocation4 + $0x4]]
    %v2595 = vstv %s2594
    %v2596 = vmul.f32 %v2595, %v2589
    %v2597 = vadd.f32 %v2331, %v2596
    %v2598 = vld [vmem:[#allocation2 + $0x140] sm:$0xff]
    %v2599 = vld [vmem:[#allocation2 + $0x148] sm:$0xff]
    %v2600 = vld [vmem:[#allocation2 + $0x160] sm:$0xff]
    %v2601 = vld [vmem:[#allocation2 + $0x168] sm:$0xff]
    %2602 = vmatprep.subr.bf16.mxu0 %v1144
    %2603 = vmatpush1.bf16.msra.mxu0 %v1143
    %2604 = vmatprep.subr.bf16.mxu0 %v1146
    %2605 = vmatpush1.bf16.msra.mxu0 %v1145
    %2606 = vmatprep.subr.bf16.mxu0 %v1148
    %2607 = vmatpush1.bf16.msra.mxu0 %v1147
    %2608 = vmatprep.subr.bf16.mxu0 %v1150
    %2609 = vmatpush1.bf16.msra.mxu0 %v1149
    %2610 = vmatprep.subr.bf16.mxu0 %v1152
    %2611 = vmatpush1.bf16.msra.mxu0 %v1151
    %2612 = vmatprep.subr.bf16.mxu0 %v1154
    %2613 = vmatpush1.bf16.msra.mxu0 %v1153
    %2614 = vmatprep.subr.bf16.mxu0 %v1156
    %2615 = vmatpush1.bf16.msra.mxu0 %v1155
    %2616 = vmatprep.subr.bf16.mxu0 %v1158
    %2617 = vmatpush1.bf16.msra.mxu0 %v1157
    %2618 = vmatprep.subr.bf16.mxu0 0
    %2619 = vmatpush1.bf16.msra.mxu0 0
    %2620 = vmatprep.subr.bf16.mxu0 0
    %2621 = vmatpush1.bf16.msra.mxu0 0
    %2622 = vmatprep.subr.bf16.mxu0 0
    %2623 = vmatpush1.bf16.msra.mxu0 0
    %2624 = vmatprep.subr.bf16.mxu0 0
    %2625 = vmatpush1.bf16.msra.mxu0 0
    %2626 = vmatprep.subr.bf16.mxu0 0
    %2627 = vmatpush1.bf16.msra.mxu0 0
    %2628 = vmatprep.subr.bf16.mxu0 0
    %2629 = vmatpush1.bf16.msra.mxu0 0
    %2630 = vmatprep.subr.bf16.mxu0 0
    %2631 = vmatpush1.bf16.msra.mxu0 0
    %2632 = vmatprep.subr.bf16.mxu0 0
    %2633 = vmatpush1.bf16.msra.mxu0 0
    %2634 = vmatprep.mubr.bf16.mxu0 0
    %2635 = vmatmul.mubr.bf16.gmra.mrb[0].mxu0 %v2552
    %v2636 = vpop.f32.mrb[0].mxu0
    %v2637 = vadd.f32 0.0, %v2636
    %v2638 = vpop.f32.mrb[0].mxu0
    %v2639 = vadd.f32 0.0, %v2638
    %v2640 = vpop.f32.mrb[0].mxu0
    %v2641 = vadd.f32 0.0, %v2640
    %v2642 = vpop.f32.mrb[0].mxu0
    %v2643 = vadd.f32 0.0, %v2642
    %2644 = vmatprep.mubr.bf16.mxu0 0
    %2645 = vmatmul.mubr.bf16.gmra.mrb[0].mxu0 %v2553
    %v2646 = vpop.f32.mrb[0].mxu0
    %v2647 = vadd.f32 0.0, %v2646
    %v2648 = vpop.f32.mrb[0].mxu0
    %v2649 = vadd.f32 0.0, %v2648
    %v2650 = vpop.f32.mrb[0].mxu0
    %v2651 = vadd.f32 0.0, %v2650
    %v2652 = vpop.f32.mrb[0].mxu0
    %v2653 = vadd.f32 0.0, %v2652
    %2654 = vdwg.mxu0
    %v2655 = vunpack.c.l.bf16 %v2598
    %v2656 = vunpack.c.l.bf16 %v2599
    %v2657 = vunpack.c.h.bf16 %v2598
    %v2658 = vunpack.c.h.bf16 %v2599
    %v2659 = vunpack.c.l.bf16 %v2600
    %v2660 = vunpack.c.l.bf16 %v2601
    %v2661 = vunpack.c.h.bf16 %v2600
    %v2662 = vunpack.c.h.bf16 %v2601
    %v2663 = vadd.f32 %v2655, %v2637
    %v2664 = vadd.f32 %v2656, %v2639
    %v2665 = vadd.f32 %v2657, %v2641
    %v2666 = vadd.f32 %v2658, %v2643
    %v2667 = vadd.f32 %v2659, %v2647
    %v2668 = vadd.f32 %v2660, %v2649
    %v2669 = vadd.f32 %v2661, %v2651
    %v2670 = vadd.f32 %v2662, %v2653
    %v2671 = vpack.c.bf16 %v2665, %v2663
    %v2672 = vpack.c.bf16 %v2666, %v2664
    %v2673 = vpack.c.bf16 %v2669, %v2667
    %v2674 = vpack.c.bf16 %v2670, %v2668
    %v2675 = vxor.u32 %v2671, 2147516416
    %v2676 = vxor.u32 %v2673, 2147516416
    %v2678 = vmul.bf16 %v2675, 1069105081
    %v2679 = vpow.bf16.pop %v2678
    %v2681 = vmul.bf16 %v2676, 1069105081
    %v2682 = vpow.bf16.pop %v2681
    %v2683 = vadd.bf16 %v2679, 1065369472
    %v2684 = vadd.bf16 %v2682, 1065369472
    %v2685 = vrcp.bf16.pop %v2683
    %v2686 = vmul.bf16 1065369472, %v2685
    %v2687 = vrcp.bf16.pop %v2684
    %v2688 = vmul.bf16 1065369472, %v2687
    %v2689 = vxor.u32 %v2672, 2147516416
    %v2690 = vxor.u32 %v2674, 2147516416
    %v2692 = vmul.bf16 %v2689, 1069105081
    %v2693 = vpow.bf16.pop %v2692
    %v2695 = vmul.bf16 %v2690, 1069105081
    %v2696 = vpow.bf16.pop %v2695
    %v2697 = vadd.bf16 %v2693, 1065369472
    %v2698 = vadd.bf16 %v2696, 1065369472
    %v2699 = vrcp.bf16.pop %v2697
    %v2700 = vmul.bf16 1065369472, %v2699
    %v2701 = vrcp.bf16.pop %v2698
    %v2702 = vmul.bf16 1065369472, %v2701
    %v2703 = vld [vmem:[#allocation2 + $0x150] sm:$0xff]
    %v2704 = vld [vmem:[#allocation2 + $0x158] sm:$0xff]
    %v2705 = vld [vmem:[#allocation2 + $0x170] sm:$0xff]
    %v2706 = vld [vmem:[#allocation2 + $0x178] sm:$0xff]
    %2707 = vmatprep.subr.bf16.mxu0 %v1345
    %2708 = vmatpush1.bf16.msra.mxu0 %v1344
    %2709 = vmatprep.subr.bf16.mxu0 %v1347
    %2710 = vmatpush1.bf16.msra.mxu0 %v1346
    %2711 = vmatprep.subr.bf16.mxu0 %v1349
    %2712 = vmatpush1.bf16.msra.mxu0 %v1348
    %2713 = vmatprep.subr.bf16.mxu0 %v1351
    %2714 = vmatpush1.bf16.msra.mxu0 %v1350
    %2715 = vmatprep.subr.bf16.mxu0 %v1353
    %2716 = vmatpush1.bf16.msra.mxu0 %v1352
    %2717 = vmatprep.subr.bf16.mxu0 %v1355
    %2718 = vmatpush1.bf16.msra.mxu0 %v1354
    %2719 = vmatprep.subr.bf16.mxu0 %v1357
    %2720 = vmatpush1.bf16.msra.mxu0 %v1356
    %2721 = vmatprep.subr.bf16.mxu0 %v1359
    %2722 = vmatpush1.bf16.msra.mxu0 %v1358
    %2723 = vmatprep.subr.bf16.mxu0 0
    %2724 = vmatpush1.bf16.msra.mxu0 0
    %2725 = vmatprep.subr.bf16.mxu0 0
    %2726 = vmatpush1.bf16.msra.mxu0 0
    %2727 = vmatprep.subr.bf16.mxu0 0
    %2728 = vmatpush1.bf16.msra.mxu0 0
    %2729 = vmatprep.subr.bf16.mxu0 0
    %2730 = vmatpush1.bf16.msra.mxu0 0
    %2731 = vmatprep.subr.bf16.mxu0 0
    %2732 = vmatpush1.bf16.msra.mxu0 0
    %2733 = vmatprep.subr.bf16.mxu0 0
    %2734 = vmatpush1.bf16.msra.mxu0 0
    %2735 = vmatprep.subr.bf16.mxu0 0
    %2736 = vmatpush1.bf16.msra.mxu0 0
    %2737 = vmatprep.subr.bf16.mxu0 0
    %2738 = vmatpush1.bf16.msra.mxu0 0
    %2739 = vmatprep.mubr.bf16.mxu0 0
    %2740 = vmatmul.mubr.bf16.gmra.mrb[0].mxu0 %v2552
    %v2741 = vpop.f32.mrb[0].mxu0
    %v2742 = vadd.f32 0.0, %v2741
    %v2743 = vpop.f32.mrb[0].mxu0
    %v2744 = vadd.f32 0.0, %v2743
    %v2745 = vpop.f32.mrb[0].mxu0
    %v2746 = vadd.f32 0.0, %v2745
    %v2747 = vpop.f32.mrb[0].mxu0
    %v2748 = vadd.f32 0.0, %v2747
    %2749 = vmatprep.mubr.bf16.mxu0 0
    %2750 = vmatmul.mubr.bf16.gmra.mrb[0].mxu0 %v2553
    %v2751 = vpop.f32.mrb[0].mxu0
    %v2752 = vadd.f32 0.0, %v2751
    %v2753 = vpop.f32.mrb[0].mxu0
    %v2754 = vadd.f32 0.0, %v2753
    %v2755 = vpop.f32.mrb[0].mxu0
    %v2756 = vadd.f32 0.0, %v2755
    %v2757 = vpop.f32.mrb[0].mxu0
    %v2758 = vadd.f32 0.0, %v2757
    %2759 = vdwg.mxu0
    %v2760 = vunpack.c.l.bf16 %v2703
    %v2761 = vunpack.c.l.bf16 %v2704
    %v2762 = vunpack.c.h.bf16 %v2703
    %v2763 = vunpack.c.h.bf16 %v2704
    %v2764 = vunpack.c.l.bf16 %v2705
    %v2765 = vunpack.c.l.bf16 %v2706
    %v2766 = vunpack.c.h.bf16 %v2705
    %v2767 = vunpack.c.h.bf16 %v2706
    %v2768 = vadd.f32 %v2760, %v2742
    %v2769 = vadd.f32 %v2761, %v2744
    %v2770 = vadd.f32 %v2762, %v2746
    %v2771 = vadd.f32 %v2763, %v2748
    %v2772 = vadd.f32 %v2764, %v2752
    %v2773 = vadd.f32 %v2765, %v2754
    %v2774 = vadd.f32 %v2766, %v2756
    %v2775 = vadd.f32 %v2767, %v2758
    %v2776 = vpack.c.bf16 %v2770, %v2768
    %v2777 = vpack.c.bf16 %v2771, %v2769
    %v2778 = vpack.c.bf16 %v2774, %v2772
    %v2779 = vpack.c.bf16 %v2775, %v2773
    %v2780 = vtanh.bf16.pop %v2776
    %v2781 = vtanh.bf16.pop %v2778
    %v2782 = vxor.u32 %v2777, 2147516416
    %v2783 = vxor.u32 %v2779, 2147516416
    %v2785 = vmul.bf16 %v2782, 1069105081
    %v2786 = vpow.bf16.pop %v2785
    %v2788 = vmul.bf16 %v2783, 1069105081
    %v2789 = vpow.bf16.pop %v2788
    %v2790 = vadd.bf16 %v2786, 1065369472
    %v2791 = vadd.bf16 %v2789, 1065369472
    %v2792 = vrcp.bf16.pop %v2790
    %v2793 = vmul.bf16 1065369472, %v2792
    %v2794 = vrcp.bf16.pop %v2791
    %v2795 = vmul.bf16 1065369472, %v2794
    %v2796 = vunpack.c.l.bf16 %v2700
    %v2797 = vunpack.c.h.bf16 %v2700
    %v2798 = vunpack.c.l.bf16 %v2702
    %v2799 = vunpack.c.h.bf16 %v2702
    %v2800 = vmul.f32 %v2796, %v2544
    %v2801 = vmul.f32 %v2797, %v2545
    %v2802 = vmul.f32 %v2798, %v2546
    %v2803 = vmul.f32 %v2799, %v2547
    %v2804 = vmul.bf16 %v2686, %v2780
    %v2805 = vmul.bf16 %v2688, %v2781
    %v2806 = vunpack.c.l.bf16 %v2804
    %v2807 = vunpack.c.h.bf16 %v2804
    %v2808 = vunpack.c.l.bf16 %v2805
    %v2809 = vunpack.c.h.bf16 %v2805
    %v2810 = vadd.f32 %v2800, %v2806
    %v2811 = vadd.f32 %v2801, %v2807
    %v2812 = vadd.f32 %v2802, %v2808
    %v2813 = vadd.f32 %v2803, %v2809
    %v2814 = vpack.c.bf16 %v2811, %v2810
    %v2815 = vpack.c.bf16 %v2813, %v2812
    %v2816 = vtanh.bf16.pop %v2814
    %v2817 = vtanh.bf16.pop %v2815
    %v2818 = vmul.bf16 %v2793, %v2816
    %v2819 = vmul.bf16 %v2795, %v2817
    %2820 = vmatprep.subr.bf16.mxu0 0
    %2821 = vmatpush1.bf16.xpose.msra.mxu0 %v2818
    %2822 = vmatprep.subr.bf16.mxu0 0
    %2823 = vmatpush1.bf16.xpose.msra.mxu0 %v2819
    %2824 = vmatprep.subr.bf16.mxu0 0
    %2825 = vmatpush1.bf16.xpose.msra.mxu0 0
    %2826 = vmatprep.subr.bf16.mxu0 0
    %2827 = vmatpush1.bf16.xpose.msra.mxu0 0
    %2828 = vmatprep.subr.bf16.mxu0 0
    %2829 = vmatpush1.bf16.xpose.msra.mxu0 0
    %2830 = vmatprep.subr.bf16.mxu0 0
    %2831 = vmatpush1.bf16.xpose.msra.mxu0 0
    %2832 = vmatprep.subr.bf16.mxu0 0
    %2833 = vmatpush1.bf16.xpose.msra.mxu0 0
    %2834 = vmatprep.subr.bf16.mxu0 0
    %2835 = vmatpush1.bf16.xpose.msra.mxu0 0
    %2836 = vmatprep.subr.bf16.mxu0 0
    %2837 = vmatpush1.bf16.xpose.msra.mxu0 0
    %2838 = vmatprep.subr.bf16.mxu0 0
    %2839 = vmatpush1.bf16.xpose.msra.mxu0 0
    %2840 = vmatprep.subr.bf16.mxu0 0
    %2841 = vmatpush1.bf16.xpose.msra.mxu0 0
    %2842 = vmatprep.subr.bf16.mxu0 0
    %2843 = vmatpush1.bf16.xpose.msra.mxu0 0
    %2844 = vmatprep.subr.bf16.mxu0 0
    %2845 = vmatpush1.bf16.xpose.msra.mxu0 0
    %2846 = vmatprep.subr.bf16.mxu0 0
    %2847 = vmatpush1.bf16.xpose.msra.mxu0 0
    %2848 = vmatprep.subr.bf16.mxu0 0
    %2849 = vmatpush1.bf16.xpose.msra.mxu0 0
    %2850 = vmatprep.subr.bf16.mxu0 0
    %2851 = vmatpush1.bf16.xpose.msra.mxu0 0
    %2852 = vmatprep.mubr.bf16.mxu0 0
    %2853 = vmatmul.mubr.bf16.gmra.mrb[0].mxu0 %v1489
    %v2854 = vpop.f32.mrb[0].mxu0
    %v2855 = vadd.f32 0.0, %v2854
    %v2856 = vpop.f32.mrb[0].mxu0
    %v2857 = vpop.f32.mrb[0].mxu0
    %v2858 = vpop.f32.mrb[0].mxu0
    %2859 = vdwg.mxu0
    %s2860 = sld [smem:[#allocation4 + $0x5]]
    %v2861 = vstv %s2860
    %v2862 = vmul.f32 %v2861, %v2855
    %v2863 = vadd.f32 %v2597, %v2862
    %v2864 = vld [vmem:[#allocation2 + $0x180] sm:$0xff]
    %v2865 = vld [vmem:[#allocation2 + $0x188] sm:$0xff]
    %v2866 = vld [vmem:[#allocation2 + $0x1a0] sm:$0xff]
    %v2867 = vld [vmem:[#allocation2 + $0x1a8] sm:$0xff]
    %2868 = vmatprep.subr.bf16.mxu0 %v1144
    %2869 = vmatpush1.bf16.msra.mxu0 %v1143
    %2870 = vmatprep.subr.bf16.mxu0 %v1146
    %2871 = vmatpush1.bf16.msra.mxu0 %v1145
    %2872 = vmatprep.subr.bf16.mxu0 %v1148
    %2873 = vmatpush1.bf16.msra.mxu0 %v1147
    %2874 = vmatprep.subr.bf16.mxu0 %v1150
    %2875 = vmatpush1.bf16.msra.mxu0 %v1149
    %2876 = vmatprep.subr.bf16.mxu0 %v1152
    %2877 = vmatpush1.bf16.msra.mxu0 %v1151
    %2878 = vmatprep.subr.bf16.mxu0 %v1154
    %2879 = vmatpush1.bf16.msra.mxu0 %v1153
    %2880 = vmatprep.subr.bf16.mxu0 %v1156
    %2881 = vmatpush1.bf16.msra.mxu0 %v1155
    %2882 = vmatprep.subr.bf16.mxu0 %v1158
    %2883 = vmatpush1.bf16.msra.mxu0 %v1157
    %2884 = vmatprep.subr.bf16.mxu0 0
    %2885 = vmatpush1.bf16.msra.mxu0 0
    %2886 = vmatprep.subr.bf16.mxu0 0
    %2887 = vmatpush1.bf16.msra.mxu0 0
    %2888 = vmatprep.subr.bf16.mxu0 0
    %2889 = vmatpush1.bf16.msra.mxu0 0
    %2890 = vmatprep.subr.bf16.mxu0 0
    %2891 = vmatpush1.bf16.msra.mxu0 0
    %2892 = vmatprep.subr.bf16.mxu0 0
    %2893 = vmatpush1.bf16.msra.mxu0 0
    %2894 = vmatprep.subr.bf16.mxu0 0
    %2895 = vmatpush1.bf16.msra.mxu0 0
    %2896 = vmatprep.subr.bf16.mxu0 0
    %2897 = vmatpush1.bf16.msra.mxu0 0
    %2898 = vmatprep.subr.bf16.mxu0 0
    %2899 = vmatpush1.bf16.msra.mxu0 0
    %2900 = vmatprep.mubr.bf16.mxu0 0
    %2901 = vmatmul.mubr.bf16.gmra.mrb[0].mxu0 %v2818
    %v2902 = vpop.f32.mrb[0].mxu0
    %v2903 = vadd.f32 0.0, %v2902
    %v2904 = vpop.f32.mrb[0].mxu0
    %v2905 = vadd.f32 0.0, %v2904
    %v2906 = vpop.f32.mrb[0].mxu0
    %v2907 = vadd.f32 0.0, %v2906
    %v2908 = vpop.f32.mrb[0].mxu0
    %v2909 = vadd.f32 0.0, %v2908
    %2910 = vmatprep.mubr.bf16.mxu0 0
    %2911 = vmatmul.mubr.bf16.gmra.mrb[0].mxu0 %v2819
    %v2912 = vpop.f32.mrb[0].mxu0
    %v2913 = vadd.f32 0.0, %v2912
    %v2914 = vpop.f32.mrb[0].mxu0
    %v2915 = vadd.f32 0.0, %v2914
    %v2916 = vpop.f32.mrb[0].mxu0
    %v2917 = vadd.f32 0.0, %v2916
    %v2918 = vpop.f32.mrb[0].mxu0
    %v2919 = vadd.f32 0.0, %v2918
    %2920 = vdwg.mxu0
    %v2921 = vunpack.c.l.bf16 %v2864
    %v2922 = vunpack.c.l.bf16 %v2865
    %v2923 = vunpack.c.h.bf16 %v2864
    %v2924 = vunpack.c.h.bf16 %v2865
    %v2925 = vunpack.c.l.bf16 %v2866
    %v2926 = vunpack.c.l.bf16 %v2867
    %v2927 = vunpack.c.h.bf16 %v2866
    %v2928 = vunpack.c.h.bf16 %v2867
    %v2929 = vadd.f32 %v2921, %v2903
    %v2930 = vadd.f32 %v2922, %v2905
    %v2931 = vadd.f32 %v2923, %v2907
    %v2932 = vadd.f32 %v2924, %v2909
    %v2933 = vadd.f32 %v2925, %v2913
    %v2934 = vadd.f32 %v2926, %v2915
    %v2935 = vadd.f32 %v2927, %v2917
    %v2936 = vadd.f32 %v2928, %v2919
    %v2937 = vpack.c.bf16 %v2931, %v2929
    %v2938 = vpack.c.bf16 %v2932, %v2930
    %v2939 = vpack.c.bf16 %v2935, %v2933
    %v2940 = vpack.c.bf16 %v2936, %v2934
    %v2941 = vxor.u32 %v2937, 2147516416
    %v2942 = vxor.u32 %v2939, 2147516416
    %v2944 = vmul.bf16 %v2941, 1069105081
    %v2945 = vpow.bf16.pop %v2944
    %v2947 = vmul.bf16 %v2942, 1069105081
    %v2948 = vpow.bf16.pop %v2947
    %v2949 = vadd.bf16 %v2945, 1065369472
    %v2950 = vadd.bf16 %v2948, 1065369472
    %v2951 = vrcp.bf16.pop %v2949
    %v2952 = vmul.bf16 1065369472, %v2951
    %v2953 = vrcp.bf16.pop %v2950
    %v2954 = vmul.bf16 1065369472, %v2953
    %v2955 = vxor.u32 %v2938, 2147516416
    %v2956 = vxor.u32 %v2940, 2147516416
    %v2958 = vmul.bf16 %v2955, 1069105081
    %v2959 = vpow.bf16.pop %v2958
    %v2961 = vmul.bf16 %v2956, 1069105081
    %v2962 = vpow.bf16.pop %v2961
    %v2963 = vadd.bf16 %v2959, 1065369472
    %v2964 = vadd.bf16 %v2962, 1065369472
    %v2965 = vrcp.bf16.pop %v2963
    %v2966 = vmul.bf16 1065369472, %v2965
    %v2967 = vrcp.bf16.pop %v2964
    %v2968 = vmul.bf16 1065369472, %v2967
    %v2969 = vld [vmem:[#allocation2 + $0x190] sm:$0xff]
    %v2970 = vld [vmem:[#allocation2 + $0x198] sm:$0xff]
    %v2971 = vld [vmem:[#allocation2 + $0x1b0] sm:$0xff]
    %v2972 = vld [vmem:[#allocation2 + $0x1b8] sm:$0xff]
    %2973 = vmatprep.subr.bf16.mxu0 %v1345
    %2974 = vmatpush1.bf16.msra.mxu0 %v1344
    %2975 = vmatprep.subr.bf16.mxu0 %v1347
    %2976 = vmatpush1.bf16.msra.mxu0 %v1346
    %2977 = vmatprep.subr.bf16.mxu0 %v1349
    %2978 = vmatpush1.bf16.msra.mxu0 %v1348
    %2979 = vmatprep.subr.bf16.mxu0 %v1351
    %2980 = vmatpush1.bf16.msra.mxu0 %v1350
    %2981 = vmatprep.subr.bf16.mxu0 %v1353
    %2982 = vmatpush1.bf16.msra.mxu0 %v1352
    %2983 = vmatprep.subr.bf16.mxu0 %v1355
    %2984 = vmatpush1.bf16.msra.mxu0 %v1354
    %2985 = vmatprep.subr.bf16.mxu0 %v1357
    %2986 = vmatpush1.bf16.msra.mxu0 %v1356
    %2987 = vmatprep.subr.bf16.mxu0 %v1359
    %2988 = vmatpush1.bf16.msra.mxu0 %v1358
    %2989 = vmatprep.subr.bf16.mxu0 0
    %2990 = vmatpush1.bf16.msra.mxu0 0
    %2991 = vmatprep.subr.bf16.mxu0 0
    %2992 = vmatpush1.bf16.msra.mxu0 0
    %2993 = vmatprep.subr.bf16.mxu0 0
    %2994 = vmatpush1.bf16.msra.mxu0 0
    %2995 = vmatprep.subr.bf16.mxu0 0
    %2996 = vmatpush1.bf16.msra.mxu0 0
    %2997 = vmatprep.subr.bf16.mxu0 0
    %2998 = vmatpush1.bf16.msra.mxu0 0
    %2999 = vmatprep.subr.bf16.mxu0 0
    %3000 = vmatpush1.bf16.msra.mxu0 0
    %3001 = vmatprep.subr.bf16.mxu0 0
    %3002 = vmatpush1.bf16.msra.mxu0 0
    %3003 = vmatprep.subr.bf16.mxu0 0
    %3004 = vmatpush1.bf16.msra.mxu0 0
    %3005 = vmatprep.mubr.bf16.mxu0 0
    %3006 = vmatmul.mubr.bf16.gmra.mrb[0].mxu0 %v2818
    %v3007 = vpop.f32.mrb[0].mxu0
    %v3008 = vadd.f32 0.0, %v3007
    %v3009 = vpop.f32.mrb[0].mxu0
    %v3010 = vadd.f32 0.0, %v3009
    %v3011 = vpop.f32.mrb[0].mxu0
    %v3012 = vadd.f32 0.0, %v3011
    %v3013 = vpop.f32.mrb[0].mxu0
    %v3014 = vadd.f32 0.0, %v3013
    %3015 = vmatprep.mubr.bf16.mxu0 0
    %3016 = vmatmul.mubr.bf16.gmra.mrb[0].mxu0 %v2819
    %v3017 = vpop.f32.mrb[0].mxu0
    %v3018 = vadd.f32 0.0, %v3017
    %v3019 = vpop.f32.mrb[0].mxu0
    %v3020 = vadd.f32 0.0, %v3019
    %v3021 = vpop.f32.mrb[0].mxu0
    %v3022 = vadd.f32 0.0, %v3021
    %v3023 = vpop.f32.mrb[0].mxu0
    %v3024 = vadd.f32 0.0, %v3023
    %3025 = vdwg.mxu0
    %v3026 = vunpack.c.l.bf16 %v2969
    %v3027 = vunpack.c.l.bf16 %v2970
    %v3028 = vunpack.c.h.bf16 %v2969
    %v3029 = vunpack.c.h.bf16 %v2970
    %v3030 = vunpack.c.l.bf16 %v2971
    %v3031 = vunpack.c.l.bf16 %v2972
    %v3032 = vunpack.c.h.bf16 %v2971
    %v3033 = vunpack.c.h.bf16 %v2972
    %v3034 = vadd.f32 %v3026, %v3008
    %v3035 = vadd.f32 %v3027, %v3010
    %v3036 = vadd.f32 %v3028, %v3012
    %v3037 = vadd.f32 %v3029, %v3014
    %v3038 = vadd.f32 %v3030, %v3018
    %v3039 = vadd.f32 %v3031, %v3020
    %v3040 = vadd.f32 %v3032, %v3022
    %v3041 = vadd.f32 %v3033, %v3024
    %v3042 = vpack.c.bf16 %v3036, %v3034
    %v3043 = vpack.c.bf16 %v3037, %v3035
    %v3044 = vpack.c.bf16 %v3040, %v3038
    %v3045 = vpack.c.bf16 %v3041, %v3039
    %v3046 = vtanh.bf16.pop %v3042
    %v3047 = vtanh.bf16.pop %v3044
    %v3048 = vxor.u32 %v3043, 2147516416
    %v3049 = vxor.u32 %v3045, 2147516416
    %v3051 = vmul.bf16 %v3048, 1069105081
    %v3052 = vpow.bf16.pop %v3051
    %v3054 = vmul.bf16 %v3049, 1069105081
    %v3055 = vpow.bf16.pop %v3054
    %v3056 = vadd.bf16 %v3052, 1065369472
    %v3057 = vadd.bf16 %v3055, 1065369472
    %v3058 = vrcp.bf16.pop %v3056
    %v3059 = vmul.bf16 1065369472, %v3058
    %v3060 = vrcp.bf16.pop %v3057
    %v3061 = vmul.bf16 1065369472, %v3060
    %v3062 = vunpack.c.l.bf16 %v2966
    %v3063 = vunpack.c.h.bf16 %v2966
    %v3064 = vunpack.c.l.bf16 %v2968
    %v3065 = vunpack.c.h.bf16 %v2968
    %v3066 = vmul.f32 %v3062, %v2810
    %v3067 = vmul.f32 %v3063, %v2811
    %v3068 = vmul.f32 %v3064, %v2812
    %v3069 = vmul.f32 %v3065, %v2813
    %v3070 = vmul.bf16 %v2952, %v3046
    %v3071 = vmul.bf16 %v2954, %v3047
    %v3072 = vunpack.c.l.bf16 %v3070
    %v3073 = vunpack.c.h.bf16 %v3070
    %v3074 = vunpack.c.l.bf16 %v3071
    %v3075 = vunpack.c.h.bf16 %v3071
    %v3076 = vadd.f32 %v3066, %v3072
    %v3077 = vadd.f32 %v3067, %v3073
    %v3078 = vadd.f32 %v3068, %v3074
    %v3079 = vadd.f32 %v3069, %v3075
    %v3080 = vpack.c.bf16 %v3077, %v3076
    %v3081 = vpack.c.bf16 %v3079, %v3078
    %v3082 = vtanh.bf16.pop %v3080
    %v3083 = vtanh.bf16.pop %v3081
    %v3084 = vmul.bf16 %v3059, %v3082
    %v3085 = vmul.bf16 %v3061, %v3083
    %3086 = vmatprep.subr.bf16.mxu0 0
    %3087 = vmatpush1.bf16.xpose.msra.mxu0 %v3084
    %3088 = vmatprep.subr.bf16.mxu0 0
    %3089 = vmatpush1.bf16.xpose.msra.mxu0 %v3085
    %3090 = vmatprep.subr.bf16.mxu0 0
    %3091 = vmatpush1.bf16.xpose.msra.mxu0 0
    %3092 = vmatprep.subr.bf16.mxu0 0
    %3093 = vmatpush1.bf16.xpose.msra.mxu0 0
    %3094 = vmatprep.subr.bf16.mxu0 0
    %3095 = vmatpush1.bf16.xpose.msra.mxu0 0
    %3096 = vmatprep.subr.bf16.mxu0 0
    %3097 = vmatpush1.bf16.xpose.msra.mxu0 0
    %3098 = vmatprep.subr.bf16.mxu0 0
    %3099 = vmatpush1.bf16.xpose.msra.mxu0 0
    %3100 = vmatprep.subr.bf16.mxu0 0
    %3101 = vmatpush1.bf16.xpose.msra.mxu0 0
    %3102 = vmatprep.subr.bf16.mxu0 0
    %3103 = vmatpush1.bf16.xpose.msra.mxu0 0
    %3104 = vmatprep.subr.bf16.mxu0 0
    %3105 = vmatpush1.bf16.xpose.msra.mxu0 0
    %3106 = vmatprep.subr.bf16.mxu0 0
    %3107 = vmatpush1.bf16.xpose.msra.mxu0 0
    %3108 = vmatprep.subr.bf16.mxu0 0
    %3109 = vmatpush1.bf16.xpose.msra.mxu0 0
    %3110 = vmatprep.subr.bf16.mxu0 0
    %3111 = vmatpush1.bf16.xpose.msra.mxu0 0
    %3112 = vmatprep.subr.bf16.mxu0 0
    %3113 = vmatpush1.bf16.xpose.msra.mxu0 0
    %3114 = vmatprep.subr.bf16.mxu0 0
    %3115 = vmatpush1.bf16.xpose.msra.mxu0 0
    %3116 = vmatprep.subr.bf16.mxu0 0
    %3117 = vmatpush1.bf16.xpose.msra.mxu0 0
    %3118 = vmatprep.mubr.bf16.mxu0 0
    %3119 = vmatmul.mubr.bf16.gmra.mrb[0].mxu0 %v1489
    %v3120 = vpop.f32.mrb[0].mxu0
    %v3121 = vadd.f32 0.0, %v3120
    %v3122 = vpop.f32.mrb[0].mxu0
    %v3123 = vpop.f32.mrb[0].mxu0
    %v3124 = vpop.f32.mrb[0].mxu0
    %3125 = vdwg.mxu0
    %s3126 = sld [smem:[#allocation4 + $0x6]]
    %v3127 = vstv %s3126
    %v3128 = vmul.f32 %v3127, %v3121
    %v3129 = vadd.f32 %v2863, %v3128
    %v3130 = vld [vmem:[#allocation2 + $0x1c0] sm:$0xff]
    %v3131 = vld [vmem:[#allocation2 + $0x1c8] sm:$0xff]
    %v3132 = vld [vmem:[#allocation2 + $0x1e0] sm:$0xff]
    %v3133 = vld [vmem:[#allocation2 + $0x1e8] sm:$0xff]
    %3134 = vmatprep.subr.bf16.mxu0 %v1144
    %3135 = vmatpush1.bf16.msra.mxu0 %v1143
    %3136 = vmatprep.subr.bf16.mxu0 %v1146
    %3137 = vmatpush1.bf16.msra.mxu0 %v1145
    %3138 = vmatprep.subr.bf16.mxu0 %v1148
    %3139 = vmatpush1.bf16.msra.mxu0 %v1147
    %3140 = vmatprep.subr.bf16.mxu0 %v1150
    %3141 = vmatpush1.bf16.msra.mxu0 %v1149
    %3142 = vmatprep.subr.bf16.mxu0 %v1152
    %3143 = vmatpush1.bf16.msra.mxu0 %v1151
    %3144 = vmatprep.subr.bf16.mxu0 %v1154
    %3145 = vmatpush1.bf16.msra.mxu0 %v1153
    %3146 = vmatprep.subr.bf16.mxu0 %v1156
    %3147 = vmatpush1.bf16.msra.mxu0 %v1155
    %3148 = vmatprep.subr.bf16.mxu0 %v1158
    %3149 = vmatpush1.bf16.msra.mxu0 %v1157
    %3150 = vmatprep.subr.bf16.mxu0 0
    %3151 = vmatpush1.bf16.msra.mxu0 0
    %3152 = vmatprep.subr.bf16.mxu0 0
    %3153 = vmatpush1.bf16.msra.mxu0 0
    %3154 = vmatprep.subr.bf16.mxu0 0
    %3155 = vmatpush1.bf16.msra.mxu0 0
    %3156 = vmatprep.subr.bf16.mxu0 0
    %3157 = vmatpush1.bf16.msra.mxu0 0
    %3158 = vmatprep.subr.bf16.mxu0 0
    %3159 = vmatpush1.bf16.msra.mxu0 0
    %3160 = vmatprep.subr.bf16.mxu0 0
    %3161 = vmatpush1.bf16.msra.mxu0 0
    %3162 = vmatprep.subr.bf16.mxu0 0
    %3163 = vmatpush1.bf16.msra.mxu0 0
    %3164 = vmatprep.subr.bf16.mxu0 0
    %3165 = vmatpush1.bf16.msra.mxu0 0
    %3166 = vmatprep.mubr.bf16.mxu0 0
    %3167 = vmatmul.mubr.bf16.gmra.mrb[0].mxu0 %v3084
    %v3168 = vpop.f32.mrb[0].mxu0
    %v3169 = vadd.f32 0.0, %v3168
    %v3170 = vpop.f32.mrb[0].mxu0
    %v3171 = vadd.f32 0.0, %v3170
    %v3172 = vpop.f32.mrb[0].mxu0
    %v3173 = vadd.f32 0.0, %v3172
    %v3174 = vpop.f32.mrb[0].mxu0
    %v3175 = vadd.f32 0.0, %v3174
    %3176 = vmatprep.mubr.bf16.mxu0 0
    %3177 = vmatmul.mubr.bf16.gmra.mrb[0].mxu0 %v3085
    %v3178 = vpop.f32.mrb[0].mxu0
    %v3179 = vadd.f32 0.0, %v3178
    %v3180 = vpop.f32.mrb[0].mxu0
    %v3181 = vadd.f32 0.0, %v3180
    %v3182 = vpop.f32.mrb[0].mxu0
    %v3183 = vadd.f32 0.0, %v3182
    %v3184 = vpop.f32.mrb[0].mxu0
    %v3185 = vadd.f32 0.0, %v3184
    %3186 = vdwg.mxu0
    %v3187 = vunpack.c.l.bf16 %v3130
    %v3188 = vunpack.c.l.bf16 %v3131
    %v3189 = vunpack.c.h.bf16 %v3130
    %v3190 = vunpack.c.h.bf16 %v3131
    %v3191 = vunpack.c.l.bf16 %v3132
    %v3192 = vunpack.c.l.bf16 %v3133
    %v3193 = vunpack.c.h.bf16 %v3132
    %v3194 = vunpack.c.h.bf16 %v3133
    %v3195 = vadd.f32 %v3187, %v3169
    %v3196 = vadd.f32 %v3188, %v3171
    %v3197 = vadd.f32 %v3189, %v3173
    %v3198 = vadd.f32 %v3190, %v3175
    %v3199 = vadd.f32 %v3191, %v3179
    %v3200 = vadd.f32 %v3192, %v3181
    %v3201 = vadd.f32 %v3193, %v3183
    %v3202 = vadd.f32 %v3194, %v3185
    %v3203 = vpack.c.bf16 %v3197, %v3195
    %v3204 = vpack.c.bf16 %v3198, %v3196
    %v3205 = vpack.c.bf16 %v3201, %v3199
    %v3206 = vpack.c.bf16 %v3202, %v3200
    %v3207 = vxor.u32 %v3203, 2147516416
    %v3208 = vxor.u32 %v3205, 2147516416
    %v3210 = vmul.bf16 %v3207, 1069105081
    %v3211 = vpow.bf16.pop %v3210
    %v3213 = vmul.bf16 %v3208, 1069105081
    %v3214 = vpow.bf16.pop %v3213
    %v3215 = vadd.bf16 %v3211, 1065369472
    %v3216 = vadd.bf16 %v3214, 1065369472
    %v3217 = vrcp.bf16.pop %v3215
    %v3218 = vmul.bf16 1065369472, %v3217
    %v3219 = vrcp.bf16.pop %v3216
    %v3220 = vmul.bf16 1065369472, %v3219
    %v3221 = vxor.u32 %v3204, 2147516416
    %v3222 = vxor.u32 %v3206, 2147516416
    %v3224 = vmul.bf16 %v3221, 1069105081
    %v3225 = vpow.bf16.pop %v3224
    %v3227 = vmul.bf16 %v3222, 1069105081
    %v3228 = vpow.bf16.pop %v3227
    %v3229 = vadd.bf16 %v3225, 1065369472
    %v3230 = vadd.bf16 %v3228, 1065369472
    %v3231 = vrcp.bf16.pop %v3229
    %v3232 = vmul.bf16 1065369472, %v3231
    %v3233 = vrcp.bf16.pop %v3230
    %v3234 = vmul.bf16 1065369472, %v3233
    %v3235 = vld [vmem:[#allocation2 + $0x1d0] sm:$0xff]
    %v3236 = vld [vmem:[#allocation2 + $0x1d8] sm:$0xff]
    %v3237 = vld [vmem:[#allocation2 + $0x1f0] sm:$0xff]
    %v3238 = vld [vmem:[#allocation2 + $0x1f8] sm:$0xff]
    %3239 = vmatprep.subr.bf16.mxu0 %v1345
    %3240 = vmatpush1.bf16.msra.mxu0 %v1344
    %3241 = vmatprep.subr.bf16.mxu0 %v1347
    %3242 = vmatpush1.bf16.msra.mxu0 %v1346
    %3243 = vmatprep.subr.bf16.mxu0 %v1349
    %3244 = vmatpush1.bf16.msra.mxu0 %v1348
    %3245 = vmatprep.subr.bf16.mxu0 %v1351
    %3246 = vmatpush1.bf16.msra.mxu0 %v1350
    %3247 = vmatprep.subr.bf16.mxu0 %v1353
    %3248 = vmatpush1.bf16.msra.mxu0 %v1352
    %3249 = vmatprep.subr.bf16.mxu0 %v1355
    %3250 = vmatpush1.bf16.msra.mxu0 %v1354
    %3251 = vmatprep.subr.bf16.mxu0 %v1357
    %3252 = vmatpush1.bf16.msra.mxu0 %v1356
    %3253 = vmatprep.subr.bf16.mxu0 %v1359
    %3254 = vmatpush1.bf16.msra.mxu0 %v1358
    %3255 = vmatprep.subr.bf16.mxu0 0
    %3256 = vmatpush1.bf16.msra.mxu0 0
    %3257 = vmatprep.subr.bf16.mxu0 0
    %3258 = vmatpush1.bf16.msra.mxu0 0
    %3259 = vmatprep.subr.bf16.mxu0 0
    %3260 = vmatpush1.bf16.msra.mxu0 0
    %3261 = vmatprep.subr.bf16.mxu0 0
    %3262 = vmatpush1.bf16.msra.mxu0 0
    %3263 = vmatprep.subr.bf16.mxu0 0
    %3264 = vmatpush1.bf16.msra.mxu0 0
    %3265 = vmatprep.subr.bf16.mxu0 0
    %3266 = vmatpush1.bf16.msra.mxu0 0
    %3267 = vmatprep.subr.bf16.mxu0 0
    %3268 = vmatpush1.bf16.msra.mxu0 0
    %3269 = vmatprep.subr.bf16.mxu0 0
    %3270 = vmatpush1.bf16.msra.mxu0 0
    %3271 = vmatprep.mubr.bf16.mxu0 0
    %3272 = vmatmul.mubr.bf16.gmra.mrb[0].mxu0 %v3084
    %v3273 = vpop.f32.mrb[0].mxu0
    %v3274 = vadd.f32 0.0, %v3273
    %v3275 = vpop.f32.mrb[0].mxu0
    %v3276 = vadd.f32 0.0, %v3275
    %v3277 = vpop.f32.mrb[0].mxu0
    %v3278 = vadd.f32 0.0, %v3277
    %v3279 = vpop.f32.mrb[0].mxu0
    %v3280 = vadd.f32 0.0, %v3279
    %3281 = vmatprep.mubr.bf16.mxu0 0
    %3282 = vmatmul.mubr.bf16.gmra.mrb[0].mxu0 %v3085
    %v3283 = vpop.f32.mrb[0].mxu0
    %v3284 = vadd.f32 0.0, %v3283
    %v3285 = vpop.f32.mrb[0].mxu0
    %v3286 = vadd.f32 0.0, %v3285
    %v3287 = vpop.f32.mrb[0].mxu0
    %v3288 = vadd.f32 0.0, %v3287
    %v3289 = vpop.f32.mrb[0].mxu0
    %v3290 = vadd.f32 0.0, %v3289
    %3291 = vdwg.mxu0
    %v3292 = vunpack.c.l.bf16 %v3235
    %v3293 = vunpack.c.l.bf16 %v3236
    %v3294 = vunpack.c.h.bf16 %v3235
    %v3295 = vunpack.c.h.bf16 %v3236
    %v3296 = vunpack.c.l.bf16 %v3237
    %v3297 = vunpack.c.l.bf16 %v3238
    %v3298 = vunpack.c.h.bf16 %v3237
    %v3299 = vunpack.c.h.bf16 %v3238
    %v3300 = vadd.f32 %v3292, %v3274
    %v3301 = vadd.f32 %v3293, %v3276
    %v3302 = vadd.f32 %v3294, %v3278
    %v3303 = vadd.f32 %v3295, %v3280
    %v3304 = vadd.f32 %v3296, %v3284
    %v3305 = vadd.f32 %v3297, %v3286
    %v3306 = vadd.f32 %v3298, %v3288
    %v3307 = vadd.f32 %v3299, %v3290
    %v3308 = vpack.c.bf16 %v3302, %v3300
    %v3309 = vpack.c.bf16 %v3303, %v3301
    %v3310 = vpack.c.bf16 %v3306, %v3304
    %v3311 = vpack.c.bf16 %v3307, %v3305
    %v3312 = vtanh.bf16.pop %v3308
    %v3313 = vtanh.bf16.pop %v3310
    %v3314 = vxor.u32 %v3309, 2147516416
    %v3315 = vxor.u32 %v3311, 2147516416
    %v3317 = vmul.bf16 %v3314, 1069105081
    %v3318 = vpow.bf16.pop %v3317
    %v3320 = vmul.bf16 %v3315, 1069105081
    %v3321 = vpow.bf16.pop %v3320
    %v3322 = vadd.bf16 %v3318, 1065369472
    %v3323 = vadd.bf16 %v3321, 1065369472
    %v3324 = vrcp.bf16.pop %v3322
    %v3325 = vmul.bf16 1065369472, %v3324
    %v3326 = vrcp.bf16.pop %v3323
    %v3327 = vmul.bf16 1065369472, %v3326
    %v3328 = vunpack.c.l.bf16 %v3232
    %v3329 = vunpack.c.h.bf16 %v3232
    %v3330 = vunpack.c.l.bf16 %v3234
    %v3331 = vunpack.c.h.bf16 %v3234
    %v3332 = vmul.f32 %v3328, %v3076
    %v3333 = vmul.f32 %v3329, %v3077
    %v3334 = vmul.f32 %v3330, %v3078
    %v3335 = vmul.f32 %v3331, %v3079
    %v3336 = vmul.bf16 %v3218, %v3312
    %v3337 = vmul.bf16 %v3220, %v3313
    %v3338 = vunpack.c.l.bf16 %v3336
    %v3339 = vunpack.c.h.bf16 %v3336
    %v3340 = vunpack.c.l.bf16 %v3337
    %v3341 = vunpack.c.h.bf16 %v3337
    %v3342 = vadd.f32 %v3332, %v3338
    %v3343 = vadd.f32 %v3333, %v3339
    %v3344 = vadd.f32 %v3334, %v3340
    %v3345 = vadd.f32 %v3335, %v3341
    %v3346 = vpack.c.bf16 %v3343, %v3342
    %v3347 = vpack.c.bf16 %v3345, %v3344
    %v3348 = vtanh.bf16.pop %v3346
    %v3349 = vtanh.bf16.pop %v3347
    %v3350 = vmul.bf16 %v3325, %v3348
    %v3351 = vmul.bf16 %v3327, %v3349
    %3352 = vmatprep.subr.bf16.mxu0 0
    %3353 = vmatpush1.bf16.xpose.msra.mxu0 %v3350
    %3354 = vmatprep.subr.bf16.mxu0 0
    %3355 = vmatpush1.bf16.xpose.msra.mxu0 %v3351
    %3356 = vmatprep.subr.bf16.mxu0 0
    %3357 = vmatpush1.bf16.xpose.msra.mxu0 0
    %3358 = vmatprep.subr.bf16.mxu0 0
    %3359 = vmatpush1.bf16.xpose.msra.mxu0 0
    %3360 = vmatprep.subr.bf16.mxu0 0
    %3361 = vmatpush1.bf16.xpose.msra.mxu0 0
    %3362 = vmatprep.subr.bf16.mxu0 0
    %3363 = vmatpush1.bf16.xpose.msra.mxu0 0
    %3364 = vmatprep.subr.bf16.mxu0 0
    %3365 = vmatpush1.bf16.xpose.msra.mxu0 0
    %3366 = vmatprep.subr.bf16.mxu0 0
    %3367 = vmatpush1.bf16.xpose.msra.mxu0 0
    %3368 = vmatprep.subr.bf16.mxu0 0
    %3369 = vmatpush1.bf16.xpose.msra.mxu0 0
    %3370 = vmatprep.subr.bf16.mxu0 0
    %3371 = vmatpush1.bf16.xpose.msra.mxu0 0
    %3372 = vmatprep.subr.bf16.mxu0 0
    %3373 = vmatpush1.bf16.xpose.msra.mxu0 0
    %3374 = vmatprep.subr.bf16.mxu0 0
    %3375 = vmatpush1.bf16.xpose.msra.mxu0 0
    %3376 = vmatprep.subr.bf16.mxu0 0
    %3377 = vmatpush1.bf16.xpose.msra.mxu0 0
    %3378 = vmatprep.subr.bf16.mxu0 0
    %3379 = vmatpush1.bf16.xpose.msra.mxu0 0
    %3380 = vmatprep.subr.bf16.mxu0 0
    %3381 = vmatpush1.bf16.xpose.msra.mxu0 0
    %3382 = vmatprep.subr.bf16.mxu0 0
    %3383 = vmatpush1.bf16.xpose.msra.mxu0 0
    %3384 = vmatprep.mubr.bf16.mxu0 0
    %3385 = vmatmul.mubr.bf16.gmra.mrb[0].mxu0 %v1489
    %v3386 = vpop.f32.mrb[0].mxu0
    %v3387 = vadd.f32 0.0, %v3386
    %v3388 = vpop.f32.mrb[0].mxu0
    %v3389 = vpop.f32.mrb[0].mxu0
    %v3390 = vpop.f32.mrb[0].mxu0
    %3391 = vdwg.mxu0
    %s3392 = sld [smem:[#allocation4 + $0x7]]
    %v3393 = vstv %s3392
    %v3394 = vmul.f32 %v3393, %v3387
    %v3395 = vadd.f32 %v3129, %v3394
    %v3396 = vld [vmem:[#allocation2 + $0x200] sm:$0xff]
    %v3397 = vld [vmem:[#allocation2 + $0x208] sm:$0xff]
    %v3398 = vld [vmem:[#allocation2 + $0x220] sm:$0xff]
    %v3399 = vld [vmem:[#allocation2 + $0x228] sm:$0xff]
    %3400 = vmatprep.subr.bf16.mxu0 %v1144
    %3401 = vmatpush1.bf16.msra.mxu0 %v1143
    %3402 = vmatprep.subr.bf16.mxu0 %v1146
    %3403 = vmatpush1.bf16.msra.mxu0 %v1145
    %3404 = vmatprep.subr.bf16.mxu0 %v1148
    %3405 = vmatpush1.bf16.msra.mxu0 %v1147
    %3406 = vmatprep.subr.bf16.mxu0 %v1150
    %3407 = vmatpush1.bf16.msra.mxu0 %v1149
    %3408 = vmatprep.subr.bf16.mxu0 %v1152
    %3409 = vmatpush1.bf16.msra.mxu0 %v1151
    %3410 = vmatprep.subr.bf16.mxu0 %v1154
    %3411 = vmatpush1.bf16.msra.mxu0 %v1153
    %3412 = vmatprep.subr.bf16.mxu0 %v1156
    %3413 = vmatpush1.bf16.msra.mxu0 %v1155
    %3414 = vmatprep.subr.bf16.mxu0 %v1158
    %3415 = vmatpush1.bf16.msra.mxu0 %v1157
    %3416 = vmatprep.subr.bf16.mxu0 0
    %3417 = vmatpush1.bf16.msra.mxu0 0
    %3418 = vmatprep.subr.bf16.mxu0 0
    %3419 = vmatpush1.bf16.msra.mxu0 0
    %3420 = vmatprep.subr.bf16.mxu0 0
    %3421 = vmatpush1.bf16.msra.mxu0 0
    %3422 = vmatprep.subr.bf16.mxu0 0
    %3423 = vmatpush1.bf16.msra.mxu0 0
    %3424 = vmatprep.subr.bf16.mxu0 0
    %3425 = vmatpush1.bf16.msra.mxu0 0
    %3426 = vmatprep.subr.bf16.mxu0 0
    %3427 = vmatpush1.bf16.msra.mxu0 0
    %3428 = vmatprep.subr.bf16.mxu0 0
    %3429 = vmatpush1.bf16.msra.mxu0 0
    %3430 = vmatprep.subr.bf16.mxu0 0
    %3431 = vmatpush1.bf16.msra.mxu0 0
    %3432 = vmatprep.mubr.bf16.mxu0 0
    %3433 = vmatmul.mubr.bf16.gmra.mrb[0].mxu0 %v3350
    %v3434 = vpop.f32.mrb[0].mxu0
    %v3435 = vadd.f32 0.0, %v3434
    %v3436 = vpop.f32.mrb[0].mxu0
    %v3437 = vadd.f32 0.0, %v3436
    %v3438 = vpop.f32.mrb[0].mxu0
    %v3439 = vadd.f32 0.0, %v3438
    %v3440 = vpop.f32.mrb[0].mxu0
    %v3441 = vadd.f32 0.0, %v3440
    %3442 = vmatprep.mubr.bf16.mxu0 0
    %3443 = vmatmul.mubr.bf16.gmra.mrb[0].mxu0 %v3351
    %v3444 = vpop.f32.mrb[0].mxu0
    %v3445 = vadd.f32 0.0, %v3444
    %v3446 = vpop.f32.mrb[0].mxu0
    %v3447 = vadd.f32 0.0, %v3446
    %v3448 = vpop.f32.mrb[0].mxu0
    %v3449 = vadd.f32 0.0, %v3448
    %v3450 = vpop.f32.mrb[0].mxu0
    %v3451 = vadd.f32 0.0, %v3450
    %3452 = vdwg.mxu0
    %v3453 = vunpack.c.l.bf16 %v3396
    %v3454 = vunpack.c.l.bf16 %v3397
    %v3455 = vunpack.c.h.bf16 %v3396
    %v3456 = vunpack.c.h.bf16 %v3397
    %v3457 = vunpack.c.l.bf16 %v3398
    %v3458 = vunpack.c.l.bf16 %v3399
    %v3459 = vunpack.c.h.bf16 %v3398
    %v3460 = vunpack.c.h.bf16 %v3399
    %v3461 = vadd.f32 %v3453, %v3435
    %v3462 = vadd.f32 %v3454, %v3437
    %v3463 = vadd.f32 %v3455, %v3439
    %v3464 = vadd.f32 %v3456, %v3441
    %v3465 = vadd.f32 %v3457, %v3445
    %v3466 = vadd.f32 %v3458, %v3447
    %v3467 = vadd.f32 %v3459, %v3449
    %v3468 = vadd.f32 %v3460, %v3451
    %v3469 = vpack.c.bf16 %v3463, %v3461
    %v3470 = vpack.c.bf16 %v3464, %v3462
    %v3471 = vpack.c.bf16 %v3467, %v3465
    %v3472 = vpack.c.bf16 %v3468, %v3466
    %v3473 = vxor.u32 %v3469, 2147516416
    %v3474 = vxor.u32 %v3471, 2147516416
    %v3476 = vmul.bf16 %v3473, 1069105081
    %v3477 = vpow.bf16.pop %v3476
    %v3479 = vmul.bf16 %v3474, 1069105081
    %v3480 = vpow.bf16.pop %v3479
    %v3481 = vadd.bf16 %v3477, 1065369472
    %v3482 = vadd.bf16 %v3480, 1065369472
    %v3483 = vrcp.bf16.pop %v3481
    %v3484 = vmul.bf16 1065369472, %v3483
    %v3485 = vrcp.bf16.pop %v3482
    %v3486 = vmul.bf16 1065369472, %v3485
    %v3487 = vxor.u32 %v3470, 2147516416
    %v3488 = vxor.u32 %v3472, 2147516416
    %v3490 = vmul.bf16 %v3487, 1069105081
    %v3491 = vpow.bf16.pop %v3490
    %v3493 = vmul.bf16 %v3488, 1069105081
    %v3494 = vpow.bf16.pop %v3493
    %v3495 = vadd.bf16 %v3491, 1065369472
    %v3496 = vadd.bf16 %v3494, 1065369472
    %v3497 = vrcp.bf16.pop %v3495
    %v3498 = vmul.bf16 1065369472, %v3497
    %v3499 = vrcp.bf16.pop %v3496
    %v3500 = vmul.bf16 1065369472, %v3499
    %v3501 = vld [vmem:[#allocation2 + $0x210] sm:$0xff]
    %v3502 = vld [vmem:[#allocation2 + $0x218] sm:$0xff]
    %v3503 = vld [vmem:[#allocation2 + $0x230] sm:$0xff]
    %v3504 = vld [vmem:[#allocation2 + $0x238] sm:$0xff]
    %3505 = vmatprep.subr.bf16.mxu0 %v1345
    %3506 = vmatpush1.bf16.msra.mxu0 %v1344
    %3507 = vmatprep.subr.bf16.mxu0 %v1347
    %3508 = vmatpush1.bf16.msra.mxu0 %v1346
    %3509 = vmatprep.subr.bf16.mxu0 %v1349
    %3510 = vmatpush1.bf16.msra.mxu0 %v1348
    %3511 = vmatprep.subr.bf16.mxu0 %v1351
    %3512 = vmatpush1.bf16.msra.mxu0 %v1350
    %3513 = vmatprep.subr.bf16.mxu0 %v1353
    %3514 = vmatpush1.bf16.msra.mxu0 %v1352
    %3515 = vmatprep.subr.bf16.mxu0 %v1355
    %3516 = vmatpush1.bf16.msra.mxu0 %v1354
    %3517 = vmatprep.subr.bf16.mxu0 %v1357
    %3518 = vmatpush1.bf16.msra.mxu0 %v1356
    %3519 = vmatprep.subr.bf16.mxu0 %v1359
    %3520 = vmatpush1.bf16.msra.mxu0 %v1358
    %3521 = vmatprep.subr.bf16.mxu0 0
    %3522 = vmatpush1.bf16.msra.mxu0 0
    %3523 = vmatprep.subr.bf16.mxu0 0
    %3524 = vmatpush1.bf16.msra.mxu0 0
    %3525 = vmatprep.subr.bf16.mxu0 0
    %3526 = vmatpush1.bf16.msra.mxu0 0
    %3527 = vmatprep.subr.bf16.mxu0 0
    %3528 = vmatpush1.bf16.msra.mxu0 0
    %3529 = vmatprep.subr.bf16.mxu0 0
    %3530 = vmatpush1.bf16.msra.mxu0 0
    %3531 = vmatprep.subr.bf16.mxu0 0
    %3532 = vmatpush1.bf16.msra.mxu0 0
    %3533 = vmatprep.subr.bf16.mxu0 0
    %3534 = vmatpush1.bf16.msra.mxu0 0
    %3535 = vmatprep.subr.bf16.mxu0 0
    %3536 = vmatpush1.bf16.msra.mxu0 0
    %3537 = vmatprep.mubr.bf16.mxu0 0
    %3538 = vmatmul.mubr.bf16.gmra.mrb[0].mxu0 %v3350
    %v3539 = vpop.f32.mrb[0].mxu0
    %v3540 = vadd.f32 0.0, %v3539
    %v3541 = vpop.f32.mrb[0].mxu0
    %v3542 = vadd.f32 0.0, %v3541
    %v3543 = vpop.f32.mrb[0].mxu0
    %v3544 = vadd.f32 0.0, %v3543
    %v3545 = vpop.f32.mrb[0].mxu0
    %v3546 = vadd.f32 0.0, %v3545
    %3547 = vmatprep.mubr.bf16.mxu0 0
    %3548 = vmatmul.mubr.bf16.gmra.mrb[0].mxu0 %v3351
    %v3549 = vpop.f32.mrb[0].mxu0
    %v3550 = vadd.f32 0.0, %v3549
    %v3551 = vpop.f32.mrb[0].mxu0
    %v3552 = vadd.f32 0.0, %v3551
    %v3553 = vpop.f32.mrb[0].mxu0
    %v3554 = vadd.f32 0.0, %v3553
    %v3555 = vpop.f32.mrb[0].mxu0
    %v3556 = vadd.f32 0.0, %v3555
    %3557 = vdwg.mxu0
    %v3558 = vunpack.c.l.bf16 %v3501
    %v3559 = vunpack.c.l.bf16 %v3502
    %v3560 = vunpack.c.h.bf16 %v3501
    %v3561 = vunpack.c.h.bf16 %v3502
    %v3562 = vunpack.c.l.bf16 %v3503
    %v3563 = vunpack.c.l.bf16 %v3504
    %v3564 = vunpack.c.h.bf16 %v3503
    %v3565 = vunpack.c.h.bf16 %v3504
    %v3566 = vadd.f32 %v3558, %v3540
    %v3567 = vadd.f32 %v3559, %v3542
    %v3568 = vadd.f32 %v3560, %v3544
    %v3569 = vadd.f32 %v3561, %v3546
    %v3570 = vadd.f32 %v3562, %v3550
    %v3571 = vadd.f32 %v3563, %v3552
    %v3572 = vadd.f32 %v3564, %v3554
    %v3573 = vadd.f32 %v3565, %v3556
    %v3574 = vpack.c.bf16 %v3568, %v3566
    %v3575 = vpack.c.bf16 %v3569, %v3567
    %v3576 = vpack.c.bf16 %v3572, %v3570
    %v3577 = vpack.c.bf16 %v3573, %v3571
    %v3578 = vtanh.bf16.pop %v3574
    %v3579 = vtanh.bf16.pop %v3576
    %v3580 = vxor.u32 %v3575, 2147516416
    %v3581 = vxor.u32 %v3577, 2147516416
    %v3583 = vmul.bf16 %v3580, 1069105081
    %v3584 = vpow.bf16.pop %v3583
    %v3586 = vmul.bf16 %v3581, 1069105081
    %v3587 = vpow.bf16.pop %v3586
    %v3588 = vadd.bf16 %v3584, 1065369472
    %v3589 = vadd.bf16 %v3587, 1065369472
    %v3590 = vrcp.bf16.pop %v3588
    %v3591 = vmul.bf16 1065369472, %v3590
    %v3592 = vrcp.bf16.pop %v3589
    %v3593 = vmul.bf16 1065369472, %v3592
    %v3594 = vunpack.c.l.bf16 %v3498
    %v3595 = vunpack.c.h.bf16 %v3498
    %v3596 = vunpack.c.l.bf16 %v3500
    %v3597 = vunpack.c.h.bf16 %v3500
    %v3598 = vmul.f32 %v3594, %v3342
    %v3599 = vmul.f32 %v3595, %v3343
    %v3600 = vmul.f32 %v3596, %v3344
    %v3601 = vmul.f32 %v3597, %v3345
    %v3602 = vmul.bf16 %v3484, %v3578
    %v3603 = vmul.bf16 %v3486, %v3579
    %v3604 = vunpack.c.l.bf16 %v3602
    %v3605 = vunpack.c.h.bf16 %v3602
    %v3606 = vunpack.c.l.bf16 %v3603
    %v3607 = vunpack.c.h.bf16 %v3603
    %v3608 = vadd.f32 %v3598, %v3604
    %v3609 = vadd.f32 %v3599, %v3605
    %v3610 = vadd.f32 %v3600, %v3606
    %v3611 = vadd.f32 %v3601, %v3607
    %v3612 = vpack.c.bf16 %v3609, %v3608
    %v3613 = vpack.c.bf16 %v3611, %v3610
    %v3614 = vtanh.bf16.pop %v3612
    %v3615 = vtanh.bf16.pop %v3613
    %v3616 = vmul.bf16 %v3591, %v3614
    %v3617 = vmul.bf16 %v3593, %v3615
    %3618 = vmatprep.subr.bf16.mxu0 0
    %3619 = vmatpush1.bf16.xpose.msra.mxu0 %v3616
    %3620 = vmatprep.subr.bf16.mxu0 0
    %3621 = vmatpush1.bf16.xpose.msra.mxu0 %v3617
    %3622 = vmatprep.subr.bf16.mxu0 0
    %3623 = vmatpush1.bf16.xpose.msra.mxu0 0
    %3624 = vmatprep.subr.bf16.mxu0 0
    %3625 = vmatpush1.bf16.xpose.msra.mxu0 0
    %3626 = vmatprep.subr.bf16.mxu0 0
    %3627 = vmatpush1.bf16.xpose.msra.mxu0 0
    %3628 = vmatprep.subr.bf16.mxu0 0
    %3629 = vmatpush1.bf16.xpose.msra.mxu0 0
    %3630 = vmatprep.subr.bf16.mxu0 0
    %3631 = vmatpush1.bf16.xpose.msra.mxu0 0
    %3632 = vmatprep.subr.bf16.mxu0 0
    %3633 = vmatpush1.bf16.xpose.msra.mxu0 0
    %3634 = vmatprep.subr.bf16.mxu0 0
    %3635 = vmatpush1.bf16.xpose.msra.mxu0 0
    %3636 = vmatprep.subr.bf16.mxu0 0
    %3637 = vmatpush1.bf16.xpose.msra.mxu0 0
    %3638 = vmatprep.subr.bf16.mxu0 0
    %3639 = vmatpush1.bf16.xpose.msra.mxu0 0
    %3640 = vmatprep.subr.bf16.mxu0 0
    %3641 = vmatpush1.bf16.xpose.msra.mxu0 0
    %3642 = vmatprep.subr.bf16.mxu0 0
    %3643 = vmatpush1.bf16.xpose.msra.mxu0 0
    %3644 = vmatprep.subr.bf16.mxu0 0
    %3645 = vmatpush1.bf16.xpose.msra.mxu0 0
    %3646 = vmatprep.subr.bf16.mxu0 0
    %3647 = vmatpush1.bf16.xpose.msra.mxu0 0
    %3648 = vmatprep.subr.bf16.mxu0 0
    %3649 = vmatpush1.bf16.xpose.msra.mxu0 0
    %3650 = vmatprep.mubr.bf16.mxu0 0
    %3651 = vmatmul.mubr.bf16.gmra.mrb[0].mxu0 %v1489
    %v3652 = vpop.f32.mrb[0].mxu0
    %v3653 = vadd.f32 0.0, %v3652
    %v3654 = vpop.f32.mrb[0].mxu0
    %v3655 = vpop.f32.mrb[0].mxu0
    %v3656 = vpop.f32.mrb[0].mxu0
    %3657 = vdwg.mxu0
    %s3658 = sld [smem:[#allocation4 + $0x8]]
    %v3659 = vstv %s3658
    %v3660 = vmul.f32 %v3659, %v3653
    %v3661 = vadd.f32 %v3395, %v3660
    %v3662 = vld [vmem:[#allocation2 + $0x240] sm:$0xff]
    %v3663 = vld [vmem:[#allocation2 + $0x248] sm:$0xff]
    %v3664 = vld [vmem:[#allocation2 + $0x260] sm:$0xff]
    %v3665 = vld [vmem:[#allocation2 + $0x268] sm:$0xff]
    %3666 = vmatprep.subr.bf16.mxu0 %v1144
    %3667 = vmatpush1.bf16.msra.mxu0 %v1143
    %3668 = vmatprep.subr.bf16.mxu0 %v1146
    %3669 = vmatpush1.bf16.msra.mxu0 %v1145
    %3670 = vmatprep.subr.bf16.mxu0 %v1148
    %3671 = vmatpush1.bf16.msra.mxu0 %v1147
    %3672 = vmatprep.subr.bf16.mxu0 %v1150
    %3673 = vmatpush1.bf16.msra.mxu0 %v1149
    %3674 = vmatprep.subr.bf16.mxu0 %v1152
    %3675 = vmatpush1.bf16.msra.mxu0 %v1151
    %3676 = vmatprep.subr.bf16.mxu0 %v1154
    %3677 = vmatpush1.bf16.msra.mxu0 %v1153
    %3678 = vmatprep.subr.bf16.mxu0 %v1156
    %3679 = vmatpush1.bf16.msra.mxu0 %v1155
    %3680 = vmatprep.subr.bf16.mxu0 %v1158
    %3681 = vmatpush1.bf16.msra.mxu0 %v1157
    %3682 = vmatprep.subr.bf16.mxu0 0
    %3683 = vmatpush1.bf16.msra.mxu0 0
    %3684 = vmatprep.subr.bf16.mxu0 0
    %3685 = vmatpush1.bf16.msra.mxu0 0
    %3686 = vmatprep.subr.bf16.mxu0 0
    %3687 = vmatpush1.bf16.msra.mxu0 0
    %3688 = vmatprep.subr.bf16.mxu0 0
    %3689 = vmatpush1.bf16.msra.mxu0 0
    %3690 = vmatprep.subr.bf16.mxu0 0
    %3691 = vmatpush1.bf16.msra.mxu0 0
    %3692 = vmatprep.subr.bf16.mxu0 0
    %3693 = vmatpush1.bf16.msra.mxu0 0
    %3694 = vmatprep.subr.bf16.mxu0 0
    %3695 = vmatpush1.bf16.msra.mxu0 0
    %3696 = vmatprep.subr.bf16.mxu0 0
    %3697 = vmatpush1.bf16.msra.mxu0 0
    %3698 = vmatprep.mubr.bf16.mxu0 0
    %3699 = vmatmul.mubr.bf16.gmra.mrb[0].mxu0 %v3616
    %v3700 = vpop.f32.mrb[0].mxu0
    %v3701 = vadd.f32 0.0, %v3700
    %v3702 = vpop.f32.mrb[0].mxu0
    %v3703 = vadd.f32 0.0, %v3702
    %v3704 = vpop.f32.mrb[0].mxu0
    %v3705 = vadd.f32 0.0, %v3704
    %v3706 = vpop.f32.mrb[0].mxu0
    %v3707 = vadd.f32 0.0, %v3706
    %3708 = vmatprep.mubr.bf16.mxu0 0
    %3709 = vmatmul.mubr.bf16.gmra.mrb[0].mxu0 %v3617
    %v3710 = vpop.f32.mrb[0].mxu0
    %v3711 = vadd.f32 0.0, %v3710
    %v3712 = vpop.f32.mrb[0].mxu0
    %v3713 = vadd.f32 0.0, %v3712
    %v3714 = vpop.f32.mrb[0].mxu0
    %v3715 = vadd.f32 0.0, %v3714
    %v3716 = vpop.f32.mrb[0].mxu0
    %v3717 = vadd.f32 0.0, %v3716
    %3718 = vdwg.mxu0
    %v3719 = vunpack.c.l.bf16 %v3662
    %v3720 = vunpack.c.l.bf16 %v3663
    %v3721 = vunpack.c.h.bf16 %v3662
    %v3722 = vunpack.c.h.bf16 %v3663
    %v3723 = vunpack.c.l.bf16 %v3664
    %v3724 = vunpack.c.l.bf16 %v3665
    %v3725 = vunpack.c.h.bf16 %v3664
    %v3726 = vunpack.c.h.bf16 %v3665
    %v3727 = vadd.f32 %v3719, %v3701
    %v3728 = vadd.f32 %v3720, %v3703
    %v3729 = vadd.f32 %v3721, %v3705
    %v3730 = vadd.f32 %v3722, %v3707
    %v3731 = vadd.f32 %v3723, %v3711
    %v3732 = vadd.f32 %v3724, %v3713
    %v3733 = vadd.f32 %v3725, %v3715
    %v3734 = vadd.f32 %v3726, %v3717
    %v3735 = vpack.c.bf16 %v3729, %v3727
    %v3736 = vpack.c.bf16 %v3730, %v3728
    %v3737 = vpack.c.bf16 %v3733, %v3731
    %v3738 = vpack.c.bf16 %v3734, %v3732
    %v3739 = vxor.u32 %v3735, 2147516416
    %v3740 = vxor.u32 %v3737, 2147516416
    %v3742 = vmul.bf16 %v3739, 1069105081
    %v3743 = vpow.bf16.pop %v3742
    %v3745 = vmul.bf16 %v3740, 1069105081
    %v3746 = vpow.bf16.pop %v3745
    %v3747 = vadd.bf16 %v3743, 1065369472
    %v3748 = vadd.bf16 %v3746, 1065369472
    %v3749 = vrcp.bf16.pop %v3747
    %v3750 = vmul.bf16 1065369472, %v3749
    %v3751 = vrcp.bf16.pop %v3748
    %v3752 = vmul.bf16 1065369472, %v3751
    %v3753 = vxor.u32 %v3736, 2147516416
    %v3754 = vxor.u32 %v3738, 2147516416
    %v3756 = vmul.bf16 %v3753, 1069105081
    %v3757 = vpow.bf16.pop %v3756
    %v3759 = vmul.bf16 %v3754, 1069105081
    %v3760 = vpow.bf16.pop %v3759
    %v3761 = vadd.bf16 %v3757, 1065369472
    %v3762 = vadd.bf16 %v3760, 1065369472
    %v3763 = vrcp.bf16.pop %v3761
    %v3764 = vmul.bf16 1065369472, %v3763
    %v3765 = vrcp.bf16.pop %v3762
    %v3766 = vmul.bf16 1065369472, %v3765
    %v3767 = vld [vmem:[#allocation2 + $0x250] sm:$0xff]
    %v3768 = vld [vmem:[#allocation2 + $0x258] sm:$0xff]
    %v3769 = vld [vmem:[#allocation2 + $0x270] sm:$0xff]
    %v3770 = vld [vmem:[#allocation2 + $0x278] sm:$0xff]
    %3771 = vmatprep.subr.bf16.mxu0 %v1345
    %3772 = vmatpush1.bf16.msra.mxu0 %v1344
    %3773 = vmatprep.subr.bf16.mxu0 %v1347
    %3774 = vmatpush1.bf16.msra.mxu0 %v1346
    %3775 = vmatprep.subr.bf16.mxu0 %v1349
    %3776 = vmatpush1.bf16.msra.mxu0 %v1348
    %3777 = vmatprep.subr.bf16.mxu0 %v1351
    %3778 = vmatpush1.bf16.msra.mxu0 %v1350
    %3779 = vmatprep.subr.bf16.mxu0 %v1353
    %3780 = vmatpush1.bf16.msra.mxu0 %v1352
    %3781 = vmatprep.subr.bf16.mxu0 %v1355
    %3782 = vmatpush1.bf16.msra.mxu0 %v1354
    %3783 = vmatprep.subr.bf16.mxu0 %v1357
    %3784 = vmatpush1.bf16.msra.mxu0 %v1356
    %3785 = vmatprep.subr.bf16.mxu0 %v1359
    %3786 = vmatpush1.bf16.msra.mxu0 %v1358
    %3787 = vmatprep.subr.bf16.mxu0 0
    %3788 = vmatpush1.bf16.msra.mxu0 0
    %3789 = vmatprep.subr.bf16.mxu0 0
    %3790 = vmatpush1.bf16.msra.mxu0 0
    %3791 = vmatprep.subr.bf16.mxu0 0
    %3792 = vmatpush1.bf16.msra.mxu0 0
    %3793 = vmatprep.subr.bf16.mxu0 0
    %3794 = vmatpush1.bf16.msra.mxu0 0
    %3795 = vmatprep.subr.bf16.mxu0 0
    %3796 = vmatpush1.bf16.msra.mxu0 0
    %3797 = vmatprep.subr.bf16.mxu0 0
    %3798 = vmatpush1.bf16.msra.mxu0 0
    %3799 = vmatprep.subr.bf16.mxu0 0
    %3800 = vmatpush1.bf16.msra.mxu0 0
    %3801 = vmatprep.subr.bf16.mxu0 0
    %3802 = vmatpush1.bf16.msra.mxu0 0
    %3803 = vmatprep.mubr.bf16.mxu0 0
    %3804 = vmatmul.mubr.bf16.gmra.mrb[0].mxu0 %v3616
    %v3805 = vpop.f32.mrb[0].mxu0
    %v3806 = vadd.f32 0.0, %v3805
    %v3807 = vpop.f32.mrb[0].mxu0
    %v3808 = vadd.f32 0.0, %v3807
    %v3809 = vpop.f32.mrb[0].mxu0
    %v3810 = vadd.f32 0.0, %v3809
    %v3811 = vpop.f32.mrb[0].mxu0
    %v3812 = vadd.f32 0.0, %v3811
    %3813 = vmatprep.mubr.bf16.mxu0 0
    %3814 = vmatmul.mubr.bf16.gmra.mrb[0].mxu0 %v3617
    %v3815 = vpop.f32.mrb[0].mxu0
    %v3816 = vadd.f32 0.0, %v3815
    %v3817 = vpop.f32.mrb[0].mxu0
    %v3818 = vadd.f32 0.0, %v3817
    %v3819 = vpop.f32.mrb[0].mxu0
    %v3820 = vadd.f32 0.0, %v3819
    %v3821 = vpop.f32.mrb[0].mxu0
    %v3822 = vadd.f32 0.0, %v3821
    %3823 = vdwg.mxu0
    %v3824 = vunpack.c.l.bf16 %v3767
    %v3825 = vunpack.c.l.bf16 %v3768
    %v3826 = vunpack.c.h.bf16 %v3767
    %v3827 = vunpack.c.h.bf16 %v3768
    %v3828 = vunpack.c.l.bf16 %v3769
    %v3829 = vunpack.c.l.bf16 %v3770
    %v3830 = vunpack.c.h.bf16 %v3769
    %v3831 = vunpack.c.h.bf16 %v3770
    %v3832 = vadd.f32 %v3824, %v3806
    %v3833 = vadd.f32 %v3825, %v3808
    %v3834 = vadd.f32 %v3826, %v3810
    %v3835 = vadd.f32 %v3827, %v3812
    %v3836 = vadd.f32 %v3828, %v3816
    %v3837 = vadd.f32 %v3829, %v3818
    %v3838 = vadd.f32 %v3830, %v3820
    %v3839 = vadd.f32 %v3831, %v3822
    %v3840 = vpack.c.bf16 %v3834, %v3832
    %v3841 = vpack.c.bf16 %v3835, %v3833
    %v3842 = vpack.c.bf16 %v3838, %v3836
    %v3843 = vpack.c.bf16 %v3839, %v3837
    %v3844 = vtanh.bf16.pop %v3840
    %v3845 = vtanh.bf16.pop %v3842
    %v3846 = vxor.u32 %v3841, 2147516416
    %v3847 = vxor.u32 %v3843, 2147516416
    %v3849 = vmul.bf16 %v3846, 1069105081
    %v3850 = vpow.bf16.pop %v3849
    %v3852 = vmul.bf16 %v3847, 1069105081
    %v3853 = vpow.bf16.pop %v3852
    %v3854 = vadd.bf16 %v3850, 1065369472
    %v3855 = vadd.bf16 %v3853, 1065369472
    %v3856 = vrcp.bf16.pop %v3854
    %v3857 = vmul.bf16 1065369472, %v3856
    %v3858 = vrcp.bf16.pop %v3855
    %v3859 = vmul.bf16 1065369472, %v3858
    %v3860 = vunpack.c.l.bf16 %v3764
    %v3861 = vunpack.c.h.bf16 %v3764
    %v3862 = vunpack.c.l.bf16 %v3766
    %v3863 = vunpack.c.h.bf16 %v3766
    %v3864 = vmul.f32 %v3860, %v3608
    %v3865 = vmul.f32 %v3861, %v3609
    %v3866 = vmul.f32 %v3862, %v3610
    %v3867 = vmul.f32 %v3863, %v3611
    %v3868 = vmul.bf16 %v3750, %v3844
    %v3869 = vmul.bf16 %v3752, %v3845
    %v3870 = vunpack.c.l.bf16 %v3868
    %v3871 = vunpack.c.h.bf16 %v3868
    %v3872 = vunpack.c.l.bf16 %v3869
    %v3873 = vunpack.c.h.bf16 %v3869
    %v3874 = vadd.f32 %v3864, %v3870
    %v3875 = vadd.f32 %v3865, %v3871
    %v3876 = vadd.f32 %v3866, %v3872
    %v3877 = vadd.f32 %v3867, %v3873
    %v3878 = vpack.c.bf16 %v3875, %v3874
    %v3879 = vpack.c.bf16 %v3877, %v3876
    %v3880 = vtanh.bf16.pop %v3878
    %v3881 = vtanh.bf16.pop %v3879
    %v3882 = vmul.bf16 %v3857, %v3880
    %v3883 = vmul.bf16 %v3859, %v3881
    %3884 = vmatprep.subr.bf16.mxu0 0
    %3885 = vmatpush1.bf16.xpose.msra.mxu0 %v3882
    %3886 = vmatprep.subr.bf16.mxu0 0
    %3887 = vmatpush1.bf16.xpose.msra.mxu0 %v3883
    %3888 = vmatprep.subr.bf16.mxu0 0
    %3889 = vmatpush1.bf16.xpose.msra.mxu0 0
    %3890 = vmatprep.subr.bf16.mxu0 0
    %3891 = vmatpush1.bf16.xpose.msra.mxu0 0
    %3892 = vmatprep.subr.bf16.mxu0 0
    %3893 = vmatpush1.bf16.xpose.msra.mxu0 0
    %3894 = vmatprep.subr.bf16.mxu0 0
    %3895 = vmatpush1.bf16.xpose.msra.mxu0 0
    %3896 = vmatprep.subr.bf16.mxu0 0
    %3897 = vmatpush1.bf16.xpose.msra.mxu0 0
    %3898 = vmatprep.subr.bf16.mxu0 0
    %3899 = vmatpush1.bf16.xpose.msra.mxu0 0
    %3900 = vmatprep.subr.bf16.mxu0 0
    %3901 = vmatpush1.bf16.xpose.msra.mxu0 0
    %3902 = vmatprep.subr.bf16.mxu0 0
    %3903 = vmatpush1.bf16.xpose.msra.mxu0 0
    %3904 = vmatprep.subr.bf16.mxu0 0
    %3905 = vmatpush1.bf16.xpose.msra.mxu0 0
    %3906 = vmatprep.subr.bf16.mxu0 0
    %3907 = vmatpush1.bf16.xpose.msra.mxu0 0
    %3908 = vmatprep.subr.bf16.mxu0 0
    %3909 = vmatpush1.bf16.xpose.msra.mxu0 0
    %3910 = vmatprep.subr.bf16.mxu0 0
    %3911 = vmatpush1.bf16.xpose.msra.mxu0 0
    %3912 = vmatprep.subr.bf16.mxu0 0
    %3913 = vmatpush1.bf16.xpose.msra.mxu0 0
    %3914 = vmatprep.subr.bf16.mxu0 0
    %3915 = vmatpush1.bf16.xpose.msra.mxu0 0
    %3916 = vmatprep.mubr.bf16.mxu0 0
    %3917 = vmatmul.mubr.bf16.gmra.mrb[0].mxu0 %v1489
    %v3918 = vpop.f32.mrb[0].mxu0
    %v3919 = vadd.f32 0.0, %v3918
    %v3920 = vpop.f32.mrb[0].mxu0
    %v3921 = vpop.f32.mrb[0].mxu0
    %v3922 = vpop.f32.mrb[0].mxu0
    %3923 = vdwg.mxu0
    %s3924 = sld [smem:[#allocation4 + $0x9]]
    %v3925 = vstv %s3924
    %v3926 = vmul.f32 %v3925, %v3919
    %v3927 = vadd.f32 %v3661, %v3926
    %v3928 = vld [vmem:[#allocation2 + $0x280] sm:$0xff]
    %v3929 = vld [vmem:[#allocation2 + $0x288] sm:$0xff]
    %v3930 = vld [vmem:[#allocation2 + $0x2a0] sm:$0xff]
    %v3931 = vld [vmem:[#allocation2 + $0x2a8] sm:$0xff]
    %3932 = vmatprep.subr.bf16.mxu0 %v1144
    %3933 = vmatpush1.bf16.msra.mxu0 %v1143
    %3934 = vmatprep.subr.bf16.mxu0 %v1146
    %3935 = vmatpush1.bf16.msra.mxu0 %v1145
    %3936 = vmatprep.subr.bf16.mxu0 %v1148
    %3937 = vmatpush1.bf16.msra.mxu0 %v1147
    %3938 = vmatprep.subr.bf16.mxu0 %v1150
    %3939 = vmatpush1.bf16.msra.mxu0 %v1149
    %3940 = vmatprep.subr.bf16.mxu0 %v1152
    %3941 = vmatpush1.bf16.msra.mxu0 %v1151
    %3942 = vmatprep.subr.bf16.mxu0 %v1154
    %3943 = vmatpush1.bf16.msra.mxu0 %v1153
    %3944 = vmatprep.subr.bf16.mxu0 %v1156
    %3945 = vmatpush1.bf16.msra.mxu0 %v1155
    %3946 = vmatprep.subr.bf16.mxu0 %v1158
    %3947 = vmatpush1.bf16.msra.mxu0 %v1157
    %3948 = vmatprep.subr.bf16.mxu0 0
    %3949 = vmatpush1.bf16.msra.mxu0 0
    %3950 = vmatprep.subr.bf16.mxu0 0
    %3951 = vmatpush1.bf16.msra.mxu0 0
    %3952 = vmatprep.subr.bf16.mxu0 0
    %3953 = vmatpush1.bf16.msra.mxu0 0
    %3954 = vmatprep.subr.bf16.mxu0 0
    %3955 = vmatpush1.bf16.msra.mxu0 0
    %3956 = vmatprep.subr.bf16.mxu0 0
    %3957 = vmatpush1.bf16.msra.mxu0 0
    %3958 = vmatprep.subr.bf16.mxu0 0
    %3959 = vmatpush1.bf16.msra.mxu0 0
    %3960 = vmatprep.subr.bf16.mxu0 0
    %3961 = vmatpush1.bf16.msra.mxu0 0
    %3962 = vmatprep.subr.bf16.mxu0 0
    %3963 = vmatpush1.bf16.msra.mxu0 0
    %3964 = vmatprep.mubr.bf16.mxu0 0
    %3965 = vmatmul.mubr.bf16.gmra.mrb[0].mxu0 %v3882
    %v3966 = vpop.f32.mrb[0].mxu0
    %v3967 = vadd.f32 0.0, %v3966
    %v3968 = vpop.f32.mrb[0].mxu0
    %v3969 = vadd.f32 0.0, %v3968
    %v3970 = vpop.f32.mrb[0].mxu0
    %v3971 = vadd.f32 0.0, %v3970
    %v3972 = vpop.f32.mrb[0].mxu0
    %v3973 = vadd.f32 0.0, %v3972
    %3974 = vmatprep.mubr.bf16.mxu0 0
    %3975 = vmatmul.mubr.bf16.gmra.mrb[0].mxu0 %v3883
    %v3976 = vpop.f32.mrb[0].mxu0
    %v3977 = vadd.f32 0.0, %v3976
    %v3978 = vpop.f32.mrb[0].mxu0
    %v3979 = vadd.f32 0.0, %v3978
    %v3980 = vpop.f32.mrb[0].mxu0
    %v3981 = vadd.f32 0.0, %v3980
    %v3982 = vpop.f32.mrb[0].mxu0
    %v3983 = vadd.f32 0.0, %v3982
    %3984 = vdwg.mxu0
    %v3985 = vunpack.c.l.bf16 %v3928
    %v3986 = vunpack.c.l.bf16 %v3929
    %v3987 = vunpack.c.h.bf16 %v3928
    %v3988 = vunpack.c.h.bf16 %v3929
    %v3989 = vunpack.c.l.bf16 %v3930
    %v3990 = vunpack.c.l.bf16 %v3931
    %v3991 = vunpack.c.h.bf16 %v3930
    %v3992 = vunpack.c.h.bf16 %v3931
    %v3993 = vadd.f32 %v3985, %v3967
    %v3994 = vadd.f32 %v3986, %v3969
    %v3995 = vadd.f32 %v3987, %v3971
    %v3996 = vadd.f32 %v3988, %v3973
    %v3997 = vadd.f32 %v3989, %v3977
    %v3998 = vadd.f32 %v3990, %v3979
    %v3999 = vadd.f32 %v3991, %v3981
    %v4000 = vadd.f32 %v3992, %v3983
    %v4001 = vpack.c.bf16 %v3995, %v3993
    %v4002 = vpack.c.bf16 %v3996, %v3994
    %v4003 = vpack.c.bf16 %v3999, %v3997
    %v4004 = vpack.c.bf16 %v4000, %v3998
    %v4005 = vxor.u32 %v4001, 2147516416
    %v4006 = vxor.u32 %v4003, 2147516416
    %v4008 = vmul.bf16 %v4005, 1069105081
    %v4009 = vpow.bf16.pop %v4008
    %v4011 = vmul.bf16 %v4006, 1069105081
    %v4012 = vpow.bf16.pop %v4011
    %v4013 = vadd.bf16 %v4009, 1065369472
    %v4014 = vadd.bf16 %v4012, 1065369472
    %v4015 = vrcp.bf16.pop %v4013
    %v4016 = vmul.bf16 1065369472, %v4015
    %v4017 = vrcp.bf16.pop %v4014
    %v4018 = vmul.bf16 1065369472, %v4017
    %v4019 = vxor.u32 %v4002, 2147516416
    %v4020 = vxor.u32 %v4004, 2147516416
    %v4022 = vmul.bf16 %v4019, 1069105081
    %v4023 = vpow.bf16.pop %v4022
    %v4025 = vmul.bf16 %v4020, 1069105081
    %v4026 = vpow.bf16.pop %v4025
    %v4027 = vadd.bf16 %v4023, 1065369472
    %v4028 = vadd.bf16 %v4026, 1065369472
    %v4029 = vrcp.bf16.pop %v4027
    %v4030 = vmul.bf16 1065369472, %v4029
    %v4031 = vrcp.bf16.pop %v4028
    %v4032 = vmul.bf16 1065369472, %v4031
    %v4033 = vld [vmem:[#allocation2 + $0x290] sm:$0xff]
    %v4034 = vld [vmem:[#allocation2 + $0x298] sm:$0xff]
    %v4035 = vld [vmem:[#allocation2 + $0x2b0] sm:$0xff]
    %v4036 = vld [vmem:[#allocation2 + $0x2b8] sm:$0xff]
    %4037 = vmatprep.subr.bf16.mxu0 %v1345
    %4038 = vmatpush1.bf16.msra.mxu0 %v1344
    %4039 = vmatprep.subr.bf16.mxu0 %v1347
    %4040 = vmatpush1.bf16.msra.mxu0 %v1346
    %4041 = vmatprep.subr.bf16.mxu0 %v1349
    %4042 = vmatpush1.bf16.msra.mxu0 %v1348
    %4043 = vmatprep.subr.bf16.mxu0 %v1351
    %4044 = vmatpush1.bf16.msra.mxu0 %v1350
    %4045 = vmatprep.subr.bf16.mxu0 %v1353
    %4046 = vmatpush1.bf16.msra.mxu0 %v1352
    %4047 = vmatprep.subr.bf16.mxu0 %v1355
    %4048 = vmatpush1.bf16.msra.mxu0 %v1354
    %4049 = vmatprep.subr.bf16.mxu0 %v1357
    %4050 = vmatpush1.bf16.msra.mxu0 %v1356
    %4051 = vmatprep.subr.bf16.mxu0 %v1359
    %4052 = vmatpush1.bf16.msra.mxu0 %v1358
    %4053 = vmatprep.subr.bf16.mxu0 0
    %4054 = vmatpush1.bf16.msra.mxu0 0
    %4055 = vmatprep.subr.bf16.mxu0 0
    %4056 = vmatpush1.bf16.msra.mxu0 0
    %4057 = vmatprep.subr.bf16.mxu0 0
    %4058 = vmatpush1.bf16.msra.mxu0 0
    %4059 = vmatprep.subr.bf16.mxu0 0
    %4060 = vmatpush1.bf16.msra.mxu0 0
    %4061 = vmatprep.subr.bf16.mxu0 0
    %4062 = vmatpush1.bf16.msra.mxu0 0
    %4063 = vmatprep.subr.bf16.mxu0 0
    %4064 = vmatpush1.bf16.msra.mxu0 0
    %4065 = vmatprep.subr.bf16.mxu0 0
    %4066 = vmatpush1.bf16.msra.mxu0 0
    %4067 = vmatprep.subr.bf16.mxu0 0
    %4068 = vmatpush1.bf16.msra.mxu0 0
    %4069 = vmatprep.mubr.bf16.mxu0 0
    %4070 = vmatmul.mubr.bf16.gmra.mrb[0].mxu0 %v3882
    %v4071 = vpop.f32.mrb[0].mxu0
    %v4072 = vadd.f32 0.0, %v4071
    %v4073 = vpop.f32.mrb[0].mxu0
    %v4074 = vadd.f32 0.0, %v4073
    %v4075 = vpop.f32.mrb[0].mxu0
    %v4076 = vadd.f32 0.0, %v4075
    %v4077 = vpop.f32.mrb[0].mxu0
    %v4078 = vadd.f32 0.0, %v4077
    %4079 = vmatprep.mubr.bf16.mxu0 0
    %4080 = vmatmul.mubr.bf16.gmra.mrb[0].mxu0 %v3883
    %v4081 = vpop.f32.mrb[0].mxu0
    %v4082 = vadd.f32 0.0, %v4081
    %v4083 = vpop.f32.mrb[0].mxu0
    %v4084 = vadd.f32 0.0, %v4083
    %v4085 = vpop.f32.mrb[0].mxu0
    %v4086 = vadd.f32 0.0, %v4085
    %v4087 = vpop.f32.mrb[0].mxu0
    %v4088 = vadd.f32 0.0, %v4087
    %4089 = vdwg.mxu0
    %v4090 = vunpack.c.l.bf16 %v4033
    %v4091 = vunpack.c.l.bf16 %v4034
    %v4092 = vunpack.c.h.bf16 %v4033
    %v4093 = vunpack.c.h.bf16 %v4034
    %v4094 = vunpack.c.l.bf16 %v4035
    %v4095 = vunpack.c.l.bf16 %v4036
    %v4096 = vunpack.c.h.bf16 %v4035
    %v4097 = vunpack.c.h.bf16 %v4036
    %v4098 = vadd.f32 %v4090, %v4072
    %v4099 = vadd.f32 %v4091, %v4074
    %v4100 = vadd.f32 %v4092, %v4076
    %v4101 = vadd.f32 %v4093, %v4078
    %v4102 = vadd.f32 %v4094, %v4082
    %v4103 = vadd.f32 %v4095, %v4084
    %v4104 = vadd.f32 %v4096, %v4086
    %v4105 = vadd.f32 %v4097, %v4088
    %v4106 = vpack.c.bf16 %v4100, %v4098
    %v4107 = vpack.c.bf16 %v4101, %v4099
    %v4108 = vpack.c.bf16 %v4104, %v4102
    %v4109 = vpack.c.bf16 %v4105, %v4103
    %v4110 = vtanh.bf16.pop %v4106
    %v4111 = vtanh.bf16.pop %v4108
    %v4112 = vxor.u32 %v4107, 2147516416
    %v4113 = vxor.u32 %v4109, 2147516416
    %v4115 = vmul.bf16 %v4112, 1069105081
    %v4116 = vpow.bf16.pop %v4115
    %v4118 = vmul.bf16 %v4113, 1069105081
    %v4119 = vpow.bf16.pop %v4118
    %v4120 = vadd.bf16 %v4116, 1065369472
    %v4121 = vadd.bf16 %v4119, 1065369472
    %v4122 = vrcp.bf16.pop %v4120
    %v4123 = vmul.bf16 1065369472, %v4122
    %v4124 = vrcp.bf16.pop %v4121
    %v4125 = vmul.bf16 1065369472, %v4124
    %v4126 = vunpack.c.l.bf16 %v4030
    %v4127 = vunpack.c.h.bf16 %v4030
    %v4128 = vunpack.c.l.bf16 %v4032
    %v4129 = vunpack.c.h.bf16 %v4032
    %v4130 = vmul.f32 %v4126, %v3874
    %v4131 = vmul.f32 %v4127, %v3875
    %v4132 = vmul.f32 %v4128, %v3876
    %v4133 = vmul.f32 %v4129, %v3877
    %v4134 = vmul.bf16 %v4016, %v4110
    %v4135 = vmul.bf16 %v4018, %v4111
    %v4136 = vunpack.c.l.bf16 %v4134
    %v4137 = vunpack.c.h.bf16 %v4134
    %v4138 = vunpack.c.l.bf16 %v4135
    %v4139 = vunpack.c.h.bf16 %v4135
    %v4140 = vadd.f32 %v4130, %v4136
    %v4141 = vadd.f32 %v4131, %v4137
    %v4142 = vadd.f32 %v4132, %v4138
    %v4143 = vadd.f32 %v4133, %v4139
    %v4144 = vpack.c.bf16 %v4141, %v4140
    %v4145 = vpack.c.bf16 %v4143, %v4142
    %v4146 = vtanh.bf16.pop %v4144
    %v4147 = vtanh.bf16.pop %v4145
    %v4148 = vmul.bf16 %v4123, %v4146
    %v4149 = vmul.bf16 %v4125, %v4147
    %4150 = vmatprep.subr.bf16.mxu0 0
    %4151 = vmatpush1.bf16.xpose.msra.mxu0 %v4148
    %4152 = vmatprep.subr.bf16.mxu0 0
    %4153 = vmatpush1.bf16.xpose.msra.mxu0 %v4149
    %4154 = vmatprep.subr.bf16.mxu0 0
    %4155 = vmatpush1.bf16.xpose.msra.mxu0 0
    %4156 = vmatprep.subr.bf16.mxu0 0
    %4157 = vmatpush1.bf16.xpose.msra.mxu0 0
    %4158 = vmatprep.subr.bf16.mxu0 0
    %4159 = vmatpush1.bf16.xpose.msra.mxu0 0
    %4160 = vmatprep.subr.bf16.mxu0 0
    %4161 = vmatpush1.bf16.xpose.msra.mxu0 0
    %4162 = vmatprep.subr.bf16.mxu0 0
    %4163 = vmatpush1.bf16.xpose.msra.mxu0 0
    %4164 = vmatprep.subr.bf16.mxu0 0
    %4165 = vmatpush1.bf16.xpose.msra.mxu0 0
    %4166 = vmatprep.subr.bf16.mxu0 0
    %4167 = vmatpush1.bf16.xpose.msra.mxu0 0
    %4168 = vmatprep.subr.bf16.mxu0 0
    %4169 = vmatpush1.bf16.xpose.msra.mxu0 0
    %4170 = vmatprep.subr.bf16.mxu0 0
    %4171 = vmatpush1.bf16.xpose.msra.mxu0 0
    %4172 = vmatprep.subr.bf16.mxu0 0
    %4173 = vmatpush1.bf16.xpose.msra.mxu0 0
    %4174 = vmatprep.subr.bf16.mxu0 0
    %4175 = vmatpush1.bf16.xpose.msra.mxu0 0
    %4176 = vmatprep.subr.bf16.mxu0 0
    %4177 = vmatpush1.bf16.xpose.msra.mxu0 0
    %4178 = vmatprep.subr.bf16.mxu0 0
    %4179 = vmatpush1.bf16.xpose.msra.mxu0 0
    %4180 = vmatprep.subr.bf16.mxu0 0
    %4181 = vmatpush1.bf16.xpose.msra.mxu0 0
    %4182 = vmatprep.mubr.bf16.mxu0 0
    %4183 = vmatmul.mubr.bf16.gmra.mrb[0].mxu0 %v1489
    %v4184 = vpop.f32.mrb[0].mxu0
    %v4185 = vadd.f32 0.0, %v4184
    %v4186 = vpop.f32.mrb[0].mxu0
    %v4187 = vpop.f32.mrb[0].mxu0
    %v4188 = vpop.f32.mrb[0].mxu0
    %4189 = vdwg.mxu0
    %s4190 = sld [smem:[#allocation4 + $0xa]]
    %v4191 = vstv %s4190
    %v4192 = vmul.f32 %v4191, %v4185
    %v4193 = vadd.f32 %v3927, %v4192
    %v4194 = vld [vmem:[#allocation2 + $0x2c0] sm:$0xff]
    %v4195 = vld [vmem:[#allocation2 + $0x2c8] sm:$0xff]
    %v4196 = vld [vmem:[#allocation2 + $0x2e0] sm:$0xff]
    %v4197 = vld [vmem:[#allocation2 + $0x2e8] sm:$0xff]
    %4198 = vmatprep.subr.bf16.mxu0 %v1144
    %4199 = vmatpush1.bf16.msra.mxu0 %v1143
    %4200 = vmatprep.subr.bf16.mxu0 %v1146
    %4201 = vmatpush1.bf16.msra.mxu0 %v1145
    %4202 = vmatprep.subr.bf16.mxu0 %v1148
    %4203 = vmatpush1.bf16.msra.mxu0 %v1147
    %4204 = vmatprep.subr.bf16.mxu0 %v1150
    %4205 = vmatpush1.bf16.msra.mxu0 %v1149
    %4206 = vmatprep.subr.bf16.mxu0 %v1152
    %4207 = vmatpush1.bf16.msra.mxu0 %v1151
    %4208 = vmatprep.subr.bf16.mxu0 %v1154
    %4209 = vmatpush1.bf16.msra.mxu0 %v1153
    %4210 = vmatprep.subr.bf16.mxu0 %v1156
    %4211 = vmatpush1.bf16.msra.mxu0 %v1155
    %4212 = vmatprep.subr.bf16.mxu0 %v1158
    %4213 = vmatpush1.bf16.msra.mxu0 %v1157
    %4214 = vmatprep.subr.bf16.mxu0 0
    %4215 = vmatpush1.bf16.msra.mxu0 0
    %4216 = vmatprep.subr.bf16.mxu0 0
    %4217 = vmatpush1.bf16.msra.mxu0 0
    %4218 = vmatprep.subr.bf16.mxu0 0
    %4219 = vmatpush1.bf16.msra.mxu0 0
    %4220 = vmatprep.subr.bf16.mxu0 0
    %4221 = vmatpush1.bf16.msra.mxu0 0
    %4222 = vmatprep.subr.bf16.mxu0 0
    %4223 = vmatpush1.bf16.msra.mxu0 0
    %4224 = vmatprep.subr.bf16.mxu0 0
    %4225 = vmatpush1.bf16.msra.mxu0 0
    %4226 = vmatprep.subr.bf16.mxu0 0
    %4227 = vmatpush1.bf16.msra.mxu0 0
    %4228 = vmatprep.subr.bf16.mxu0 0
    %4229 = vmatpush1.bf16.msra.mxu0 0
    %4230 = vmatprep.mubr.bf16.mxu0 0
    %4231 = vmatmul.mubr.bf16.gmra.mrb[0].mxu0 %v4148
    %v4232 = vpop.f32.mrb[0].mxu0
    %v4233 = vadd.f32 0.0, %v4232
    %v4234 = vpop.f32.mrb[0].mxu0
    %v4235 = vadd.f32 0.0, %v4234
    %v4236 = vpop.f32.mrb[0].mxu0
    %v4237 = vadd.f32 0.0, %v4236
    %v4238 = vpop.f32.mrb[0].mxu0
    %v4239 = vadd.f32 0.0, %v4238
    %4240 = vmatprep.mubr.bf16.mxu0 0
    %4241 = vmatmul.mubr.bf16.gmra.mrb[0].mxu0 %v4149
    %v4242 = vpop.f32.mrb[0].mxu0
    %v4243 = vadd.f32 0.0, %v4242
    %v4244 = vpop.f32.mrb[0].mxu0
    %v4245 = vadd.f32 0.0, %v4244
    %v4246 = vpop.f32.mrb[0].mxu0
    %v4247 = vadd.f32 0.0, %v4246
    %v4248 = vpop.f32.mrb[0].mxu0
    %v4249 = vadd.f32 0.0, %v4248
    %4250 = vdwg.mxu0
    %v4251 = vunpack.c.l.bf16 %v4194
    %v4252 = vunpack.c.l.bf16 %v4195
    %v4253 = vunpack.c.h.bf16 %v4194
    %v4254 = vunpack.c.h.bf16 %v4195
    %v4255 = vunpack.c.l.bf16 %v4196
    %v4256 = vunpack.c.l.bf16 %v4197
    %v4257 = vunpack.c.h.bf16 %v4196
    %v4258 = vunpack.c.h.bf16 %v4197
    %v4259 = vadd.f32 %v4251, %v4233
    %v4260 = vadd.f32 %v4252, %v4235
    %v4261 = vadd.f32 %v4253, %v4237
    %v4262 = vadd.f32 %v4254, %v4239
    %v4263 = vadd.f32 %v4255, %v4243
    %v4264 = vadd.f32 %v4256, %v4245
    %v4265 = vadd.f32 %v4257, %v4247
    %v4266 = vadd.f32 %v4258, %v4249
    %v4267 = vpack.c.bf16 %v4261, %v4259
    %v4268 = vpack.c.bf16 %v4262, %v4260
    %v4269 = vpack.c.bf16 %v4265, %v4263
    %v4270 = vpack.c.bf16 %v4266, %v4264
    %v4271 = vxor.u32 %v4267, 2147516416
    %v4272 = vxor.u32 %v4269, 2147516416
    %v4274 = vmul.bf16 %v4271, 1069105081
    %v4275 = vpow.bf16.pop %v4274
    %v4277 = vmul.bf16 %v4272, 1069105081
    %v4278 = vpow.bf16.pop %v4277
    %v4279 = vadd.bf16 %v4275, 1065369472
    %v4280 = vadd.bf16 %v4278, 1065369472
    %v4281 = vrcp.bf16.pop %v4279
    %v4282 = vmul.bf16 1065369472, %v4281
    %v4283 = vrcp.bf16.pop %v4280
    %v4284 = vmul.bf16 1065369472, %v4283
    %v4285 = vxor.u32 %v4268, 2147516416
    %v4286 = vxor.u32 %v4270, 2147516416
    %v4288 = vmul.bf16 %v4285, 1069105081
    %v4289 = vpow.bf16.pop %v4288
    %v4291 = vmul.bf16 %v4286, 1069105081
    %v4292 = vpow.bf16.pop %v4291
    %v4293 = vadd.bf16 %v4289, 1065369472
    %v4294 = vadd.bf16 %v4292, 1065369472
    %v4295 = vrcp.bf16.pop %v4293
    %v4296 = vmul.bf16 1065369472, %v4295
    %v4297 = vrcp.bf16.pop %v4294
    %v4298 = vmul.bf16 1065369472, %v4297
    %v4299 = vld [vmem:[#allocation2 + $0x2d0] sm:$0xff]
    %v4300 = vld [vmem:[#allocation2 + $0x2d8] sm:$0xff]
    %v4301 = vld [vmem:[#allocation2 + $0x2f0] sm:$0xff]
    %v4302 = vld [vmem:[#allocation2 + $0x2f8] sm:$0xff]
    %4303 = vmatprep.subr.bf16.mxu0 %v1345
    %4304 = vmatpush1.bf16.msra.mxu0 %v1344
    %4305 = vmatprep.subr.bf16.mxu0 %v1347
    %4306 = vmatpush1.bf16.msra.mxu0 %v1346
    %4307 = vmatprep.subr.bf16.mxu0 %v1349
    %4308 = vmatpush1.bf16.msra.mxu0 %v1348
    %4309 = vmatprep.subr.bf16.mxu0 %v1351
    %4310 = vmatpush1.bf16.msra.mxu0 %v1350
    %4311 = vmatprep.subr.bf16.mxu0 %v1353
    %4312 = vmatpush1.bf16.msra.mxu0 %v1352
    %4313 = vmatprep.subr.bf16.mxu0 %v1355
    %4314 = vmatpush1.bf16.msra.mxu0 %v1354
    %4315 = vmatprep.subr.bf16.mxu0 %v1357
    %4316 = vmatpush1.bf16.msra.mxu0 %v1356
    %4317 = vmatprep.subr.bf16.mxu0 %v1359
    %4318 = vmatpush1.bf16.msra.mxu0 %v1358
    %4319 = vmatprep.subr.bf16.mxu0 0
    %4320 = vmatpush1.bf16.msra.mxu0 0
    %4321 = vmatprep.subr.bf16.mxu0 0
    %4322 = vmatpush1.bf16.msra.mxu0 0
    %4323 = vmatprep.subr.bf16.mxu0 0
    %4324 = vmatpush1.bf16.msra.mxu0 0
    %4325 = vmatprep.subr.bf16.mxu0 0
    %4326 = vmatpush1.bf16.msra.mxu0 0
    %4327 = vmatprep.subr.bf16.mxu0 0
    %4328 = vmatpush1.bf16.msra.mxu0 0
    %4329 = vmatprep.subr.bf16.mxu0 0
    %4330 = vmatpush1.bf16.msra.mxu0 0
    %4331 = vmatprep.subr.bf16.mxu0 0
    %4332 = vmatpush1.bf16.msra.mxu0 0
    %4333 = vmatprep.subr.bf16.mxu0 0
    %4334 = vmatpush1.bf16.msra.mxu0 0
    %4335 = vmatprep.mubr.bf16.mxu0 0
    %4336 = vmatmul.mubr.bf16.gmra.mrb[0].mxu0 %v4148
    %v4337 = vpop.f32.mrb[0].mxu0
    %v4338 = vadd.f32 0.0, %v4337
    %v4339 = vpop.f32.mrb[0].mxu0
    %v4340 = vadd.f32 0.0, %v4339
    %v4341 = vpop.f32.mrb[0].mxu0
    %v4342 = vadd.f32 0.0, %v4341
    %v4343 = vpop.f32.mrb[0].mxu0
    %v4344 = vadd.f32 0.0, %v4343
    %4345 = vmatprep.mubr.bf16.mxu0 0
    %4346 = vmatmul.mubr.bf16.gmra.mrb[0].mxu0 %v4149
    %v4347 = vpop.f32.mrb[0].mxu0
    %v4348 = vadd.f32 0.0, %v4347
    %v4349 = vpop.f32.mrb[0].mxu0
    %v4350 = vadd.f32 0.0, %v4349
    %v4351 = vpop.f32.mrb[0].mxu0
    %v4352 = vadd.f32 0.0, %v4351
    %v4353 = vpop.f32.mrb[0].mxu0
    %v4354 = vadd.f32 0.0, %v4353
    %4355 = vdwg.mxu0
    %v4356 = vunpack.c.l.bf16 %v4299
    %v4357 = vunpack.c.l.bf16 %v4300
    %v4358 = vunpack.c.h.bf16 %v4299
    %v4359 = vunpack.c.h.bf16 %v4300
    %v4360 = vunpack.c.l.bf16 %v4301
    %v4361 = vunpack.c.l.bf16 %v4302
    %v4362 = vunpack.c.h.bf16 %v4301
    %v4363 = vunpack.c.h.bf16 %v4302
    %v4364 = vadd.f32 %v4356, %v4338
    %v4365 = vadd.f32 %v4357, %v4340
    %v4366 = vadd.f32 %v4358, %v4342
    %v4367 = vadd.f32 %v4359, %v4344
    %v4368 = vadd.f32 %v4360, %v4348
    %v4369 = vadd.f32 %v4361, %v4350
    %v4370 = vadd.f32 %v4362, %v4352
    %v4371 = vadd.f32 %v4363, %v4354
    %v4372 = vpack.c.bf16 %v4366, %v4364
    %v4373 = vpack.c.bf16 %v4367, %v4365
    %v4374 = vpack.c.bf16 %v4370, %v4368
    %v4375 = vpack.c.bf16 %v4371, %v4369
    %v4376 = vtanh.bf16.pop %v4372
    %v4377 = vtanh.bf16.pop %v4374
    %v4378 = vxor.u32 %v4373, 2147516416
    %v4379 = vxor.u32 %v4375, 2147516416
    %v4381 = vmul.bf16 %v4378, 1069105081
    %v4382 = vpow.bf16.pop %v4381
    %v4384 = vmul.bf16 %v4379, 1069105081
    %v4385 = vpow.bf16.pop %v4384
    %v4386 = vadd.bf16 %v4382, 1065369472
    %v4387 = vadd.bf16 %v4385, 1065369472
    %v4388 = vrcp.bf16.pop %v4386
    %v4389 = vmul.bf16 1065369472, %v4388
    %v4390 = vrcp.bf16.pop %v4387
    %v4391 = vmul.bf16 1065369472, %v4390
    %v4392 = vunpack.c.l.bf16 %v4296
    %v4393 = vunpack.c.h.bf16 %v4296
    %v4394 = vunpack.c.l.bf16 %v4298
    %v4395 = vunpack.c.h.bf16 %v4298
    %v4396 = vmul.f32 %v4392, %v4140
    %v4397 = vmul.f32 %v4393, %v4141
    %v4398 = vmul.f32 %v4394, %v4142
    %v4399 = vmul.f32 %v4395, %v4143
    %v4400 = vmul.bf16 %v4282, %v4376
    %v4401 = vmul.bf16 %v4284, %v4377
    %v4402 = vunpack.c.l.bf16 %v4400
    %v4403 = vunpack.c.h.bf16 %v4400
    %v4404 = vunpack.c.l.bf16 %v4401
    %v4405 = vunpack.c.h.bf16 %v4401
    %v4406 = vadd.f32 %v4396, %v4402
    %v4407 = vadd.f32 %v4397, %v4403
    %v4408 = vadd.f32 %v4398, %v4404
    %v4409 = vadd.f32 %v4399, %v4405
    %v4410 = vpack.c.bf16 %v4407, %v4406
    %v4411 = vpack.c.bf16 %v4409, %v4408
    %v4412 = vtanh.bf16.pop %v4410
    %v4413 = vtanh.bf16.pop %v4411
    %v4414 = vmul.bf16 %v4389, %v4412
    %v4415 = vmul.bf16 %v4391, %v4413
    %4416 = vmatprep.subr.bf16.mxu0 0
    %4417 = vmatpush1.bf16.xpose.msra.mxu0 %v4414
    %4418 = vmatprep.subr.bf16.mxu0 0
    %4419 = vmatpush1.bf16.xpose.msra.mxu0 %v4415
    %4420 = vmatprep.subr.bf16.mxu0 0
    %4421 = vmatpush1.bf16.xpose.msra.mxu0 0
    %4422 = vmatprep.subr.bf16.mxu0 0
    %4423 = vmatpush1.bf16.xpose.msra.mxu0 0
    %4424 = vmatprep.subr.bf16.mxu0 0
    %4425 = vmatpush1.bf16.xpose.msra.mxu0 0
    %4426 = vmatprep.subr.bf16.mxu0 0
    %4427 = vmatpush1.bf16.xpose.msra.mxu0 0
    %4428 = vmatprep.subr.bf16.mxu0 0
    %4429 = vmatpush1.bf16.xpose.msra.mxu0 0
    %4430 = vmatprep.subr.bf16.mxu0 0
    %4431 = vmatpush1.bf16.xpose.msra.mxu0 0
    %4432 = vmatprep.subr.bf16.mxu0 0
    %4433 = vmatpush1.bf16.xpose.msra.mxu0 0
    %4434 = vmatprep.subr.bf16.mxu0 0
    %4435 = vmatpush1.bf16.xpose.msra.mxu0 0
    %4436 = vmatprep.subr.bf16.mxu0 0
    %4437 = vmatpush1.bf16.xpose.msra.mxu0 0
    %4438 = vmatprep.subr.bf16.mxu0 0
    %4439 = vmatpush1.bf16.xpose.msra.mxu0 0
    %4440 = vmatprep.subr.bf16.mxu0 0
    %4441 = vmatpush1.bf16.xpose.msra.mxu0 0
    %4442 = vmatprep.subr.bf16.mxu0 0
    %4443 = vmatpush1.bf16.xpose.msra.mxu0 0
    %4444 = vmatprep.subr.bf16.mxu0 0
    %4445 = vmatpush1.bf16.xpose.msra.mxu0 0
    %4446 = vmatprep.subr.bf16.mxu0 0
    %4447 = vmatpush1.bf16.xpose.msra.mxu0 0
    %4448 = vmatprep.mubr.bf16.mxu0 0
    %4449 = vmatmul.mubr.bf16.gmra.mrb[0].mxu0 %v1489
    %v4450 = vpop.f32.mrb[0].mxu0
    %v4451 = vadd.f32 0.0, %v4450
    %v4452 = vpop.f32.mrb[0].mxu0
    %v4453 = vpop.f32.mrb[0].mxu0
    %v4454 = vpop.f32.mrb[0].mxu0
    %4455 = vdwg.mxu0
    %s4456 = sld [smem:[#allocation4 + $0xb]]
    %v4457 = vstv %s4456
    %v4458 = vmul.f32 %v4457, %v4451
    %v4459 = vadd.f32 %v4193, %v4458
    %s4460 = sld [smem:[#allocation3]]
    %v4461 = vstv %s4460
    %v4462 = vadd.f32 %v4459, %v4461
    %vm4463 = vcmask 253952
    %4464 = vst.msk [vmem:[%s6] sm:$0x1] %vm4463, %v4462
    // Predicated region
    $region30: #{pgnetwork_forward.1} parent=1 // pred_check
      _
    $region31: #{pgnetwork_forward.1} parent=1 // pred_check_branch
      %4466 = sbr.rel (0) target = $region33
    $region32: #{pgnetwork_forward.1} parent=1 // pred_region
      _
    $region33: #{pgnetwork_forward.1} parent=1 // pred_fallthru
      _
    // Predicated region
    $region34: #{pgnetwork_forward.1} parent=1 // pred_check
      _
    $region35: #{pgnetwork_forward.1} parent=1 // pred_check_branch
      %4468 = sbr.rel (0) target = $region37
    $region36: #{pgnetwork_forward.1} parent=1 // pred_region
      _
    $region37: #{pgnetwork_forward.1} parent=1 // pred_fallthru
      _
    %4469 = vsyncpa [#allocation5], 1

</llo_original>
